<compile_context>
chip_gen: v6e
topology: v6e:2x2x1
jax: 0.10.0
libtpu: 0.0.40
codegen_flags: <defaults>
</compile_context>

<pallas_src>
import functools

import jax
import jax.numpy as jnp
from jax.experimental import pallas as pl
from jax.experimental.pallas import tpu as pltpu


_VMEM_LIMIT_BYTES = 32 * 1024 * 1024


# ----------------------------------------------------------------------------
# Kernels
# ----------------------------------------------------------------------------
def _transform_kernel(h_ref, w_ref, o_ref):
    """HW = H @ W_eff. bf16 MXU inputs, f32 accumulation, bf16 store."""
    o_ref[...] = jnp.dot(
        h_ref[...], w_ref[...], preferred_element_type=jnp.float32
    ).astype(o_ref.dtype)


def _aggregate_kernel(*refs, apply_relu, residual, tk):
    """OUT = A_hat @ HW + b (+ H residual) (+ ReLU), src-node k-reduction.

    HW arrives as a full (n_pad, tn) VMEM-resident block and is sliced per k
    step in-kernel; A_hat streams (tm, tk) tiles from HBM exactly once.
    """
    if residual:
        a_ref, hw_ref, b_ref, res_ref, o_ref, acc_ref = refs
    else:
        a_ref, hw_ref, b_ref, o_ref, acc_ref = refs
        res_ref = None

    k = pl.program_id(2)

    @pl.when(k == 0)
    def _init():
        acc_ref[...] = jnp.zeros_like(acc_ref)

    start = pl.multiple_of(k * tk, 128)            # tk is a multiple of 128
    hw_tile = hw_ref[pl.ds(start, tk), :]          # VMEM-resident slice, no DMA
    acc_ref[...] += jnp.dot(a_ref[...], hw_tile,
                            preferred_element_type=jnp.float32)

    @pl.when(k == pl.num_programs(2) - 1)
    def _finalize():
        out = acc_ref[...] + b_ref[...]            # f32 epilogue on the accumulator
        if residual:
            out = res_ref[...].astype(jnp.float32) + out   # step folded into W/b
        if apply_relu:
            out = jnp.maximum(out, 0.0)
        o_ref[...] = out.astype(o_ref.dtype)       # bf16 carry to the next layer


# ----------------------------------------------------------------------------
# Tile selection
# ----------------------------------------------------------------------------
def _pick_tile(n, candidates, prefer_split=False):
    """Largest candidate dividing n (optionally preferring >= 2 grid steps)."""
    divs = [c for c in candidates if c <= n and n % c == 0]
    if not divs:
        return n
    if prefer_split:
        multi = [c for c in divs if n // c >= 2]
        if multi:
            return max(multi)
    return max(divs)


# ----------------------------------------------------------------------------
# One GCN layer = transform kernel + aggregation kernel
# ----------------------------------------------------------------------------
def gcn_layer(a_hat_bf16, h, w_eff_bf16, b_eff, *, residual, apply_relu):
    n_pad, f_in_pad = h.shape
    f_out_pad = w_eff_bf16.shape[1]

    # Row (dst-node) tile: large, but keep >=2 grid steps so v7x's 2 TCs both work.
    tm = _pick_tile(n_pad, (512, 384, 256, 192, 128), prefer_split=True)
    # Contraction (src-node) tile: as large as divides n_pad; >=256 fills the
    # 256-wide MXUs on v6e/v7x. For moderate N this is the whole node dim.
    tk = _pick_tile(n_pad, (1024, 768, 512, 384, 256, 128))
    # Output-feature tile: collapse j so A_hat streams from HBM exactly once,
    # as long as the f32 accumulator tile stays small.
    if tm * f_out_pad * 4 <= 4 * 1024 * 1024:
        tn = f_out_pad
    else:
        tn = _pick_tile(f_out_pad, (512, 256, 128))

    # ---- kernel 1: HW = H @ W_eff  (W stays VMEM-resident, DMA'd once) -------
    hw = pl.pallas_call(
        _transform_kernel,
        out_shape=jax.ShapeDtypeStruct((n_pad, f_out_pad), jnp.bfloat16),
        grid_spec=pltpu.PrefetchScalarGridSpec(
            num_scalar_prefetch=0,
            grid=(n_pad // tm,),
            in_specs=[
                pl.BlockSpec((tm, f_in_pad), lambda i: (i, 0)),
                pl.BlockSpec((f_in_pad, f_out_pad), lambda i: (0, 0)),
            ],
            out_specs=pl.BlockSpec((tm, f_out_pad), lambda i: (i, 0)),
        ),
        compiler_params=pltpu.CompilerParams(
            dimension_semantics=("parallel",),
            vmem_limit_bytes=_VMEM_LIMIT_BYTES),
    )(h, w_eff_bf16)

    # ---- kernel 2: OUT = A_hat @ HW + b (+ H) (+ ReLU) -----------------------
    kernel = functools.partial(_aggregate_kernel, apply_relu=apply_relu,
                               residual=residual, tk=tk)
    in_specs = [
        pl.BlockSpec((tm, tk), lambda i, j, k: (i, k)),      # A_hat (heavy stream)
        pl.BlockSpec((n_pad, tn), lambda i, j, k: (0, j)),   # HW: VMEM-resident
        pl.BlockSpec((1, tn), lambda i, j, k: (0, j)),       # bias, const over i,k
    ]
    inputs = [a_hat_bf16, hw, b_eff]
    io_aliases = {}
    if residual:
        in_specs.append(pl.BlockSpec((tm, tn), lambda i, j, k: (i, j)))  # H residual
        inputs.append(h)
        io_aliases = {3: 0}   # write the result in-place over the incoming H buffer

    return pl.pallas_call(
        kernel,
        out_shape=jax.ShapeDtypeStruct((n_pad, f_out_pad), jnp.bfloat16),
        grid_spec=pltpu.PrefetchScalarGridSpec(
            num_scalar_prefetch=0,
            grid=(n_pad // tm, f_out_pad // tn, n_pad // tk),
            in_specs=in_specs,
            out_specs=pl.BlockSpec((tm, tn), lambda i, j, k: (i, j)),
            scratch_shapes=[pltpu.VMEM((tm, tn), jnp.float32)],
        ),
        compiler_params=pltpu.CompilerParams(
            dimension_semantics=("parallel", "parallel", "arbitrary"),
            vmem_limit_bytes=_VMEM_LIMIT_BYTES),
        input_output_aliases=io_aliases,
    )(*inputs)


# ----------------------------------------------------------------------------
# GraphSequential forward (Pallas path)
# ----------------------------------------------------------------------------
@functools.partial(jax.jit, static_argnames=("config",))
def graph_sequential_forward(a_hat_bf16, x_pad, params, config):
    h = x_pad
    for (w_eff, b_eff), (residual, fuse_relu) in zip(params, config):
        h = gcn_layer(a_hat_bf16, h, w_eff, b_eff,
                      residual=residual, apply_relu=fuse_relu)
    return h


# ----------------------------------------------------------------------------
# Parameter preparation (plain-JAX glue, done once)
# ----------------------------------------------------------------------------
def _round_up(x, m):
    return (x + m - 1) // m * m


def _pad2d(x, rows, cols):
    return jnp.pad(x, ((0, rows - x.shape[0]), (0, cols - x.shape[1])))


def prepare_stack(layer_stack, opt):
    """Fold symm-weight / step_size, fuse trailing ReLUs, pad feature dims.

    layer_stack entries: ("gcn", W, b) or ("relu",).
    Returns (params, config) with one entry per GCN layer:
      params[i] = (W_eff padded bf16, b_eff padded f32 of shape (1, F_out_pad))
      config[i] = (residual: bool, fuse_relu: bool)   -- static / hashable
    """
    params, config = [], []
    idx = 0
    symm, fn = opt["gcn_symm"], opt["function"]
    while idx < len(layer_stack):
        layer = layer_stack[idx]
        if layer[0] != "gcn":
            # TODO(synk): standalone elementwise layer not preceded by a GCN
            # would need its own kernel; the stacks used here always fuse it.
            raise NotImplementedError("non-GCN layer without preceding GCN")
        _, w, b = layer
        in_f, out_f = w.shape
        residual = False
        if symm and in_f == out_f:
            w_sym = 0.5 * (w + w.T)              # symmetrize once, in the wrapper
            if fn == "gcn_res_dgl":
                w_eff = opt["step_size"] * w_sym  # fold step_size into W and b
                b_eff = opt["step_size"] * b
                residual = True
            else:                                 # 'gcn_dgl'
                w_eff, b_eff = w_sym, b
        elif (not symm) and fn == "gcn_res_dgl" and in_f == out_f:
            w_eff = opt["step_size"] * w
            b_eff = opt["step_size"] * b
            residual = True
        else:                                     # plain GCN / 'gcn_pyg' / in!=out
            w_eff, b_eff = w, b

        fuse_relu = (idx + 1 < len(layer_stack)
                     and layer_stack[idx + 1][0] == "relu")

        f_in_pad = _round_up(in_f, 128)
        f_out_pad = _round_up(out_f, 128)
        params.append((
            _pad2d(w_eff, f_in_pad, f_out_pad).astype(jnp.bfloat16),
            _pad2d(b_eff.reshape(1, -1), 1, f_out_pad).astype(jnp.float32),
        ))
        config.append((residual, fuse_relu))
        idx += 2 if fuse_relu else 1
    return tuple(params), tuple(config)


def normalized_adjacency(adj):
    """A_hat = D^{-1/2} A D^{-1/2}; zero-degree nodes clamped to 0 (DGL-style)."""
    deg = adj.sum(axis=1)
    d_inv_sqrt = jnp.where(deg > 0.0, jax.lax.rsqrt(jnp.maximum(deg, 1e-12)), 0.0)
    return d_inv_sqrt[:, None] * adj * d_inv_sqrt[None, :]


# ----------------------------------------------------------------------------
# Pure-JAX reference (f32, unpadded) for a loose numerical check
# ----------------------------------------------------------------------------
def reference_forward(a_hat, x, layer_stack, opt):
    h = x
    symm, fn = opt["gcn_symm"], opt["function"]
    for layer in layer_stack:
        if layer[0] == "gcn":
            _, w, b = layer
            in_f, out_f = w.shape
            if symm and in_f == out_f:
                w_use = 0.5 * (w + w.T)
                g = a_hat @ (h @ w_use) + b
                h = h + opt["step_size"] * g if fn == "gcn_res_dgl" else g
            elif (not symm) and fn == "gcn_res_dgl" and in_f == out_f:
                h = h + opt["step_size"] * (a_hat @ (h @ w) + b)
            else:
                h = a_hat @ (h @ w) + b
        else:  # relu
            h = jnp.maximum(h, 0.0)
    return h


# ----------------------------------------------------------------------------
# Demo
# ----------------------------------------------------------------------------
if __name__ == "__main__":
    key = jax.random.PRNGKey(0)
    k_adj, k_x, k_w1, k_b1, k_w2, k_b2, k_w3, k_b3 = jax.random.split(key, 8)

    num_nodes = 300
    f_in, f_hidden, f_out = 48, 64, 16
    opt = {"gcn_symm": True, "function": "gcn_res_dgl", "step_size": 0.25}

    # Random undirected graph with self-loops (dense adjacency).
    adj = jax.random.bernoulli(k_adj, 0.05, (num_nodes, num_nodes)).astype(jnp.float32)
    adj = jnp.maximum(adj, adj.T)
    adj = jnp.maximum(adj, jnp.eye(num_nodes, dtype=jnp.float32))
    a_hat = normalized_adjacency(adj)

    x = jax.random.normal(k_x, (num_nodes, f_in), dtype=jnp.float32)

    def init_gcn(kw, kb, fin, fout):
        bound = float(fin) ** -0.5
        w = jax.random.uniform(kw, (fin, fout), jnp.float32, -bound, bound)
        b = jax.random.uniform(kb, (fout,), jnp.float32, -bound, bound)
        return ("gcn", w, b)

    layer_stack = [
        init_gcn(k_w1, k_b1, f_in, f_hidden),       # in != out -> plain GCN
        ("relu",),
        init_gcn(k_w2, k_b2, f_hidden, f_hidden),   # in == out -> symm residual
        ("relu",),
        init_gcn(k_w3, k_b3, f_hidden, f_out),      # in != out -> plain GCN
    ]

    # Pad node dim to a multiple of 128 (quadratic A_hat cost -> minimal pad),
    # feature dims to multiples of 128.  bf16 on every HBM-side operand.
    n_pad = _round_up(num_nodes, 128)
    f_in_pad = _round_up(f_in, 128)
    a_hat_pad = _pad2d(a_hat, n_pad, n_pad).astype(jnp.bfloat16)
    x_pad = _pad2d(x, n_pad, f_in_pad).astype(jnp.bfloat16)

    params, config = prepare_stack(layer_stack, opt)
    out_pad = graph_sequential_forward(a_hat_pad, x_pad, params, config=config)
    out_pad = jax.block_until_ready(out_pad)
    out = out_pad[:num_nodes, :f_out].astype(jnp.float32)

    ref = reference_forward(a_hat, x, layer_stack, opt)
    max_err = float(jnp.max(jnp.abs(out - ref)))
    assert bool(jnp.all(jnp.isfinite(out))), "non-finite output"
    assert max_err < 7.5e-2, f"max abs error too large: {max_err}"
    print("KERNEL_OK")
</pallas_src>

<mosaic_0001>
module attributes {stable_mosaic.version = 11 : i64} {
  func.func @_aggregate_kernel(%arg0: i32, %arg1: i32, %arg2: i32, %arg3: memref<192x384xbf16, #tpu.memory_space<vmem>>, %arg4: memref<384x128xbf16, #tpu.memory_space<vmem>>, %arg5: memref<1x128xf32, #tpu.memory_space<vmem>>, %arg6: memref<192x128xbf16, #tpu.memory_space<vmem>>, %arg7: memref<192x128xbf16, #tpu.memory_space<vmem>>, %arg8: memref<192x128xf32, #tpu.memory_space<vmem>>) attributes {dimension_semantics = [#tpu.dimension_semantics<parallel>, #tpu.dimension_semantics<parallel>, #tpu.dimension_semantics<arbitrary>], iteration_bounds = array<i64: 2, 1, 1>, scalar_prefetch = 0 : i64, scratch_operands = 1 : i64, tpu.core_type = #tpu.core_type<tc>, window_params = [{transform_indices = @transform_0, window_bounds = array<i64: 192, 384>}, {transform_indices = @transform_1, window_bounds = array<i64: 384, 128>}, {transform_indices = @transform_2, window_bounds = array<i64: 1, 128>}, {transform_indices = @transform_3, window_bounds = array<i64: 192, 128>}, {transform_indices = @transform_4, window_bounds = array<i64: 192, 128>}]} {
    %c0_i32 = arith.constant 0 : i32
    %0 = arith.cmpi eq, %arg2, %c0_i32 : i32
    %1 = arith.extui %0 : i1 to i32
    %c0_i32_0 = arith.constant 0 : i32
    %2 = arith.cmpi ne, %1, %c0_i32_0 : i32
    scf.if %2 {
      %cst_9 = arith.constant 0.000000e+00 : f32
      %15 = vector.broadcast %cst_9 : f32 to vector<192x128xf32>
      %c0_10 = arith.constant 0 : index
      %c0_11 = arith.constant 0 : index
      %16 = vector.load %arg8[%c0_10, %c0_11] : memref<192x128xf32, #tpu.memory_space<vmem>>, vector<192x128xf32>
      tpu.vector_store %arg8[%c0_10, %c0_11], %15 {strides = array<i32>} : memref<192x128xf32, #tpu.memory_space<vmem>>, vector<192x128xf32>,
    } else {
    }
    %c384_i32 = arith.constant 384 : i32
    %3 = arith.muli %arg2, %c384_i32 : i32
    %4 = tpu.assume_multiple %3, 128 : i32
    %5 = arith.index_cast %4 : i32 to index
    %c0 = arith.constant 0 : index
    %6 = vector.load %arg4[%5, %c0] : memref<384x128xbf16, #tpu.memory_space<vmem>>, vector<384x128xbf16>
    %c0_1 = arith.constant 0 : index
    %c0_2 = arith.constant 0 : index
    %7 = vector.load %arg8[%c0_1, %c0_2] : memref<192x128xf32, #tpu.memory_space<vmem>>, vector<192x128xf32>
    %c0_3 = arith.constant 0 : index
    %c0_4 = arith.constant 0 : index
    %8 = vector.load %arg3[%c0_3, %c0_4] : memref<192x384xbf16, #tpu.memory_space<vmem>>, vector<192x384xbf16>
    %cst = arith.constant dense<0.000000e+00> : vector<192x128xf32>
    %9 = tpu.matmul %8, %6, %cst {dimension_numbers = #tpu.dot_dimension_numbers<[1], [0], [0], [1], [0, 0, 1, 1], [], []>} : vector<192x384xbf16>, vector<384x128xbf16>, vector<192x128xf32> -> vector<192x128xf32>
    %10 = arith.addf %7, %9 : vector<192x128xf32>
    %c0_5 = arith.constant 0 : index
    %c0_6 = arith.constant 0 : index
    %11 = vector.load %arg8[%c0_5, %c0_6] : memref<192x128xf32, #tpu.memory_space<vmem>>, vector<192x128xf32>
    tpu.vector_store %arg8[%c0_5, %c0_6], %10 {strides = array<i32>} : memref<192x128xf32, #tpu.memory_space<vmem>>, vector<192x128xf32>,
    %c0_i32_7 = arith.constant 0 : i32
    %12 = arith.cmpi eq, %arg2, %c0_i32_7 : i32
    %13 = arith.extui %12 : i1 to i32
    %c0_i32_8 = arith.constant 0 : i32
    %14 = arith.cmpi ne, %13, %c0_i32_8 : i32
    scf.if %14 {
      %c0_9 = arith.constant 0 : index
      %c0_10 = arith.constant 0 : index
      %15 = vector.load %arg8[%c0_9, %c0_10] : memref<192x128xf32, #tpu.memory_space<vmem>>, vector<192x128xf32>
      %c0_11 = arith.constant 0 : index
      %c0_12 = arith.constant 0 : index
      %16 = vector.load %arg5[%c0_11, %c0_12] : memref<1x128xf32, #tpu.memory_space<vmem>>, vector<1x128xf32>
      %17 = vector.broadcast %16 : vector<1x128xf32> to vector<192x128xf32>
      %18 = arith.addf %15, %17 : vector<192x128xf32>
      %c0_13 = arith.constant 0 : index
      %c0_14 = arith.constant 0 : index
      %19 = vector.load %arg6[%c0_13, %c0_14] : memref<192x128xbf16, #tpu.memory_space<vmem>>, vector<192x128xbf16>
      %20 = arith.extf %19 : vector<192x128xbf16> to vector<192x128xf32>
      %21 = arith.addf %20, %18 : vector<192x128xf32>
      %cst_15 = arith.constant 0.000000e+00 : f32
      %22 = vector.broadcast %cst_15 : f32 to vector<192x128xf32>
      %23 = arith.maximumf %21, %22 : vector<192x128xf32>
      %24 = arith.truncf %23 : vector<192x128xf32> to vector<192x128xbf16>
      %c0_16 = arith.constant 0 : index
      %c0_17 = arith.constant 0 : index
      %25 = vector.load %arg7[%c0_16, %c0_17] : memref<192x128xbf16, #tpu.memory_space<vmem>>, vector<192x128xbf16>
      tpu.vector_store %arg7[%c0_16, %c0_17], %24 {strides = array<i32>} : memref<192x128xbf16, #tpu.memory_space<vmem>>, vector<192x128xbf16>,
    } else {
    }
    return
  }
  func.func @transform_0(%arg0: i32, %arg1: i32, %arg2: i32) -> (i32, i32) {
    %c0_i32 = arith.constant 0 : i32
    return %arg0, %arg2 : i32, i32
  }
  func.func @transform_1(%arg0: i32, %arg1: i32, %arg2: i32) -> (i32, i32) {
    %c0_i32 = arith.constant 0 : i32
    %c0_i32_0 = arith.constant 0 : i32
    return %c0_i32, %arg1 : i32, i32
  }
  func.func @transform_2(%arg0: i32, %arg1: i32, %arg2: i32) -> (i32, i32) {
    %c0_i32 = arith.constant 0 : i32
    %c0_i32_0 = arith.constant 0 : i32
    return %c0_i32, %arg1 : i32, i32
  }
  func.func @transform_3(%arg0: i32, %arg1: i32, %arg2: i32) -> (i32, i32) {
    %c0_i32 = arith.constant 0 : i32
    return %arg0, %arg1 : i32, i32
  }
  func.func @transform_4(%arg0: i32, %arg1: i32, %arg2: i32) -> (i32, i32) {
    %c0_i32 = arith.constant 0 : i32
    return %arg0, %arg1 : i32, i32
  }
}

module attributes {stable_mosaic.version = 11 : i64} {
  func.func @_transform_kernel(%arg0: i32, %arg1: memref<192x128xbf16, #tpu.memory_space<vmem>>, %arg2: memref<128x128xbf16, #tpu.memory_space<vmem>>, %arg3: memref<192x128xbf16, #tpu.memory_space<vmem>>) attributes {dimension_semantics = [#tpu.dimension_semantics<parallel>], iteration_bounds = array<i64: 2>, scalar_prefetch = 0 : i64, scratch_operands = 0 : i64, tpu.core_type = #tpu.core_type<tc>, window_params = [{transform_indices = @transform_0, window_bounds = array<i64: 192, 128>}, {pipeline_mode = #tpu.pipeline_mode<synchronous>, transform_indices = @transform_1, window_bounds = array<i64: 128, 128>}, {transform_indices = @transform_2, window_bounds = array<i64: 192, 128>}]} {
    %c0 = arith.constant 0 : index
    %c0_0 = arith.constant 0 : index
    %0 = vector.load %arg1[%c0, %c0_0] : memref<192x128xbf16, #tpu.memory_space<vmem>>, vector<192x128xbf16>
    %c0_1 = arith.constant 0 : index
    %c0_2 = arith.constant 0 : index
    %1 = vector.load %arg2[%c0_1, %c0_2] : memref<128x128xbf16, #tpu.memory_space<vmem>>, vector<128x128xbf16>
    %cst = arith.constant dense<0.000000e+00> : vector<192x128xf32>
    %2 = tpu.matmul %0, %1, %cst {dimension_numbers = #tpu.dot_dimension_numbers<[1], [0], [0], [1], [0, 0, 1, 1], [], []>} : vector<192x128xbf16>, vector<128x128xbf16>, vector<192x128xf32> -> vector<192x128xf32>
    %3 = arith.truncf %2 : vector<192x128xf32> to vector<192x128xbf16>
    %c0_3 = arith.constant 0 : index
    %c0_4 = arith.constant 0 : index
    %4 = vector.load %arg3[%c0_3, %c0_4] : memref<192x128xbf16, #tpu.memory_space<vmem>>, vector<192x128xbf16>
    tpu.vector_store %arg3[%c0_3, %c0_4], %3 {strides = array<i32>} : memref<192x128xbf16, #tpu.memory_space<vmem>>, vector<192x128xbf16>,
    return
  }
  func.func @transform_0(%arg0: i32) -> (i32, i32) {
    %c0_i32 = arith.constant 0 : i32
    %c0_i32_0 = arith.constant 0 : i32
    return %arg0, %c0_i32 : i32, i32
  }
  func.func @transform_1(%arg0: i32) -> (i32, i32) {
    %c0_i32 = arith.constant 0 : i32
    %c0_i32_0 = arith.constant 0 : i32
    %c0_i32_1 = arith.constant 0 : i32
    return %c0_i32, %c0_i32_0 : i32, i32
  }
  func.func @transform_2(%arg0: i32) -> (i32, i32) {
    %c0_i32 = arith.constant 0 : i32
    %c0_i32_0 = arith.constant 0 : i32
    return %arg0, %c0_i32 : i32, i32
  }
}

module attributes {stable_mosaic.version = 11 : i64} {
  func.func @_transform_kernel(%arg0: i32, %arg1: memref<192x128xbf16, #tpu.memory_space<vmem>>, %arg2: memref<128x128xbf16, #tpu.memory_space<vmem>>, %arg3: memref<192x128xbf16, #tpu.memory_space<vmem>>) attributes {dimension_semantics = [#tpu.dimension_semantics<parallel>], iteration_bounds = array<i64: 2>, scalar_prefetch = 0 : i64, scratch_operands = 0 : i64, tpu.core_type = #tpu.core_type<tc>, window_params = [{transform_indices = @transform_0, window_bounds = array<i64: 192, 128>}, {pipeline_mode = #tpu.pipeline_mode<synchronous>, transform_indices = @transform_1, window_bounds = array<i64: 128, 128>}, {transform_indices = @transform_2, window_bounds = array<i64: 192, 128>}]} {
    %c0 = arith.constant 0 : index
    %c0_0 = arith.constant 0 : index
    %0 = vector.load %arg1[%c0, %c0_0] : memref<192x128xbf16, #tpu.memory_space<vmem>>, vector<192x128xbf16>
    %c0_1 = arith.constant 0 : index
    %c0_2 = arith.constant 0 : index
    %1 = vector.load %arg2[%c0_1, %c0_2] : memref<128x128xbf16, #tpu.memory_space<vmem>>, vector<128x128xbf16>
    %cst = arith.constant dense<0.000000e+00> : vector<192x128xf32>
    %2 = tpu.matmul %0, %1, %cst {dimension_numbers = #tpu.dot_dimension_numbers<[1], [0], [0], [1], [0, 0, 1, 1], [], []>} : vector<192x128xbf16>, vector<128x128xbf16>, vector<192x128xf32> -> vector<192x128xf32>
    %3 = arith.truncf %2 : vector<192x128xf32> to vector<192x128xbf16>
    %c0_3 = arith.constant 0 : index
    %c0_4 = arith.constant 0 : index
    %4 = vector.load %arg3[%c0_3, %c0_4] : memref<192x128xbf16, #tpu.memory_space<vmem>>, vector<192x128xbf16>
    tpu.vector_store %arg3[%c0_3, %c0_4], %3 {strides = array<i32>} : memref<192x128xbf16, #tpu.memory_space<vmem>>, vector<192x128xbf16>,
    return
  }
  func.func @transform_0(%arg0: i32) -> (i32, i32) {
    %c0_i32 = arith.constant 0 : i32
    %c0_i32_0 = arith.constant 0 : i32
    return %arg0, %c0_i32 : i32, i32
  }
  func.func @transform_1(%arg0: i32) -> (i32, i32) {
    %c0_i32 = arith.constant 0 : i32
    %c0_i32_0 = arith.constant 0 : i32
    %c0_i32_1 = arith.constant 0 : i32
    return %c0_i32, %c0_i32_0 : i32, i32
  }
  func.func @transform_2(%arg0: i32) -> (i32, i32) {
    %c0_i32 = arith.constant 0 : i32
    %c0_i32_0 = arith.constant 0 : i32
    return %arg0, %c0_i32 : i32, i32
  }
}

module attributes {stable_mosaic.version = 11 : i64} {
  func.func @_aggregate_kernel(%arg0: i32, %arg1: i32, %arg2: i32, %arg3: memref<192x384xbf16, #tpu.memory_space<vmem>>, %arg4: memref<384x128xbf16, #tpu.memory_space<vmem>>, %arg5: memref<1x128xf32, #tpu.memory_space<vmem>>, %arg6: memref<192x128xbf16, #tpu.memory_space<vmem>>, %arg7: memref<192x128xf32, #tpu.memory_space<vmem>>) attributes {dimension_semantics = [#tpu.dimension_semantics<parallel>, #tpu.dimension_semantics<parallel>, #tpu.dimension_semantics<arbitrary>], iteration_bounds = array<i64: 2, 1, 1>, scalar_prefetch = 0 : i64, scratch_operands = 1 : i64, tpu.core_type = #tpu.core_type<tc>, window_params = [{transform_indices = @transform_0, window_bounds = array<i64: 192, 384>}, {transform_indices = @transform_1, window_bounds = array<i64: 384, 128>}, {transform_indices = @transform_2, window_bounds = array<i64: 1, 128>}, {transform_indices = @transform_3, window_bounds = array<i64: 192, 128>}]} {
    %c0_i32 = arith.constant 0 : i32
    %0 = arith.cmpi eq, %arg2, %c0_i32 : i32
    %1 = arith.extui %0 : i1 to i32
    %c0_i32_0 = arith.constant 0 : i32
    %2 = arith.cmpi ne, %1, %c0_i32_0 : i32
    scf.if %2 {
      %cst_9 = arith.constant 0.000000e+00 : f32
      %15 = vector.broadcast %cst_9 : f32 to vector<192x128xf32>
      %c0_10 = arith.constant 0 : index
      %c0_11 = arith.constant 0 : index
      %16 = vector.load %arg7[%c0_10, %c0_11] : memref<192x128xf32, #tpu.memory_space<vmem>>, vector<192x128xf32>
      tpu.vector_store %arg7[%c0_10, %c0_11], %15 {strides = array<i32>} : memref<192x128xf32, #tpu.memory_space<vmem>>, vector<192x128xf32>,
    } else {
    }
    %c384_i32 = arith.constant 384 : i32
    %3 = arith.muli %arg2, %c384_i32 : i32
    %4 = tpu.assume_multiple %3, 128 : i32
    %5 = arith.index_cast %4 : i32 to index
    %c0 = arith.constant 0 : index
    %6 = vector.load %arg4[%5, %c0] : memref<384x128xbf16, #tpu.memory_space<vmem>>, vector<384x128xbf16>
    %c0_1 = arith.constant 0 : index
    %c0_2 = arith.constant 0 : index
    %7 = vector.load %arg7[%c0_1, %c0_2] : memref<192x128xf32, #tpu.memory_space<vmem>>, vector<192x128xf32>
    %c0_3 = arith.constant 0 : index
    %c0_4 = arith.constant 0 : index
    %8 = vector.load %arg3[%c0_3, %c0_4] : memref<192x384xbf16, #tpu.memory_space<vmem>>, vector<192x384xbf16>
    %cst = arith.constant dense<0.000000e+00> : vector<192x128xf32>
    %9 = tpu.matmul %8, %6, %cst {dimension_numbers = #tpu.dot_dimension_numbers<[1], [0], [0], [1], [0, 0, 1, 1], [], []>} : vector<192x384xbf16>, vector<384x128xbf16>, vector<192x128xf32> -> vector<192x128xf32>
    %10 = arith.addf %7, %9 : vector<192x128xf32>
    %c0_5 = arith.constant 0 : index
    %c0_6 = arith.constant 0 : index
    %11 = vector.load %arg7[%c0_5, %c0_6] : memref<192x128xf32, #tpu.memory_space<vmem>>, vector<192x128xf32>
    tpu.vector_store %arg7[%c0_5, %c0_6], %10 {strides = array<i32>} : memref<192x128xf32, #tpu.memory_space<vmem>>, vector<192x128xf32>,
    %c0_i32_7 = arith.constant 0 : i32
    %12 = arith.cmpi eq, %arg2, %c0_i32_7 : i32
    %13 = arith.extui %12 : i1 to i32
    %c0_i32_8 = arith.constant 0 : i32
    %14 = arith.cmpi ne, %13, %c0_i32_8 : i32
    scf.if %14 {
      %c0_9 = arith.constant 0 : index
      %c0_10 = arith.constant 0 : index
      %15 = vector.load %arg7[%c0_9, %c0_10] : memref<192x128xf32, #tpu.memory_space<vmem>>, vector<192x128xf32>
      %c0_11 = arith.constant 0 : index
      %c0_12 = arith.constant 0 : index
      %16 = vector.load %arg5[%c0_11, %c0_12] : memref<1x128xf32, #tpu.memory_space<vmem>>, vector<1x128xf32>
      %17 = vector.broadcast %16 : vector<1x128xf32> to vector<192x128xf32>
      %18 = arith.addf %15, %17 : vector<192x128xf32>
      %cst_13 = arith.constant 0.000000e+00 : f32
      %19 = vector.broadcast %cst_13 : f32 to vector<192x128xf32>
      %20 = arith.maximumf %18, %19 : vector<192x128xf32>
      %21 = arith.truncf %20 : vector<192x128xf32> to vector<192x128xbf16>
      %c0_14 = arith.constant 0 : index
      %c0_15 = arith.constant 0 : index
      %22 = vector.load %arg6[%c0_14, %c0_15] : memref<192x128xbf16, #tpu.memory_space<vmem>>, vector<192x128xbf16>
      tpu.vector_store %arg6[%c0_14, %c0_15], %21 {strides = array<i32>} : memref<192x128xbf16, #tpu.memory_space<vmem>>, vector<192x128xbf16>,
    } else {
    }
    return
  }
  func.func @transform_0(%arg0: i32, %arg1: i32, %arg2: i32) -> (i32, i32) {
    %c0_i32 = arith.constant 0 : i32
    return %arg0, %arg2 : i32, i32
  }
  func.func @transform_1(%arg0: i32, %arg1: i32, %arg2: i32) -> (i32, i32) {
    %c0_i32 = arith.constant 0 : i32
    %c0_i32_0 = arith.constant 0 : i32
    return %c0_i32, %arg1 : i32, i32
  }
  func.func @transform_2(%arg0: i32, %arg1: i32, %arg2: i32) -> (i32, i32) {
    %c0_i32 = arith.constant 0 : i32
    %c0_i32_0 = arith.constant 0 : i32
    return %c0_i32, %arg1 : i32, i32
  }
  func.func @transform_3(%arg0: i32, %arg1: i32, %arg2: i32) -> (i32, i32) {
    %c0_i32 = arith.constant 0 : i32
    return %arg0, %arg1 : i32, i32
  }
}

module attributes {stable_mosaic.version = 11 : i64} {
  func.func @_aggregate_kernel(%arg0: i32, %arg1: i32, %arg2: i32, %arg3: memref<192x384xbf16, #tpu.memory_space<vmem>>, %arg4: memref<384x128xbf16, #tpu.memory_space<vmem>>, %arg5: memref<1x128xf32, #tpu.memory_space<vmem>>, %arg6: memref<192x128xbf16, #tpu.memory_space<vmem>>, %arg7: memref<192x128xf32, #tpu.memory_space<vmem>>) attributes {dimension_semantics = [#tpu.dimension_semantics<parallel>, #tpu.dimension_semantics<parallel>, #tpu.dimension_semantics<arbitrary>], iteration_bounds = array<i64: 2, 1, 1>, scalar_prefetch = 0 : i64, scratch_operands = 1 : i64, tpu.core_type = #tpu.core_type<tc>, window_params = [{transform_indices = @transform_0, window_bounds = array<i64: 192, 384>}, {transform_indices = @transform_1, window_bounds = array<i64: 384, 128>}, {transform_indices = @transform_2, window_bounds = array<i64: 1, 128>}, {transform_indices = @transform_3, window_bounds = array<i64: 192, 128>}]} {
    %c0_i32 = arith.constant 0 : i32
    %0 = arith.cmpi eq, %arg2, %c0_i32 : i32
    %1 = arith.extui %0 : i1 to i32
    %c0_i32_0 = arith.constant 0 : i32
    %2 = arith.cmpi ne, %1, %c0_i32_0 : i32
    scf.if %2 {
      %cst_9 = arith.constant 0.000000e+00 : f32
      %15 = vector.broadcast %cst_9 : f32 to vector<192x128xf32>
      %c0_10 = arith.constant 0 : index
      %c0_11 = arith.constant 0 : index
      %16 = vector.load %arg7[%c0_10, %c0_11] : memref<192x128xf32, #tpu.memory_space<vmem>>, vector<192x128xf32>
      tpu.vector_store %arg7[%c0_10, %c0_11], %15 {strides = array<i32>} : memref<192x128xf32, #tpu.memory_space<vmem>>, vector<192x128xf32>,
    } else {
    }
    %c384_i32 = arith.constant 384 : i32
    %3 = arith.muli %arg2, %c384_i32 : i32
    %4 = tpu.assume_multiple %3, 128 : i32
    %5 = arith.index_cast %4 : i32 to index
    %c0 = arith.constant 0 : index
    %6 = vector.load %arg4[%5, %c0] : memref<384x128xbf16, #tpu.memory_space<vmem>>, vector<384x128xbf16>
    %c0_1 = arith.constant 0 : index
    %c0_2 = arith.constant 0 : index
    %7 = vector.load %arg7[%c0_1, %c0_2] : memref<192x128xf32, #tpu.memory_space<vmem>>, vector<192x128xf32>
    %c0_3 = arith.constant 0 : index
    %c0_4 = arith.constant 0 : index
    %8 = vector.load %arg3[%c0_3, %c0_4] : memref<192x384xbf16, #tpu.memory_space<vmem>>, vector<192x384xbf16>
    %cst = arith.constant dense<0.000000e+00> : vector<192x128xf32>
    %9 = tpu.matmul %8, %6, %cst {dimension_numbers = #tpu.dot_dimension_numbers<[1], [0], [0], [1], [0, 0, 1, 1], [], []>} : vector<192x384xbf16>, vector<384x128xbf16>, vector<192x128xf32> -> vector<192x128xf32>
    %10 = arith.addf %7, %9 : vector<192x128xf32>
    %c0_5 = arith.constant 0 : index
    %c0_6 = arith.constant 0 : index
    %11 = vector.load %arg7[%c0_5, %c0_6] : memref<192x128xf32, #tpu.memory_space<vmem>>, vector<192x128xf32>
    tpu.vector_store %arg7[%c0_5, %c0_6], %10 {strides = array<i32>} : memref<192x128xf32, #tpu.memory_space<vmem>>, vector<192x128xf32>,
    %c0_i32_7 = arith.constant 0 : i32
    %12 = arith.cmpi eq, %arg2, %c0_i32_7 : i32
    %13 = arith.extui %12 : i1 to i32
    %c0_i32_8 = arith.constant 0 : i32
    %14 = arith.cmpi ne, %13, %c0_i32_8 : i32
    scf.if %14 {
      %c0_9 = arith.constant 0 : index
      %c0_10 = arith.constant 0 : index
      %15 = vector.load %arg7[%c0_9, %c0_10] : memref<192x128xf32, #tpu.memory_space<vmem>>, vector<192x128xf32>
      %c0_11 = arith.constant 0 : index
      %c0_12 = arith.constant 0 : index
      %16 = vector.load %arg5[%c0_11, %c0_12] : memref<1x128xf32, #tpu.memory_space<vmem>>, vector<1x128xf32>
      %17 = vector.broadcast %16 : vector<1x128xf32> to vector<192x128xf32>
      %18 = arith.addf %15, %17 : vector<192x128xf32>
      %19 = arith.truncf %18 : vector<192x128xf32> to vector<192x128xbf16>
      %c0_13 = arith.constant 0 : index
      %c0_14 = arith.constant 0 : index
      %20 = vector.load %arg6[%c0_13, %c0_14] : memref<192x128xbf16, #tpu.memory_space<vmem>>, vector<192x128xbf16>
      tpu.vector_store %arg6[%c0_13, %c0_14], %19 {strides = array<i32>} : memref<192x128xbf16, #tpu.memory_space<vmem>>, vector<192x128xbf16>,
    } else {
    }
    return
  }
  func.func @transform_0(%arg0: i32, %arg1: i32, %arg2: i32) -> (i32, i32) {
    %c0_i32 = arith.constant 0 : i32
    return %arg0, %arg2 : i32, i32
  }
  func.func @transform_1(%arg0: i32, %arg1: i32, %arg2: i32) -> (i32, i32) {
    %c0_i32 = arith.constant 0 : i32
    %c0_i32_0 = arith.constant 0 : i32
    return %c0_i32, %arg1 : i32, i32
  }
  func.func @transform_2(%arg0: i32, %arg1: i32, %arg2: i32) -> (i32, i32) {
    %c0_i32 = arith.constant 0 : i32
    %c0_i32_0 = arith.constant 0 : i32
    return %c0_i32, %arg1 : i32, i32
  }
  func.func @transform_3(%arg0: i32, %arg1: i32, %arg2: i32) -> (i32, i32) {
    %c0_i32 = arith.constant 0 : i32
    return %arg0, %arg1 : i32, i32
  }
}

</mosaic_0001>

<llo_original>
// kernel: graph_sequential_forward.6
$region0: #{graph_sequential_forward.6}
  #allocation0 [shape = 'u32[]', space=smem, size = 0x4, offset = 0x4, fixed_abs, tag = 'smem constant byte address 0x4 - core index']
  #allocation1 [shape = 'u32[144,128]{1,0:T(1,128)}', space=vmem, size = 0x12000, scoped, tag = 'internal scratch']
  %s0 = inlined_call_operand.hbm [shape: bf16[384,128], index: 0, kind: input, shape index: {}]
  %s1 = inlined_call_operand.hbm [shape: bf16[128,128], index: 1, kind: input, shape index: {}]
  %s2 = inlined_call_operand.vmem [shape: bf16[384,128], index: 2, kind: output, shape index: {}]
  %s3 = sld [smem:[#allocation0]]
  $region49: #{graph_sequential_forward.6} parent=0
    _
  %s5 = ssub.s32 1, %s3
  %s6 = scalar_select 0, %s5, %s3
  $region1: #{graph_sequential_forward.6} parent=0
    #allocation2 [shape = 'u8[98304]{0}', space=vmem, size = 0x18000, scoped, tag = 'input window, operand 0']
    #allocation3 [shape = 's32[2]{0}', space=sflag, size = 0x8, scoped, tag = 'scoped memory for graph_sequential_forward.6']
    #allocation4 [shape = 'u8[32768]{0}', space=vmem, size = 0x8000, scoped, tag = 'input window, operand 1, single buffered']
    #allocation5 [shape = 's32[1]{0}', space=sflag, size = 0x4, scoped, tag = 'scoped memory for graph_sequential_forward.6']
    %7 = vsyncpa [#allocation3], 0
    %s8 = scalar_lea.sflag [#allocation3], 1
    %9 = vsyncpa %s8, 0
    %10 = vsyncpa [#allocation5], 0
    loop: start=0, step=1, limit=4
    $region2: #{graph_sequential_forward.6} parent=1 // loop_pre_header
      _
    $region3: #{graph_sequential_forward.6} parent=1 // loop_header
      %s12 = sphi 0, %s16
      %p13 = scmp.ge.s32.totalorder %s12, 4
      %s22 = sphi 0, %s24
      %s25 = sphi 0, %s22
      %s26 = sphi 0, %s25
      %s42 = sphi 0, %s26
      %s46 = sphi 0, %s46
      %s48 = sphi 0, %s46
      %s49 = sphi 0, %s48
      %s63 = sphi 0, %s49
      %s69 = sphi 0, %s71
      %s72 = sphi 0, %s69
      %s73 = sphi 0, %s72
      %s89 = sphi 0, %s73
    $region4: #{graph_sequential_forward.6} parent=1 // loop_header_branch
      %15 = sbr.rel (%p13) target = $region8
    $region5: #{graph_sequential_forward.6} parent=1 // loop_body
      %s17 = ssub.s32 %s12, 1
      %s18 = ssub.s32 %s12, 2
      %s19 = sadd.s32 %s12, 1
      %s20 = ssub.s32 %s12, %s19
      %p21 = scmp.eq.s32.totalorder %s20, 0
      %s23 = sadd.s32 %s22, 1
      %s24 = scalar_select %p21, %s22, %s23
      %p27 = pneg %p21
      %p28 = scmp.eq.s32.totalorder %s12, 1
      %p29 = por %p27, %p28
      %p30 = scmp.ne.s32.totalorder %s22, %s25
      %p31 = scmp.eq.s32.totalorder %s12, 0
      %p32 = por %p30, %p31
      %p33 = scmp.ne.s32.totalorder %s22, %s25
      %p34 = scmp.eq.s32.totalorder %s17, 1
      %p35 = por %p33, %p34
      %p36 = scmp.ne.s32.totalorder %s25, %s26
      %p37 = scmp.eq.s32.totalorder %s17, 0
      %p38 = por %p36, %p37
      %p39 = scmp.ne.s32.totalorder %s25, %s26
      %p40 = scmp.eq.s32.totalorder %s18, 1
      %p41 = por %p39, %p40
      %p43 = scmp.ne.s32.totalorder %s26, %s42
      %p44 = scmp.eq.s32.totalorder %s18, 0
      %p45 = por %p43, %p44
      %s47 = sadd.s32 %s46, 1
      %p50 = scmp.eq.s32.totalorder %s12, 1
      %p51 = scmp.ne.s32.totalorder %s46, %s48
      %p52 = scmp.eq.s32.totalorder %s12, 0
      %p53 = por %p51, %p52
      %p54 = scmp.ne.s32.totalorder %s46, %s48
      %p55 = scmp.eq.s32.totalorder %s17, 1
      %p56 = por %p54, %p55
      %p57 = scmp.ne.s32.totalorder %s48, %s49
      %p58 = scmp.eq.s32.totalorder %s17, 0
      %p59 = por %p57, %p58
      %p60 = scmp.ne.s32.totalorder %s48, %s49
      %p61 = scmp.eq.s32.totalorder %s18, 1
      %p62 = por %p60, %p61
      %p64 = scmp.ne.s32.totalorder %s49, %s63
      %p65 = scmp.eq.s32.totalorder %s18, 0
      %p66 = por %p64, %p65
      %s67 = ssub.s32 %s12, %s19
      %p68 = scmp.eq.s32.totalorder %s67, 0
      %s70 = sadd.s32 %s69, 1
      %s71 = scalar_select %p68, %s69, %s70
      %p74 = pneg %p68
      %p75 = scmp.eq.s32.totalorder %s12, 1
      %p76 = por %p74, %p75
      %p77 = scmp.ne.s32.totalorder %s69, %s72
      %p78 = scmp.eq.s32.totalorder %s12, 0
      %p79 = por %p77, %p78
      %p80 = scmp.ne.s32.totalorder %s69, %s72
      %p81 = scmp.eq.s32.totalorder %s17, 1
      %p82 = por %p80, %p81
      %p83 = scmp.ne.s32.totalorder %s72, %s73
      %p84 = scmp.eq.s32.totalorder %s17, 0
      %p85 = por %p83, %p84
      %p86 = scmp.ne.s32.totalorder %s72, %s73
      %p87 = scmp.eq.s32.totalorder %s18, 1
      %p88 = por %p86, %p87
      %p90 = scmp.ne.s32.totalorder %s73, %s89
      %p91 = scmp.eq.s32.totalorder %s18, 0
      %p92 = por %p90, %p91
      %p93 = scmp.le.s32.totalorder 1, %s12
      %p94 = scmp.lt.s32.totalorder %s12, 3
      %p95 = pnand %p93, %p94
      %p96 = pneg %p95
      // Predicated region
      $region9: #{graph_sequential_forward.6} parent=5 // pred_check
        _
      $region10: #{graph_sequential_forward.6} parent=5 // pred_check_branch
        %98 = sbr.rel (%p95) target = $region12
      $region11: #{graph_sequential_forward.6} parent=5 // pred_region
        %s99 = ssub.s32 %s12, 1
        // Predicated region
        $region13: #{graph_sequential_forward.6} parent=11 // pred_check
          %p100 = pneg %p59
        $region14: #{graph_sequential_forward.6} parent=11 // pred_check_branch
          %102 = sbr.rel (%p100) target = $region16
        $region15: #{graph_sequential_forward.6} parent=11 // pred_region
          %s104 = ssub.s32 1024, 1024
          %105 = vsyncadd [#allocation5], %s104
          %s106 = sshll.u32 [#allocation4], 4
          %s107 = int_to_ptr.vmem [resolvable:$true] %s106
          %112 = dma.hbm_to_vmem [thread:$0]  %s1, 1024, %s107, [#allocation5], 64, 64, 4
        $region16: #{graph_sequential_forward.6} parent=11 // pred_fallthru
          _
      $region12: #{graph_sequential_forward.6} parent=5 // pred_fallthru
        _
      %p113 = scmp.lt.s32.totalorder %s12, 2
      // Predicated region
      $region17: #{graph_sequential_forward.6} parent=5 // pred_check
        %p114 = pneg %p113
      $region18: #{graph_sequential_forward.6} parent=5 // pred_check_branch
        %116 = sbr.rel (%p114) target = $region20
      $region19: #{graph_sequential_forward.6} parent=5 // pred_region
        // Predicated region
        $region21: #{graph_sequential_forward.6} parent=19 // pred_check
          %p117 = pneg %p32
        $region22: #{graph_sequential_forward.6} parent=19 // pred_check_branch
          %119 = sbr.rel (%p117) target = $region24
        $region23: #{graph_sequential_forward.6} parent=19 // pred_region
          %s120 = sand.u32 %s22, 1
          %s121 = scalar_lea.sflag [#allocation3], %s120
          %s122 = sand.u32 %s22, 1
          %s123 = smul.addr %s122, 96
          %s124 = scalar_lea.vmem [#allocation2], %s123
          %s125 = smul.u32 24, %s12
          %s127 = ssub.s32 1536, 1536
          %128 = vsyncadd %s121, %s127
          %s129 = smul.addr %s125, 64
          %s130 = scalar_lea.hbm %s0, %s129
          %s131 = sshll.u32 %s124, 4
          %s132 = int_to_ptr.vmem [resolvable:$true] %s131
          %137 = dma.hbm_to_vmem [thread:$0]  %s130, 1536, %s132, %s121, 64, 64, 4
        $region24: #{graph_sequential_forward.6} parent=19 // pred_fallthru
          _
      $region20: #{graph_sequential_forward.6} parent=5 // pred_fallthru
        _
      %p138 = scmp.le.s32.totalorder 1, %s12
      %p139 = scmp.lt.s32.totalorder %s12, 3
      %p140 = pnand %p138, %p139
      %p141 = pneg %p140
      // Predicated region
      $region25: #{graph_sequential_forward.6} parent=5 // pred_check
        _
      $region26: #{graph_sequential_forward.6} parent=5 // pred_check_branch
        %143 = sbr.rel (%p140) target = $region28
      $region27: #{graph_sequential_forward.6} parent=5 // pred_region
        %s144 = ssub.s32 %s12, 1
        %s145 = sand.u32 %s25, 1
        %s146 = scalar_lea.sflag [#allocation3], %s145
        %s147 = sand.u32 %s25, 1
        %s148 = smul.addr %s147, 96
        %s149 = scalar_lea.vmem [#allocation2], %s148
        // Predicated region
        $region29: #{graph_sequential_forward.6} parent=27 // pred_check
          %p150 = pneg %p38
        $region30: #{graph_sequential_forward.6} parent=27 // pred_check_branch
          %152 = sbr.rel (%p150) target = $region32
        $region31: #{graph_sequential_forward.6} parent=27 // pred_region
          %153 = dma.done %s146, 1536
        $region32: #{graph_sequential_forward.6} parent=27 // pred_fallthru
          _
        // Predicated region
        $region33: #{graph_sequential_forward.6} parent=27 // pred_check
          %p154 = pneg %p59
        $region34: #{graph_sequential_forward.6} parent=27 // pred_check_branch
          %156 = sbr.rel (%p154) target = $region36
        $region35: #{graph_sequential_forward.6} parent=27 // pred_region
          %157 = dma.done [#allocation5], 1024
        $region36: #{graph_sequential_forward.6} parent=27 // pred_fallthru
          _
        %s158 = sand.u32 %s25, 1
        %s159 = scalar_lea.sflag [#allocation3], %s158
        %s160 = sand.u32 %s25, 1
        %s161 = smul.addr %s160, 96
        %s162 = scalar_lea.vmem [#allocation2], %s161
        %p163 = pneg %p38
        %p164 = pneg %p35
        %p165 = pneg %p59
        %p166 = pneg %p56
        %p167 = pneg %p85
        %p168 = pneg %p82
        %s169 = smul.u32 24, %s17
        %p170 = scmp.lt.s32.totalorder %s169, 47
        %s171 = scalar_select %p170, %s169, 47
        %s172 = smul.addr %s171, 4
        %s173 = scalar_lea.vmem %s2, %s172
        %s174 = smul.u32 24, %s17
        %s175 = smul.u32 24, %s17
        %p176 = scmp.lt.s32.totalorder %s175, 47
        %s177 = scalar_select %p176, %s175, 47
        %s178 = smul.addr %s177, 4
        %s179 = scalar_lea.vmem %s2, %s178
        %s180 = smul.u32 24, %s17
        %v182 = vld [vmem:[%s149] sm:$0xf]
        %v183 = vld [vmem:[%s149 + $0x4] sm:$0xf]
        %v184 = vld [vmem:[%s149 + $0x8] sm:$0xf]
        %v185 = vld [vmem:[%s149 + $0xc] sm:$0xf]
        %v186 = vld [vmem:[%s149 + $0x10] sm:$0xf]
        %v187 = vld [vmem:[%s149 + $0x14] sm:$0xf]
        %v188 = vld [vmem:[%s149 + $0x18] sm:$0xf]
        %v189 = vld [vmem:[%s149 + $0x1c] sm:$0xf]
        %v190 = vld [vmem:[%s149 + $0x20] sm:$0xf]
        %v191 = vld [vmem:[%s149 + $0x24] sm:$0xf]
        %v192 = vld [vmem:[%s149 + $0x28] sm:$0xf]
        %v193 = vld [vmem:[%s149 + $0x2c] sm:$0xf]
        %v194 = vld [vmem:[%s149 + $0x30] sm:$0xf]
        %v195 = vld [vmem:[%s149 + $0x34] sm:$0xf]
        %v196 = vld [vmem:[%s149 + $0x38] sm:$0xf]
        %v197 = vld [vmem:[%s149 + $0x3c] sm:$0xf]
        %v198 = vld [vmem:[%s149 + $0x40] sm:$0xf]
        %v199 = vld [vmem:[%s149 + $0x44] sm:$0xf]
        %v200 = vld [vmem:[%s149 + $0x48] sm:$0xf]
        %v201 = vld [vmem:[%s149 + $0x4c] sm:$0xf]
        %v202 = vld [vmem:[%s149 + $0x50] sm:$0xf]
        %v203 = vld [vmem:[%s149 + $0x54] sm:$0xf]
        %v204 = vld [vmem:[%s149 + $0x58] sm:$0xf]
        %v205 = vld [vmem:[%s149 + $0x5c] sm:$0xf]
        %v206 = vld [vmem:[#allocation4] sm:$0xf]
        %v207 = vld [vmem:[#allocation4 + $0x4] sm:$0xf]
        %v208 = vld [vmem:[#allocation4 + $0x8] sm:$0xf]
        %v209 = vld [vmem:[#allocation4 + $0xc] sm:$0xf]
        %v210 = vld [vmem:[#allocation4 + $0x10] sm:$0xf]
        %v211 = vld [vmem:[#allocation4 + $0x14] sm:$0xf]
        %v212 = vld [vmem:[#allocation4 + $0x18] sm:$0xf]
        %v213 = vld [vmem:[#allocation4 + $0x1c] sm:$0xf]
        %v214 = vld [vmem:[#allocation4 + $0x20] sm:$0xf]
        %v215 = vld [vmem:[#allocation4 + $0x24] sm:$0xf]
        %v216 = vld [vmem:[#allocation4 + $0x28] sm:$0xf]
        %v217 = vld [vmem:[#allocation4 + $0x2c] sm:$0xf]
        %v218 = vld [vmem:[#allocation4 + $0x30] sm:$0xf]
        %v219 = vld [vmem:[#allocation4 + $0x34] sm:$0xf]
        %v220 = vld [vmem:[#allocation4 + $0x38] sm:$0xf]
        %v221 = vld [vmem:[#allocation4 + $0x3c] sm:$0xf]
        %v246 = vunpack.c.l.b16 %v182
        %v247 = vunpack.c.l.b16 %v183
        %v248 = vunpack.c.l.b16 %v184
        %v249 = vunpack.c.l.b16 %v185
        %v250 = vunpack.c.l.b16 %v186
        %v251 = vunpack.c.l.b16 %v187
        %v252 = vunpack.c.l.b16 %v188
        %v253 = vunpack.c.l.b16 %v189
        %v254 = vunpack.c.l.b16 %v190
        %v255 = vunpack.c.l.b16 %v191
        %v256 = vunpack.c.l.b16 %v192
        %v257 = vunpack.c.l.b16 %v193
        %v258 = vunpack.c.l.b16 %v194
        %v259 = vunpack.c.l.b16 %v195
        %v260 = vunpack.c.l.b16 %v196
        %v261 = vunpack.c.l.b16 %v197
        %v262 = vunpack.c.l.b16 %v198
        %v263 = vunpack.c.l.b16 %v199
        %v264 = vunpack.c.l.b16 %v200
        %v265 = vunpack.c.l.b16 %v201
        %v266 = vunpack.c.l.b16 %v202
        %v267 = vunpack.c.l.b16 %v203
        %v268 = vunpack.c.l.b16 %v204
        %v269 = vunpack.c.l.b16 %v205
        %v270 = vpack.c.b16 %v247, %v246
        %v271 = vpack.c.b16 %v249, %v248
        %v272 = vpack.c.b16 %v251, %v250
        %v273 = vpack.c.b16 %v253, %v252
        %v274 = vpack.c.b16 %v255, %v254
        %v275 = vpack.c.b16 %v257, %v256
        %v276 = vpack.c.b16 %v259, %v258
        %v277 = vpack.c.b16 %v261, %v260
        %v278 = vpack.c.b16 %v263, %v262
        %v279 = vpack.c.b16 %v265, %v264
        %v280 = vpack.c.b16 %v267, %v266
        %v281 = vpack.c.b16 %v269, %v268
        %v310 = vunpack.c.l.b16 %v206
        %v311 = vunpack.c.l.b16 %v207
        %v312 = vunpack.c.l.b16 %v208
        %v313 = vunpack.c.l.b16 %v209
        %v314 = vunpack.c.l.b16 %v210
        %v315 = vunpack.c.l.b16 %v211
        %v316 = vunpack.c.l.b16 %v212
        %v317 = vunpack.c.l.b16 %v213
        %v318 = vunpack.c.l.b16 %v214
        %v319 = vunpack.c.l.b16 %v215
        %v320 = vunpack.c.l.b16 %v216
        %v321 = vunpack.c.l.b16 %v217
        %v322 = vunpack.c.l.b16 %v218
        %v323 = vunpack.c.l.b16 %v219
        %v324 = vunpack.c.l.b16 %v220
        %v325 = vunpack.c.l.b16 %v221
        %v326 = vpack.c.b16 %v311, %v310
        %v327 = vpack.c.b16 %v313, %v312
        %v328 = vpack.c.b16 %v315, %v314
        %v329 = vpack.c.b16 %v317, %v316
        %v330 = vpack.c.b16 %v319, %v318
        %v331 = vpack.c.b16 %v321, %v320
        %v332 = vpack.c.b16 %v323, %v322
        %v333 = vpack.c.b16 %v325, %v324
        %342 = vmatprep.subr.bf16.mxu0 0
        %343 = vmatpush1.bf16.msra.mxu0 %v333
        %344 = vmatprep.subr.bf16.mxu0 0
        %345 = vmatpush1.bf16.msra.mxu0 %v332
        %346 = vmatprep.subr.bf16.mxu0 0
        %347 = vmatpush1.bf16.msra.mxu0 %v331
        %348 = vmatprep.subr.bf16.mxu0 0
        %349 = vmatpush1.bf16.msra.mxu0 %v330
        %350 = vmatprep.subr.bf16.mxu0 0
        %351 = vmatpush1.bf16.msra.mxu0 %v329
        %352 = vmatprep.subr.bf16.mxu0 0
        %353 = vmatpush1.bf16.msra.mxu0 %v328
        %354 = vmatprep.subr.bf16.mxu0 0
        %355 = vmatpush1.bf16.msra.mxu0 %v327
        %356 = vmatprep.subr.bf16.mxu0 0
        %357 = vmatpush1.bf16.msra.mxu0 %v326
        %358 = vmatprep.subr.bf16.mxu0 0
        %359 = vmatpush2.bf16.msra.mxu0 0
        %360 = vmatprep.subr.bf16.mxu0 0
        %361 = vmatpush2.bf16.msra.mxu0 0
        %362 = vmatprep.subr.bf16.mxu0 0
        %363 = vmatpush2.bf16.msra.mxu0 0
        %364 = vmatprep.subr.bf16.mxu0 0
        %365 = vmatpush2.bf16.msra.mxu0 0
        %366 = vmatprep.subr.bf16.mxu0 0
        %367 = vmatpush2.bf16.msra.mxu0 0
        %368 = vmatprep.subr.bf16.mxu0 0
        %369 = vmatpush2.bf16.msra.mxu0 0
        %370 = vmatprep.subr.bf16.mxu0 0
        %371 = vmatpush2.bf16.msra.mxu0 0
        %372 = vmatprep.subr.bf16.mxu0 0
        %373 = vmatpush2.bf16.msra.mxu0 0
        %374 = vmatprep.mubr.bf16.mxu0 0
        %375 = vmatmul.mubr.bf16.gmra.mxu0 %v270
        %v376 = vpop.f32.mrf.mxu0
        %v377 = vadd.f32 0.0, %v376
        %v378 = vpop.f32.mrf.mxu0
        %v379 = vpop.f32.mrf.mxu0
        %v380 = vadd.f32 0.0, %v379
        %v381 = vpop.f32.mrf.mxu0
        %382 = vmatprep.mubr.bf16.mxu0 0
        %383 = vmatmul.mubr.bf16.gmra.mxu0 %v271
        %v384 = vpop.f32.mrf.mxu0
        %v385 = vadd.f32 0.0, %v384
        %v386 = vpop.f32.mrf.mxu0
        %v387 = vpop.f32.mrf.mxu0
        %v388 = vadd.f32 0.0, %v387
        %v389 = vpop.f32.mrf.mxu0
        %390 = vmatprep.mubr.bf16.mxu0 0
        %391 = vmatmul.mubr.bf16.gmra.mxu0 %v272
        %v392 = vpop.f32.mrf.mxu0
        %v393 = vadd.f32 0.0, %v392
        %v394 = vpop.f32.mrf.mxu0
        %v395 = vpop.f32.mrf.mxu0
        %v396 = vadd.f32 0.0, %v395
        %v397 = vpop.f32.mrf.mxu0
        %398 = vmatprep.mubr.bf16.mxu0 0
        %399 = vmatmul.mubr.bf16.gmra.mxu0 %v273
        %v400 = vpop.f32.mrf.mxu0
        %v401 = vadd.f32 0.0, %v400
        %v402 = vpop.f32.mrf.mxu0
        %v403 = vpop.f32.mrf.mxu0
        %v404 = vadd.f32 0.0, %v403
        %v405 = vpop.f32.mrf.mxu0
        %406 = vmatprep.mubr.bf16.mxu0 0
        %407 = vmatmul.mubr.bf16.gmra.mxu0 %v274
        %v408 = vpop.f32.mrf.mxu0
        %v409 = vadd.f32 0.0, %v408
        %v410 = vpop.f32.mrf.mxu0
        %v411 = vpop.f32.mrf.mxu0
        %v412 = vadd.f32 0.0, %v411
        %v413 = vpop.f32.mrf.mxu0
        %414 = vmatprep.mubr.bf16.mxu0 0
        %415 = vmatmul.mubr.bf16.gmra.mxu0 %v275
        %v416 = vpop.f32.mrf.mxu0
        %v417 = vadd.f32 0.0, %v416
        %v418 = vpop.f32.mrf.mxu0
        %v419 = vpop.f32.mrf.mxu0
        %v420 = vadd.f32 0.0, %v419
        %v421 = vpop.f32.mrf.mxu0
        %422 = vmatprep.mubr.bf16.mxu0 0
        %423 = vmatmul.mubr.bf16.gmra.mxu0 %v276
        %v424 = vpop.f32.mrf.mxu0
        %v425 = vadd.f32 0.0, %v424
        %v426 = vpop.f32.mrf.mxu0
        %v427 = vpop.f32.mrf.mxu0
        %v428 = vadd.f32 0.0, %v427
        %v429 = vpop.f32.mrf.mxu0
        %430 = vmatprep.mubr.bf16.mxu0 0
        %431 = vmatmul.mubr.bf16.gmra.mxu0 %v277
        %v432 = vpop.f32.mrf.mxu0
        %v433 = vadd.f32 0.0, %v432
        %v434 = vpop.f32.mrf.mxu0
        %v435 = vpop.f32.mrf.mxu0
        %v436 = vadd.f32 0.0, %v435
        %v437 = vpop.f32.mrf.mxu0
        %438 = vmatprep.mubr.bf16.mxu0 0
        %439 = vmatmul.mubr.bf16.gmra.mxu0 %v278
        %v440 = vpop.f32.mrf.mxu0
        %v441 = vadd.f32 0.0, %v440
        %v442 = vpop.f32.mrf.mxu0
        %v443 = vpop.f32.mrf.mxu0
        %v444 = vadd.f32 0.0, %v443
        %v445 = vpop.f32.mrf.mxu0
        %446 = vmatprep.mubr.bf16.mxu0 0
        %447 = vmatmul.mubr.bf16.gmra.mxu0 %v279
        %v448 = vpop.f32.mrf.mxu0
        %v449 = vadd.f32 0.0, %v448
        %v450 = vpop.f32.mrf.mxu0
        %v451 = vpop.f32.mrf.mxu0
        %v452 = vadd.f32 0.0, %v451
        %v453 = vpop.f32.mrf.mxu0
        %454 = vmatprep.mubr.bf16.mxu0 0
        %455 = vmatmul.mubr.bf16.gmra.mxu0 %v280
        %v456 = vpop.f32.mrf.mxu0
        %v457 = vadd.f32 0.0, %v456
        %v458 = vpop.f32.mrf.mxu0
        %v459 = vpop.f32.mrf.mxu0
        %v460 = vadd.f32 0.0, %v459
        %v461 = vpop.f32.mrf.mxu0
        %462 = vmatprep.mubr.bf16.mxu0 0
        %463 = vmatmul.mubr.bf16.gmra.mxu0 %v281
        %v464 = vpop.f32.mrf.mxu0
        %v465 = vadd.f32 0.0, %v464
        %v466 = vpop.f32.mrf.mxu0
        %v467 = vpop.f32.mrf.mxu0
        %v468 = vadd.f32 0.0, %v467
        %v469 = vpop.f32.mrf.mxu0
        %470 = vdwg.mxu0
        %v471 = vpack.c.bf16 %v380, %v377
        %v472 = vpack.c.bf16 %v388, %v385
        %v473 = vpack.c.bf16 %v396, %v393
        %v474 = vpack.c.bf16 %v404, %v401
        %v475 = vpack.c.bf16 %v412, %v409
        %v476 = vpack.c.bf16 %v420, %v417
        %v477 = vpack.c.bf16 %v428, %v425
        %v478 = vpack.c.bf16 %v436, %v433
        %v479 = vpack.c.bf16 %v444, %v441
        %v480 = vpack.c.bf16 %v452, %v449
        %v481 = vpack.c.bf16 %v460, %v457
        %v482 = vpack.c.bf16 %v468, %v465
        %v495 = vunpack.c.l.b16 %v471
        %v496 = vunpack.c.h.b16 %v471
        %v497 = vunpack.c.l.b16 %v472
        %v498 = vunpack.c.h.b16 %v472
        %v499 = vunpack.c.l.b16 %v473
        %v500 = vunpack.c.h.b16 %v473
        %v501 = vunpack.c.l.b16 %v474
        %v502 = vunpack.c.h.b16 %v474
        %v503 = vunpack.c.l.b16 %v475
        %v504 = vunpack.c.h.b16 %v475
        %v505 = vunpack.c.l.b16 %v476
        %v506 = vunpack.c.h.b16 %v476
        %v507 = vunpack.c.l.b16 %v477
        %v508 = vunpack.c.h.b16 %v477
        %v509 = vunpack.c.l.b16 %v478
        %v510 = vunpack.c.h.b16 %v478
        %v511 = vunpack.c.l.b16 %v479
        %v512 = vunpack.c.h.b16 %v479
        %v513 = vunpack.c.l.b16 %v480
        %v514 = vunpack.c.h.b16 %v480
        %v515 = vunpack.c.l.b16 %v481
        %v516 = vunpack.c.h.b16 %v481
        %v517 = vunpack.c.l.b16 %v482
        %v518 = vunpack.c.h.b16 %v482
        %v519 = vpack.c.b16 %v495, %v495
        %v520 = vpack.c.b16 %v496, %v496
        %v521 = vpack.c.b16 %v497, %v497
        %v522 = vpack.c.b16 %v498, %v498
        %v523 = vpack.c.b16 %v499, %v499
        %v524 = vpack.c.b16 %v500, %v500
        %v525 = vpack.c.b16 %v501, %v501
        %v526 = vpack.c.b16 %v502, %v502
        %v527 = vpack.c.b16 %v503, %v503
        %v528 = vpack.c.b16 %v504, %v504
        %v529 = vpack.c.b16 %v505, %v505
        %v530 = vpack.c.b16 %v506, %v506
        %v531 = vpack.c.b16 %v507, %v507
        %v532 = vpack.c.b16 %v508, %v508
        %v533 = vpack.c.b16 %v509, %v509
        %v534 = vpack.c.b16 %v510, %v510
        %v535 = vpack.c.b16 %v511, %v511
        %v536 = vpack.c.b16 %v512, %v512
        %v537 = vpack.c.b16 %v513, %v513
        %v538 = vpack.c.b16 %v514, %v514
        %v539 = vpack.c.b16 %v515, %v515
        %v540 = vpack.c.b16 %v516, %v516
        %v541 = vpack.c.b16 %v517, %v517
        %v542 = vpack.c.b16 %v518, %v518
        %567 = vst [vmem:[%s179] sm:$0xf] %v519
        %568 = vst [vmem:[%s179 + $0x4] sm:$0xf] %v520
        %569 = vst [vmem:[%s179 + $0x8] sm:$0xf] %v521
        %570 = vst [vmem:[%s179 + $0xc] sm:$0xf] %v522
        %571 = vst [vmem:[%s179 + $0x10] sm:$0xf] %v523
        %572 = vst [vmem:[%s179 + $0x14] sm:$0xf] %v524
        %573 = vst [vmem:[%s179 + $0x18] sm:$0xf] %v525
        %574 = vst [vmem:[%s179 + $0x1c] sm:$0xf] %v526
        %575 = vst [vmem:[%s179 + $0x20] sm:$0xf] %v527
        %576 = vst [vmem:[%s179 + $0x24] sm:$0xf] %v528
        %577 = vst [vmem:[%s179 + $0x28] sm:$0xf] %v529
        %578 = vst [vmem:[%s179 + $0x2c] sm:$0xf] %v530
        %579 = vst [vmem:[%s179 + $0x30] sm:$0xf] %v531
        %580 = vst [vmem:[%s179 + $0x34] sm:$0xf] %v532
        %581 = vst [vmem:[%s179 + $0x38] sm:$0xf] %v533
        %582 = vst [vmem:[%s179 + $0x3c] sm:$0xf] %v534
        %583 = vst [vmem:[%s179 + $0x40] sm:$0xf] %v535
        %584 = vst [vmem:[%s179 + $0x44] sm:$0xf] %v536
        %585 = vst [vmem:[%s179 + $0x48] sm:$0xf] %v537
        %586 = vst [vmem:[%s179 + $0x4c] sm:$0xf] %v538
        %587 = vst [vmem:[%s179 + $0x50] sm:$0xf] %v539
        %588 = vst [vmem:[%s179 + $0x54] sm:$0xf] %v540
        %589 = vst [vmem:[%s179 + $0x58] sm:$0xf] %v541
        %590 = vst [vmem:[%s179 + $0x5c] sm:$0xf] %v542
        %s591 = smul.u32 24, %s17
        %p592 = scmp.lt.s32.totalorder %s591, 47
        %s593 = scalar_select %p592, %s591, 47
        %s594 = smul.addr %s593, 4
        %s595 = scalar_lea.vmem %s2, %s594
        // Predicated region
        $region37: #{graph_sequential_forward.6} parent=27 // pred_check
          %p596 = pneg %p82
        $region38: #{graph_sequential_forward.6} parent=27 // pred_check_branch
          %598 = sbr.rel (%p596) target = $region40
        $region39: #{graph_sequential_forward.6} parent=27 // pred_region
          %s599 = smul.u32 24, %s17
        $region40: #{graph_sequential_forward.6} parent=27 // pred_fallthru
          _
      $region28: #{graph_sequential_forward.6} parent=5 // pred_fallthru
        _
      %p600 = scmp.le.s32.totalorder 2, %s12
      // Predicated region
      $region41: #{graph_sequential_forward.6} parent=5 // pred_check
        %p601 = pneg %p600
      $region42: #{graph_sequential_forward.6} parent=5 // pred_check_branch
        %603 = sbr.rel (%p601) target = $region44
      $region43: #{graph_sequential_forward.6} parent=5 // pred_region
        %s604 = ssub.s32 %s12, 2
        // Predicated region
        $region45: #{graph_sequential_forward.6} parent=43 // pred_check
          %p605 = pneg %p88
        $region46: #{graph_sequential_forward.6} parent=43 // pred_check_branch
          %607 = sbr.rel (%p605) target = $region48
        $region47: #{graph_sequential_forward.6} parent=43 // pred_region
          %s608 = smul.u32 24, %s18
          %p609 = scmp.lt.s32.totalorder %s608, 47
          %s610 = scalar_select %p609, %s608, 47
          %s611 = smul.addr %s610, 4
          %s612 = scalar_lea.vmem %s2, %s611
        $region48: #{graph_sequential_forward.6} parent=43 // pred_fallthru
          _
      $region44: #{graph_sequential_forward.6} parent=5 // pred_fallthru
        _
    $region6: #{graph_sequential_forward.6} parent=1 // loop_footer
      %s16 = sadd.s32 1, %s12
    $region7: #{graph_sequential_forward.6} parent=1 // loop_footer_branch
      %11 = sbr.rel target = $region3
    $region8: #{graph_sequential_forward.6} parent=1 // loop_exit
      _
    %613 = vsyncpa [#allocation3], 1
    %s614 = scalar_lea.sflag [#allocation3], 1
    %615 = vsyncpa %s614, 1
    %616 = vsyncpa [#allocation5], 1

// kernel: graph_sequential_forward.8
$region0: #{graph_sequential_forward.8}
  #allocation0 [shape = 'u32[]', space=smem, size = 0x4, offset = 0x4, fixed_abs, tag = 'smem constant byte address 0x4 - core index']
  #allocation1 [shape = 'u32[144,128]{1,0:T(1,128)}', space=vmem, size = 0x12000, scoped, tag = 'internal scratch']
  %s0 = inlined_call_operand.vmem [shape: bf16[384,128], index: 0, kind: input, shape index: {}]
  %s1 = inlined_call_operand.vmem [shape: bf16[128,128], index: 1, kind: input, shape index: {}]
  %s2 = inlined_call_operand.vmem [shape: bf16[384,128], index: 2, kind: output, shape index: {}]
  %s3 = sld [smem:[#allocation0]]
  $region41: #{graph_sequential_forward.8} parent=0
    _
  %s5 = ssub.s32 1, %s3
  %s6 = scalar_select 0, %s5, %s3
  loop: start=0, step=1, limit=4
  $region2: #{graph_sequential_forward.8} parent=0 // loop_pre_header
    _
  $region3: #{graph_sequential_forward.8} parent=0 // loop_header
    %s8 = sphi 0, %s12
    %p9 = scmp.ge.s32.totalorder %s8, 4
    %s18 = sphi 0, %s20
    %s21 = sphi 0, %s18
    %s22 = sphi 0, %s21
    %s38 = sphi 0, %s22
    %s42 = sphi 0, %s42
    %s44 = sphi 0, %s42
    %s45 = sphi 0, %s44
    %s59 = sphi 0, %s45
    %s65 = sphi 0, %s67
    %s68 = sphi 0, %s65
    %s69 = sphi 0, %s68
    %s85 = sphi 0, %s69
  $region4: #{graph_sequential_forward.8} parent=0 // loop_header_branch
    %11 = sbr.rel (%p9) target = $region8
  $region5: #{graph_sequential_forward.8} parent=0 // loop_body
    %s13 = ssub.s32 %s8, 1
    %s14 = ssub.s32 %s8, 2
    %s15 = sadd.s32 %s8, 1
    %s16 = ssub.s32 %s8, %s15
    %p17 = scmp.eq.s32.totalorder %s16, 0
    %s19 = sadd.s32 %s18, 1
    %s20 = scalar_select %p17, %s18, %s19
    %p23 = pneg %p17
    %p24 = scmp.eq.s32.totalorder %s8, 1
    %p25 = por %p23, %p24
    %p26 = scmp.ne.s32.totalorder %s18, %s21
    %p27 = scmp.eq.s32.totalorder %s8, 0
    %p28 = por %p26, %p27
    %p29 = scmp.ne.s32.totalorder %s18, %s21
    %p30 = scmp.eq.s32.totalorder %s13, 1
    %p31 = por %p29, %p30
    %p32 = scmp.ne.s32.totalorder %s21, %s22
    %p33 = scmp.eq.s32.totalorder %s13, 0
    %p34 = por %p32, %p33
    %p35 = scmp.ne.s32.totalorder %s21, %s22
    %p36 = scmp.eq.s32.totalorder %s14, 1
    %p37 = por %p35, %p36
    %p39 = scmp.ne.s32.totalorder %s22, %s38
    %p40 = scmp.eq.s32.totalorder %s14, 0
    %p41 = por %p39, %p40
    %s43 = sadd.s32 %s42, 1
    %p46 = scmp.eq.s32.totalorder %s8, 1
    %p47 = scmp.ne.s32.totalorder %s42, %s44
    %p48 = scmp.eq.s32.totalorder %s8, 0
    %p49 = por %p47, %p48
    %p50 = scmp.ne.s32.totalorder %s42, %s44
    %p51 = scmp.eq.s32.totalorder %s13, 1
    %p52 = por %p50, %p51
    %p53 = scmp.ne.s32.totalorder %s44, %s45
    %p54 = scmp.eq.s32.totalorder %s13, 0
    %p55 = por %p53, %p54
    %p56 = scmp.ne.s32.totalorder %s44, %s45
    %p57 = scmp.eq.s32.totalorder %s14, 1
    %p58 = por %p56, %p57
    %p60 = scmp.ne.s32.totalorder %s45, %s59
    %p61 = scmp.eq.s32.totalorder %s14, 0
    %p62 = por %p60, %p61
    %s63 = ssub.s32 %s8, %s15
    %p64 = scmp.eq.s32.totalorder %s63, 0
    %s66 = sadd.s32 %s65, 1
    %s67 = scalar_select %p64, %s65, %s66
    %p70 = pneg %p64
    %p71 = scmp.eq.s32.totalorder %s8, 1
    %p72 = por %p70, %p71
    %p73 = scmp.ne.s32.totalorder %s65, %s68
    %p74 = scmp.eq.s32.totalorder %s8, 0
    %p75 = por %p73, %p74
    %p76 = scmp.ne.s32.totalorder %s65, %s68
    %p77 = scmp.eq.s32.totalorder %s13, 1
    %p78 = por %p76, %p77
    %p79 = scmp.ne.s32.totalorder %s68, %s69
    %p80 = scmp.eq.s32.totalorder %s13, 0
    %p81 = por %p79, %p80
    %p82 = scmp.ne.s32.totalorder %s68, %s69
    %p83 = scmp.eq.s32.totalorder %s14, 1
    %p84 = por %p82, %p83
    %p86 = scmp.ne.s32.totalorder %s69, %s85
    %p87 = scmp.eq.s32.totalorder %s14, 0
    %p88 = por %p86, %p87
    %p89 = scmp.le.s32.totalorder 1, %s8
    %p90 = scmp.lt.s32.totalorder %s8, 3
    %p91 = pnand %p89, %p90
    %p92 = pneg %p91
    // Predicated region
    $region9: #{graph_sequential_forward.8} parent=5 // pred_check
      _
    $region10: #{graph_sequential_forward.8} parent=5 // pred_check_branch
      %94 = sbr.rel (%p91) target = $region12
    $region11: #{graph_sequential_forward.8} parent=5 // pred_region
      %s95 = ssub.s32 %s8, 1
      // Predicated region
      $region13: #{graph_sequential_forward.8} parent=11 // pred_check
        %p96 = pneg %p55
      $region14: #{graph_sequential_forward.8} parent=11 // pred_check_branch
        %98 = sbr.rel (%p96) target = $region16
      $region15: #{graph_sequential_forward.8} parent=11 // pred_region
        _
      $region16: #{graph_sequential_forward.8} parent=11 // pred_fallthru
        _
    $region12: #{graph_sequential_forward.8} parent=5 // pred_fallthru
      _
    %p99 = scmp.lt.s32.totalorder %s8, 2
    // Predicated region
    $region17: #{graph_sequential_forward.8} parent=5 // pred_check
      %p100 = pneg %p99
    $region18: #{graph_sequential_forward.8} parent=5 // pred_check_branch
      %102 = sbr.rel (%p100) target = $region20
    $region19: #{graph_sequential_forward.8} parent=5 // pred_region
      // Predicated region
      $region21: #{graph_sequential_forward.8} parent=19 // pred_check
        %p103 = pneg %p28
      $region22: #{graph_sequential_forward.8} parent=19 // pred_check_branch
        %105 = sbr.rel (%p103) target = $region24
      $region23: #{graph_sequential_forward.8} parent=19 // pred_region
        %s106 = smul.u32 24, %s8
        %p107 = scmp.lt.s32.totalorder %s106, 47
        %s108 = scalar_select %p107, %s106, 47
        %s109 = smul.addr %s108, 4
        %s110 = scalar_lea.vmem %s0, %s109
        %s111 = smul.u32 24, %s8
      $region24: #{graph_sequential_forward.8} parent=19 // pred_fallthru
        _
    $region20: #{graph_sequential_forward.8} parent=5 // pred_fallthru
      _
    %p112 = scmp.le.s32.totalorder 1, %s8
    %p113 = scmp.lt.s32.totalorder %s8, 3
    %p114 = pnand %p112, %p113
    %p115 = pneg %p114
    // Predicated region
    $region25: #{graph_sequential_forward.8} parent=5 // pred_check
      _
    $region26: #{graph_sequential_forward.8} parent=5 // pred_check_branch
      %117 = sbr.rel (%p114) target = $region28
    $region27: #{graph_sequential_forward.8} parent=5 // pred_region
      %s118 = ssub.s32 %s8, 1
      %s119 = smul.u32 24, %s13
      %p120 = scmp.lt.s32.totalorder %s119, 47
      %s121 = scalar_select %p120, %s119, 47
      %s122 = smul.addr %s121, 4
      %s123 = scalar_lea.vmem %s0, %s122
      %p124 = pneg %p34
      %p125 = pneg %p31
      %p126 = pneg %p55
      %p127 = pneg %p52
      %p128 = pneg %p81
      %p129 = pneg %p78
      %s130 = smul.u32 24, %s13
      %p131 = scmp.lt.s32.totalorder %s130, 47
      %s132 = scalar_select %p131, %s130, 47
      %s133 = smul.addr %s132, 4
      %s134 = scalar_lea.vmem %s2, %s133
      %s135 = smul.u32 24, %s13
      %p136 = scmp.lt.s32.totalorder %s135, 47
      %s137 = scalar_select %p136, %s135, 47
      %s138 = smul.addr %s137, 4
      %s139 = scalar_lea.vmem %s0, %s138
      %s140 = smul.u32 24, %s13
      %s141 = smul.u32 24, %s13
      %p142 = scmp.lt.s32.totalorder %s141, 47
      %s143 = scalar_select %p142, %s141, 47
      %s144 = smul.addr %s143, 4
      %s145 = scalar_lea.vmem %s2, %s144
      %s146 = smul.u32 24, %s13
      %v148 = vld [vmem:[%s139] sm:$0xf]
      %v149 = vld [vmem:[%s139 + $0x4] sm:$0xf]
      %v150 = vld [vmem:[%s139 + $0x8] sm:$0xf]
      %v151 = vld [vmem:[%s139 + $0xc] sm:$0xf]
      %v152 = vld [vmem:[%s139 + $0x10] sm:$0xf]
      %v153 = vld [vmem:[%s139 + $0x14] sm:$0xf]
      %v154 = vld [vmem:[%s139 + $0x18] sm:$0xf]
      %v155 = vld [vmem:[%s139 + $0x1c] sm:$0xf]
      %v156 = vld [vmem:[%s139 + $0x20] sm:$0xf]
      %v157 = vld [vmem:[%s139 + $0x24] sm:$0xf]
      %v158 = vld [vmem:[%s139 + $0x28] sm:$0xf]
      %v159 = vld [vmem:[%s139 + $0x2c] sm:$0xf]
      %v160 = vld [vmem:[%s139 + $0x30] sm:$0xf]
      %v161 = vld [vmem:[%s139 + $0x34] sm:$0xf]
      %v162 = vld [vmem:[%s139 + $0x38] sm:$0xf]
      %v163 = vld [vmem:[%s139 + $0x3c] sm:$0xf]
      %v164 = vld [vmem:[%s139 + $0x40] sm:$0xf]
      %v165 = vld [vmem:[%s139 + $0x44] sm:$0xf]
      %v166 = vld [vmem:[%s139 + $0x48] sm:$0xf]
      %v167 = vld [vmem:[%s139 + $0x4c] sm:$0xf]
      %v168 = vld [vmem:[%s139 + $0x50] sm:$0xf]
      %v169 = vld [vmem:[%s139 + $0x54] sm:$0xf]
      %v170 = vld [vmem:[%s139 + $0x58] sm:$0xf]
      %v171 = vld [vmem:[%s139 + $0x5c] sm:$0xf]
      %v172 = vld [vmem:[%s1] sm:$0xf]
      %v173 = vld [vmem:[%s1 + $0x4] sm:$0xf]
      %v174 = vld [vmem:[%s1 + $0x8] sm:$0xf]
      %v175 = vld [vmem:[%s1 + $0xc] sm:$0xf]
      %v176 = vld [vmem:[%s1 + $0x10] sm:$0xf]
      %v177 = vld [vmem:[%s1 + $0x14] sm:$0xf]
      %v178 = vld [vmem:[%s1 + $0x18] sm:$0xf]
      %v179 = vld [vmem:[%s1 + $0x1c] sm:$0xf]
      %v180 = vld [vmem:[%s1 + $0x20] sm:$0xf]
      %v181 = vld [vmem:[%s1 + $0x24] sm:$0xf]
      %v182 = vld [vmem:[%s1 + $0x28] sm:$0xf]
      %v183 = vld [vmem:[%s1 + $0x2c] sm:$0xf]
      %v184 = vld [vmem:[%s1 + $0x30] sm:$0xf]
      %v185 = vld [vmem:[%s1 + $0x34] sm:$0xf]
      %v186 = vld [vmem:[%s1 + $0x38] sm:$0xf]
      %v187 = vld [vmem:[%s1 + $0x3c] sm:$0xf]
      %v212 = vunpack.c.l.b16 %v148
      %v213 = vunpack.c.l.b16 %v149
      %v214 = vunpack.c.l.b16 %v150
      %v215 = vunpack.c.l.b16 %v151
      %v216 = vunpack.c.l.b16 %v152
      %v217 = vunpack.c.l.b16 %v153
      %v218 = vunpack.c.l.b16 %v154
      %v219 = vunpack.c.l.b16 %v155
      %v220 = vunpack.c.l.b16 %v156
      %v221 = vunpack.c.l.b16 %v157
      %v222 = vunpack.c.l.b16 %v158
      %v223 = vunpack.c.l.b16 %v159
      %v224 = vunpack.c.l.b16 %v160
      %v225 = vunpack.c.l.b16 %v161
      %v226 = vunpack.c.l.b16 %v162
      %v227 = vunpack.c.l.b16 %v163
      %v228 = vunpack.c.l.b16 %v164
      %v229 = vunpack.c.l.b16 %v165
      %v230 = vunpack.c.l.b16 %v166
      %v231 = vunpack.c.l.b16 %v167
      %v232 = vunpack.c.l.b16 %v168
      %v233 = vunpack.c.l.b16 %v169
      %v234 = vunpack.c.l.b16 %v170
      %v235 = vunpack.c.l.b16 %v171
      %v236 = vpack.c.b16 %v213, %v212
      %v237 = vpack.c.b16 %v215, %v214
      %v238 = vpack.c.b16 %v217, %v216
      %v239 = vpack.c.b16 %v219, %v218
      %v240 = vpack.c.b16 %v221, %v220
      %v241 = vpack.c.b16 %v223, %v222
      %v242 = vpack.c.b16 %v225, %v224
      %v243 = vpack.c.b16 %v227, %v226
      %v244 = vpack.c.b16 %v229, %v228
      %v245 = vpack.c.b16 %v231, %v230
      %v246 = vpack.c.b16 %v233, %v232
      %v247 = vpack.c.b16 %v235, %v234
      %v276 = vunpack.c.l.b16 %v172
      %v277 = vunpack.c.l.b16 %v173
      %v278 = vunpack.c.l.b16 %v174
      %v279 = vunpack.c.l.b16 %v175
      %v280 = vunpack.c.l.b16 %v176
      %v281 = vunpack.c.l.b16 %v177
      %v282 = vunpack.c.l.b16 %v178
      %v283 = vunpack.c.l.b16 %v179
      %v284 = vunpack.c.l.b16 %v180
      %v285 = vunpack.c.l.b16 %v181
      %v286 = vunpack.c.l.b16 %v182
      %v287 = vunpack.c.l.b16 %v183
      %v288 = vunpack.c.l.b16 %v184
      %v289 = vunpack.c.l.b16 %v185
      %v290 = vunpack.c.l.b16 %v186
      %v291 = vunpack.c.l.b16 %v187
      %v292 = vpack.c.b16 %v277, %v276
      %v293 = vpack.c.b16 %v279, %v278
      %v294 = vpack.c.b16 %v281, %v280
      %v295 = vpack.c.b16 %v283, %v282
      %v296 = vpack.c.b16 %v285, %v284
      %v297 = vpack.c.b16 %v287, %v286
      %v298 = vpack.c.b16 %v289, %v288
      %v299 = vpack.c.b16 %v291, %v290
      %308 = vmatprep.subr.bf16.mxu0 0
      %309 = vmatpush1.bf16.msra.mxu0 %v299
      %310 = vmatprep.subr.bf16.mxu0 0
      %311 = vmatpush1.bf16.msra.mxu0 %v298
      %312 = vmatprep.subr.bf16.mxu0 0
      %313 = vmatpush1.bf16.msra.mxu0 %v297
      %314 = vmatprep.subr.bf16.mxu0 0
      %315 = vmatpush1.bf16.msra.mxu0 %v296
      %316 = vmatprep.subr.bf16.mxu0 0
      %317 = vmatpush1.bf16.msra.mxu0 %v295
      %318 = vmatprep.subr.bf16.mxu0 0
      %319 = vmatpush1.bf16.msra.mxu0 %v294
      %320 = vmatprep.subr.bf16.mxu0 0
      %321 = vmatpush1.bf16.msra.mxu0 %v293
      %322 = vmatprep.subr.bf16.mxu0 0
      %323 = vmatpush1.bf16.msra.mxu0 %v292
      %324 = vmatprep.subr.bf16.mxu0 0
      %325 = vmatpush2.bf16.msra.mxu0 0
      %326 = vmatprep.subr.bf16.mxu0 0
      %327 = vmatpush2.bf16.msra.mxu0 0
      %328 = vmatprep.subr.bf16.mxu0 0
      %329 = vmatpush2.bf16.msra.mxu0 0
      %330 = vmatprep.subr.bf16.mxu0 0
      %331 = vmatpush2.bf16.msra.mxu0 0
      %332 = vmatprep.subr.bf16.mxu0 0
      %333 = vmatpush2.bf16.msra.mxu0 0
      %334 = vmatprep.subr.bf16.mxu0 0
      %335 = vmatpush2.bf16.msra.mxu0 0
      %336 = vmatprep.subr.bf16.mxu0 0
      %337 = vmatpush2.bf16.msra.mxu0 0
      %338 = vmatprep.subr.bf16.mxu0 0
      %339 = vmatpush2.bf16.msra.mxu0 0
      %340 = vmatprep.mubr.bf16.mxu0 0
      %341 = vmatmul.mubr.bf16.gmra.mxu0 %v236
      %v342 = vpop.f32.mrf.mxu0
      %v343 = vadd.f32 0.0, %v342
      %v344 = vpop.f32.mrf.mxu0
      %v345 = vpop.f32.mrf.mxu0
      %v346 = vadd.f32 0.0, %v345
      %v347 = vpop.f32.mrf.mxu0
      %348 = vmatprep.mubr.bf16.mxu0 0
      %349 = vmatmul.mubr.bf16.gmra.mxu0 %v237
      %v350 = vpop.f32.mrf.mxu0
      %v351 = vadd.f32 0.0, %v350
      %v352 = vpop.f32.mrf.mxu0
      %v353 = vpop.f32.mrf.mxu0
      %v354 = vadd.f32 0.0, %v353
      %v355 = vpop.f32.mrf.mxu0
      %356 = vmatprep.mubr.bf16.mxu0 0
      %357 = vmatmul.mubr.bf16.gmra.mxu0 %v238
      %v358 = vpop.f32.mrf.mxu0
      %v359 = vadd.f32 0.0, %v358
      %v360 = vpop.f32.mrf.mxu0
      %v361 = vpop.f32.mrf.mxu0
      %v362 = vadd.f32 0.0, %v361
      %v363 = vpop.f32.mrf.mxu0
      %364 = vmatprep.mubr.bf16.mxu0 0
      %365 = vmatmul.mubr.bf16.gmra.mxu0 %v239
      %v366 = vpop.f32.mrf.mxu0
      %v367 = vadd.f32 0.0, %v366
      %v368 = vpop.f32.mrf.mxu0
      %v369 = vpop.f32.mrf.mxu0
      %v370 = vadd.f32 0.0, %v369
      %v371 = vpop.f32.mrf.mxu0
      %372 = vmatprep.mubr.bf16.mxu0 0
      %373 = vmatmul.mubr.bf16.gmra.mxu0 %v240
      %v374 = vpop.f32.mrf.mxu0
      %v375 = vadd.f32 0.0, %v374
      %v376 = vpop.f32.mrf.mxu0
      %v377 = vpop.f32.mrf.mxu0
      %v378 = vadd.f32 0.0, %v377
      %v379 = vpop.f32.mrf.mxu0
      %380 = vmatprep.mubr.bf16.mxu0 0
      %381 = vmatmul.mubr.bf16.gmra.mxu0 %v241
      %v382 = vpop.f32.mrf.mxu0
      %v383 = vadd.f32 0.0, %v382
      %v384 = vpop.f32.mrf.mxu0
      %v385 = vpop.f32.mrf.mxu0
      %v386 = vadd.f32 0.0, %v385
      %v387 = vpop.f32.mrf.mxu0
      %388 = vmatprep.mubr.bf16.mxu0 0
      %389 = vmatmul.mubr.bf16.gmra.mxu0 %v242
      %v390 = vpop.f32.mrf.mxu0
      %v391 = vadd.f32 0.0, %v390
      %v392 = vpop.f32.mrf.mxu0
      %v393 = vpop.f32.mrf.mxu0
      %v394 = vadd.f32 0.0, %v393
      %v395 = vpop.f32.mrf.mxu0
      %396 = vmatprep.mubr.bf16.mxu0 0
      %397 = vmatmul.mubr.bf16.gmra.mxu0 %v243
      %v398 = vpop.f32.mrf.mxu0
      %v399 = vadd.f32 0.0, %v398
      %v400 = vpop.f32.mrf.mxu0
      %v401 = vpop.f32.mrf.mxu0
      %v402 = vadd.f32 0.0, %v401
      %v403 = vpop.f32.mrf.mxu0
      %404 = vmatprep.mubr.bf16.mxu0 0
      %405 = vmatmul.mubr.bf16.gmra.mxu0 %v244
      %v406 = vpop.f32.mrf.mxu0
      %v407 = vadd.f32 0.0, %v406
      %v408 = vpop.f32.mrf.mxu0
      %v409 = vpop.f32.mrf.mxu0
      %v410 = vadd.f32 0.0, %v409
      %v411 = vpop.f32.mrf.mxu0
      %412 = vmatprep.mubr.bf16.mxu0 0
      %413 = vmatmul.mubr.bf16.gmra.mxu0 %v245
      %v414 = vpop.f32.mrf.mxu0
      %v415 = vadd.f32 0.0, %v414
      %v416 = vpop.f32.mrf.mxu0
      %v417 = vpop.f32.mrf.mxu0
      %v418 = vadd.f32 0.0, %v417
      %v419 = vpop.f32.mrf.mxu0
      %420 = vmatprep.mubr.bf16.mxu0 0
      %421 = vmatmul.mubr.bf16.gmra.mxu0 %v246
      %v422 = vpop.f32.mrf.mxu0
      %v423 = vadd.f32 0.0, %v422
      %v424 = vpop.f32.mrf.mxu0
      %v425 = vpop.f32.mrf.mxu0
      %v426 = vadd.f32 0.0, %v425
      %v427 = vpop.f32.mrf.mxu0
      %428 = vmatprep.mubr.bf16.mxu0 0
      %429 = vmatmul.mubr.bf16.gmra.mxu0 %v247
      %v430 = vpop.f32.mrf.mxu0
      %v431 = vadd.f32 0.0, %v430
      %v432 = vpop.f32.mrf.mxu0
      %v433 = vpop.f32.mrf.mxu0
      %v434 = vadd.f32 0.0, %v433
      %v435 = vpop.f32.mrf.mxu0
      %436 = vdwg.mxu0
      %v437 = vpack.c.bf16 %v346, %v343
      %v438 = vpack.c.bf16 %v354, %v351
      %v439 = vpack.c.bf16 %v362, %v359
      %v440 = vpack.c.bf16 %v370, %v367
      %v441 = vpack.c.bf16 %v378, %v375
      %v442 = vpack.c.bf16 %v386, %v383
      %v443 = vpack.c.bf16 %v394, %v391
      %v444 = vpack.c.bf16 %v402, %v399
      %v445 = vpack.c.bf16 %v410, %v407
      %v446 = vpack.c.bf16 %v418, %v415
      %v447 = vpack.c.bf16 %v426, %v423
      %v448 = vpack.c.bf16 %v434, %v431
      %v461 = vunpack.c.l.b16 %v437
      %v462 = vunpack.c.h.b16 %v437
      %v463 = vunpack.c.l.b16 %v438
      %v464 = vunpack.c.h.b16 %v438
      %v465 = vunpack.c.l.b16 %v439
      %v466 = vunpack.c.h.b16 %v439
      %v467 = vunpack.c.l.b16 %v440
      %v468 = vunpack.c.h.b16 %v440
      %v469 = vunpack.c.l.b16 %v441
      %v470 = vunpack.c.h.b16 %v441
      %v471 = vunpack.c.l.b16 %v442
      %v472 = vunpack.c.h.b16 %v442
      %v473 = vunpack.c.l.b16 %v443
      %v474 = vunpack.c.h.b16 %v443
      %v475 = vunpack.c.l.b16 %v444
      %v476 = vunpack.c.h.b16 %v444
      %v477 = vunpack.c.l.b16 %v445
      %v478 = vunpack.c.h.b16 %v445
      %v479 = vunpack.c.l.b16 %v446
      %v480 = vunpack.c.h.b16 %v446
      %v481 = vunpack.c.l.b16 %v447
      %v482 = vunpack.c.h.b16 %v447
      %v483 = vunpack.c.l.b16 %v448
      %v484 = vunpack.c.h.b16 %v448
      %v485 = vpack.c.b16 %v461, %v461
      %v486 = vpack.c.b16 %v462, %v462
      %v487 = vpack.c.b16 %v463, %v463
      %v488 = vpack.c.b16 %v464, %v464
      %v489 = vpack.c.b16 %v465, %v465
      %v490 = vpack.c.b16 %v466, %v466
      %v491 = vpack.c.b16 %v467, %v467
      %v492 = vpack.c.b16 %v468, %v468
      %v493 = vpack.c.b16 %v469, %v469
      %v494 = vpack.c.b16 %v470, %v470
      %v495 = vpack.c.b16 %v471, %v471
      %v496 = vpack.c.b16 %v472, %v472
      %v497 = vpack.c.b16 %v473, %v473
      %v498 = vpack.c.b16 %v474, %v474
      %v499 = vpack.c.b16 %v475, %v475
      %v500 = vpack.c.b16 %v476, %v476
      %v501 = vpack.c.b16 %v477, %v477
      %v502 = vpack.c.b16 %v478, %v478
      %v503 = vpack.c.b16 %v479, %v479
      %v504 = vpack.c.b16 %v480, %v480
      %v505 = vpack.c.b16 %v481, %v481
      %v506 = vpack.c.b16 %v482, %v482
      %v507 = vpack.c.b16 %v483, %v483
      %v508 = vpack.c.b16 %v484, %v484
      %533 = vst [vmem:[%s145] sm:$0xf] %v485
      %534 = vst [vmem:[%s145 + $0x4] sm:$0xf] %v486
      %535 = vst [vmem:[%s145 + $0x8] sm:$0xf] %v487
      %536 = vst [vmem:[%s145 + $0xc] sm:$0xf] %v488
      %537 = vst [vmem:[%s145 + $0x10] sm:$0xf] %v489
      %538 = vst [vmem:[%s145 + $0x14] sm:$0xf] %v490
      %539 = vst [vmem:[%s145 + $0x18] sm:$0xf] %v491
      %540 = vst [vmem:[%s145 + $0x1c] sm:$0xf] %v492
      %541 = vst [vmem:[%s145 + $0x20] sm:$0xf] %v493
      %542 = vst [vmem:[%s145 + $0x24] sm:$0xf] %v494
      %543 = vst [vmem:[%s145 + $0x28] sm:$0xf] %v495
      %544 = vst [vmem:[%s145 + $0x2c] sm:$0xf] %v496
      %545 = vst [vmem:[%s145 + $0x30] sm:$0xf] %v497
      %546 = vst [vmem:[%s145 + $0x34] sm:$0xf] %v498
      %547 = vst [vmem:[%s145 + $0x38] sm:$0xf] %v499
      %548 = vst [vmem:[%s145 + $0x3c] sm:$0xf] %v500
      %549 = vst [vmem:[%s145 + $0x40] sm:$0xf] %v501
      %550 = vst [vmem:[%s145 + $0x44] sm:$0xf] %v502
      %551 = vst [vmem:[%s145 + $0x48] sm:$0xf] %v503
      %552 = vst [vmem:[%s145 + $0x4c] sm:$0xf] %v504
      %553 = vst [vmem:[%s145 + $0x50] sm:$0xf] %v505
      %554 = vst [vmem:[%s145 + $0x54] sm:$0xf] %v506
      %555 = vst [vmem:[%s145 + $0x58] sm:$0xf] %v507
      %556 = vst [vmem:[%s145 + $0x5c] sm:$0xf] %v508
      %s557 = smul.u32 24, %s13
      %p558 = scmp.lt.s32.totalorder %s557, 47
      %s559 = scalar_select %p558, %s557, 47
      %s560 = smul.addr %s559, 4
      %s561 = scalar_lea.vmem %s2, %s560
      // Predicated region
      $region29: #{graph_sequential_forward.8} parent=27 // pred_check
        %p562 = pneg %p78
      $region30: #{graph_sequential_forward.8} parent=27 // pred_check_branch
        %564 = sbr.rel (%p562) target = $region32
      $region31: #{graph_sequential_forward.8} parent=27 // pred_region
        %s565 = smul.u32 24, %s13
      $region32: #{graph_sequential_forward.8} parent=27 // pred_fallthru
        _
    $region28: #{graph_sequential_forward.8} parent=5 // pred_fallthru
      _
    %p566 = scmp.le.s32.totalorder 2, %s8
    // Predicated region
    $region33: #{graph_sequential_forward.8} parent=5 // pred_check
      %p567 = pneg %p566
    $region34: #{graph_sequential_forward.8} parent=5 // pred_check_branch
      %569 = sbr.rel (%p567) target = $region36
    $region35: #{graph_sequential_forward.8} parent=5 // pred_region
      %s570 = ssub.s32 %s8, 2
      // Predicated region
      $region37: #{graph_sequential_forward.8} parent=35 // pred_check
        %p571 = pneg %p84
      $region38: #{graph_sequential_forward.8} parent=35 // pred_check_branch
        %573 = sbr.rel (%p571) target = $region40
      $region39: #{graph_sequential_forward.8} parent=35 // pred_region
        %s574 = smul.u32 24, %s14
        %p575 = scmp.lt.s32.totalorder %s574, 47
        %s576 = scalar_select %p575, %s574, 47
        %s577 = smul.addr %s576, 4
        %s578 = scalar_lea.vmem %s2, %s577
      $region40: #{graph_sequential_forward.8} parent=35 // pred_fallthru
        _
    $region36: #{graph_sequential_forward.8} parent=5 // pred_fallthru
      _
  $region6: #{graph_sequential_forward.8} parent=0 // loop_footer
    %s12 = sadd.s32 1, %s8
  $region7: #{graph_sequential_forward.8} parent=0 // loop_footer_branch
    %7 = sbr.rel target = $region3
  $region8: #{graph_sequential_forward.8} parent=0 // loop_exit
    _

// kernel: graph_sequential_forward.7
$region0: #{graph_sequential_forward.7}
  #allocation0 [shape = 'u32[]', space=smem, size = 0x4, offset = 0x4, fixed_abs, tag = 'smem constant byte address 0x4 - core index']
  #allocation1 [shape = 'u32[144,128]{1,0:T(1,128)}', space=vmem, size = 0x12000, scoped, tag = 'internal scratch']
  #allocation2 [shape = 'f32[192,128]{1,0:T(8,128)}', space=vmem, size = 0x18000, scoped, tag = 'scratch operand']
  %s0 = inlined_call_operand.hbm [shape: bf16[384,384], index: 0, kind: input, shape index: {}]
  %s1 = inlined_call_operand.vmem [shape: bf16[384,128], index: 1, kind: input, shape index: {}]
  %s2 = inlined_call_operand.vmem [shape: f32[1,128], index: 2, kind: input, shape index: {}]
  %s3 = inlined_call_operand.vmem [shape: bf16[384,128], index: 3, kind: output, shape index: {}]
  %s4 = sld [smem:[#allocation0]]
  $region57: #{graph_sequential_forward.7} parent=0
    _
  %s6 = ssub.s32 1, %s4
  %s7 = scalar_select 0, %s6, %s4
  $region1: #{graph_sequential_forward.7} parent=0
    #allocation3 [shape = 'u8[294912]{0}', space=vmem, size = 0x48000, scoped, tag = 'input window, operand 0']
    #allocation4 [shape = 's32[2]{0}', space=sflag, size = 0x8, scoped, tag = 'scoped memory for graph_sequential_forward.7']
    %8 = vsyncpa [#allocation4], 0
    %s9 = scalar_lea.sflag [#allocation4], 1
    %10 = vsyncpa %s9, 0
    loop: start=0, step=1, limit=4
    $region2: #{graph_sequential_forward.7} parent=1 // loop_pre_header
      _
    $region3: #{graph_sequential_forward.7} parent=1 // loop_header
      %s12 = sphi 0, %s16
      %p13 = scmp.ge.s32.totalorder %s12, 4
      %s19 = sphi 0, %s38
      %s20 = sphi 0, %s34
      %s21 = sphi 0, %s30
      %s22 = sphi 0, %s19
      %s23 = sphi 0, %s20
      %s24 = sphi 0, %s21
      %s25 = sphi 0, %s22
      %s26 = sphi 0, %s23
      %s27 = sphi 0, %s24
      %s43 = sphi 0, %s45
      %s46 = sphi 0, %s43
      %s47 = sphi 0, %s46
      %s63 = sphi 0, %s47
      %s69 = sphi 0, %s71
      %s72 = sphi 0, %s69
      %s73 = sphi 0, %s72
      %s89 = sphi 0, %s73
      %s95 = sphi 0, %s97
      %s98 = sphi 0, %s95
      %s99 = sphi 0, %s98
      %s115 = sphi 0, %s99
      %s123 = sphi 0, %s125
      %s126 = sphi 0, %s123
      %s127 = sphi 0, %s126
      %s143 = sphi 0, %s127
    $region4: #{graph_sequential_forward.7} parent=1 // loop_header_branch
      %15 = sbr.rel (%p13) target = $region8
    $region5: #{graph_sequential_forward.7} parent=1 // loop_body
      %s17 = ssub.s32 %s12, 1
      %s18 = ssub.s32 %s12, 2
      %s28 = sadd.s32 1, %s21
      %p29 = scmp.ge.s32.totalorder %s28, 1
      %s30 = scalar_select %p29, 0, %s28
      %s31 = sadd.s32 1, %s20
      %s32 = scalar_select %p29, %s31, %s20
      %p33 = scmp.ge.s32.totalorder %s32, 1
      %s34 = scalar_select %p33, 0, %s32
      %s35 = sadd.s32 1, %s19
      %s36 = scalar_select %p33, %s35, %s19
      %p37 = scmp.ge.s32.totalorder %s36, 2
      %s38 = scalar_select %p37, 0, %s36
      %s39 = ssub.s32 %s19, %s38
      %s40 = ssub.s32 %s21, %s30
      %s41 = sor.u32 %s39, %s40
      %p42 = scmp.eq.s32.totalorder %s41, 0
      %s44 = sadd.s32 %s43, 1
      %s45 = scalar_select %p42, %s43, %s44
      %p48 = pneg %p42
      %p49 = scmp.eq.s32.totalorder %s12, 1
      %p50 = por %p48, %p49
      %p51 = scmp.ne.s32.totalorder %s43, %s46
      %p52 = scmp.eq.s32.totalorder %s12, 0
      %p53 = por %p51, %p52
      %p54 = scmp.ne.s32.totalorder %s43, %s46
      %p55 = scmp.eq.s32.totalorder %s17, 1
      %p56 = por %p54, %p55
      %p57 = scmp.ne.s32.totalorder %s46, %s47
      %p58 = scmp.eq.s32.totalorder %s17, 0
      %p59 = por %p57, %p58
      %p60 = scmp.ne.s32.totalorder %s46, %s47
      %p61 = scmp.eq.s32.totalorder %s18, 1
      %p62 = por %p60, %p61
      %p64 = scmp.ne.s32.totalorder %s47, %s63
      %p65 = scmp.eq.s32.totalorder %s18, 0
      %p66 = por %p64, %p65
      %s67 = ssub.s32 %s20, %s34
      %p68 = scmp.eq.s32.totalorder %s67, 0
      %s70 = sadd.s32 %s69, 1
      %s71 = scalar_select %p68, %s69, %s70
      %p74 = pneg %p68
      %p75 = scmp.eq.s32.totalorder %s12, 1
      %p76 = por %p74, %p75
      %p77 = scmp.ne.s32.totalorder %s69, %s72
      %p78 = scmp.eq.s32.totalorder %s12, 0
      %p79 = por %p77, %p78
      %p80 = scmp.ne.s32.totalorder %s69, %s72
      %p81 = scmp.eq.s32.totalorder %s17, 1
      %p82 = por %p80, %p81
      %p83 = scmp.ne.s32.totalorder %s72, %s73
      %p84 = scmp.eq.s32.totalorder %s17, 0
      %p85 = por %p83, %p84
      %p86 = scmp.ne.s32.totalorder %s72, %s73
      %p87 = scmp.eq.s32.totalorder %s18, 1
      %p88 = por %p86, %p87
      %p90 = scmp.ne.s32.totalorder %s73, %s89
      %p91 = scmp.eq.s32.totalorder %s18, 0
      %p92 = por %p90, %p91
      %s93 = ssub.s32 %s20, %s34
      %p94 = scmp.eq.s32.totalorder %s93, 0
      %s96 = sadd.s32 %s95, 1
      %s97 = scalar_select %p94, %s95, %s96
      %p100 = pneg %p94
      %p101 = scmp.eq.s32.totalorder %s12, 1
      %p102 = por %p100, %p101
      %p103 = scmp.ne.s32.totalorder %s95, %s98
      %p104 = scmp.eq.s32.totalorder %s12, 0
      %p105 = por %p103, %p104
      %p106 = scmp.ne.s32.totalorder %s95, %s98
      %p107 = scmp.eq.s32.totalorder %s17, 1
      %p108 = por %p106, %p107
      %p109 = scmp.ne.s32.totalorder %s98, %s99
      %p110 = scmp.eq.s32.totalorder %s17, 0
      %p111 = por %p109, %p110
      %p112 = scmp.ne.s32.totalorder %s98, %s99
      %p113 = scmp.eq.s32.totalorder %s18, 1
      %p114 = por %p112, %p113
      %p116 = scmp.ne.s32.totalorder %s99, %s115
      %p117 = scmp.eq.s32.totalorder %s18, 0
      %p118 = por %p116, %p117
      %s119 = ssub.s32 %s19, %s38
      %s120 = ssub.s32 %s20, %s34
      %s121 = sor.u32 %s119, %s120
      %p122 = scmp.eq.s32.totalorder %s121, 0
      %s124 = sadd.s32 %s123, 1
      %s125 = scalar_select %p122, %s123, %s124
      %p128 = pneg %p122
      %p129 = scmp.eq.s32.totalorder %s12, 1
      %p130 = por %p128, %p129
      %p131 = scmp.ne.s32.totalorder %s123, %s126
      %p132 = scmp.eq.s32.totalorder %s12, 0
      %p133 = por %p131, %p132
      %p134 = scmp.ne.s32.totalorder %s123, %s126
      %p135 = scmp.eq.s32.totalorder %s17, 1
      %p136 = por %p134, %p135
      %p137 = scmp.ne.s32.totalorder %s126, %s127
      %p138 = scmp.eq.s32.totalorder %s17, 0
      %p139 = por %p137, %p138
      %p140 = scmp.ne.s32.totalorder %s126, %s127
      %p141 = scmp.eq.s32.totalorder %s18, 1
      %p142 = por %p140, %p141
      %p144 = scmp.ne.s32.totalorder %s127, %s143
      %p145 = scmp.eq.s32.totalorder %s18, 0
      %p146 = por %p144, %p145
      %p147 = scmp.le.s32.totalorder 1, %s12
      %p148 = scmp.lt.s32.totalorder %s12, 3
      %p149 = pnand %p147, %p148
      %p150 = pneg %p149
      // Predicated region
      $region9: #{graph_sequential_forward.7} parent=5 // pred_check
        _
      $region10: #{graph_sequential_forward.7} parent=5 // pred_check_branch
        %152 = sbr.rel (%p149) target = $region12
      $region11: #{graph_sequential_forward.7} parent=5 // pred_region
        %s153 = ssub.s32 %s12, 1
        // Predicated region
        $region13: #{graph_sequential_forward.7} parent=11 // pred_check
          %p154 = pneg %p85
        $region14: #{graph_sequential_forward.7} parent=11 // pred_check_branch
          %156 = sbr.rel (%p154) target = $region16
        $region15: #{graph_sequential_forward.7} parent=11 // pred_region
          %p157 = scmp.lt.s32.totalorder %s23, 0
          %s158 = scalar_select %p157, %s23, 0
          %s159 = smul.addr %s158, 4
          %s160 = scalar_lea.vmem %s1, %s159
        $region16: #{graph_sequential_forward.7} parent=11 // pred_fallthru
          _
        // Predicated region
        $region17: #{graph_sequential_forward.7} parent=11 // pred_check
          %p161 = pneg %p111
        $region18: #{graph_sequential_forward.7} parent=11 // pred_check_branch
          %163 = sbr.rel (%p161) target = $region20
        $region19: #{graph_sequential_forward.7} parent=11 // pred_region
          %p164 = scmp.lt.s32.totalorder %s23, 0
          %s165 = scalar_select %p164, %s23, 0
          %s166 = scalar_lea.vmem %s2, %s165
        $region20: #{graph_sequential_forward.7} parent=11 // pred_fallthru
          _
      $region12: #{graph_sequential_forward.7} parent=5 // pred_fallthru
        _
      %p167 = scmp.lt.s32.totalorder %s12, 2
      // Predicated region
      $region21: #{graph_sequential_forward.7} parent=5 // pred_check
        %p168 = pneg %p167
      $region22: #{graph_sequential_forward.7} parent=5 // pred_check_branch
        %170 = sbr.rel (%p168) target = $region24
      $region23: #{graph_sequential_forward.7} parent=5 // pred_region
        // Predicated region
        $region25: #{graph_sequential_forward.7} parent=23 // pred_check
          %p171 = pneg %p53
        $region26: #{graph_sequential_forward.7} parent=23 // pred_check_branch
          %173 = sbr.rel (%p171) target = $region28
        $region27: #{graph_sequential_forward.7} parent=23 // pred_region
          %s174 = sand.u32 %s43, 1
          %s175 = scalar_lea.sflag [#allocation4], %s174
          %s176 = sand.u32 %s43, 1
          %s177 = smul.addr %s176, 288
          %s178 = scalar_lea.vmem [#allocation3], %s177
          %s179 = smul.u32 24, %s19
          %s180 = smul.u32 3, %s21
          %s182 = ssub.s32 4608, 4608
          %183 = vsyncadd %s175, %s182
          %s184 = smul.addr %s179, 3
          %s185 = sadd.s32 %s180, %s184
          %s186 = smul.addr %s185, 64
          %s187 = scalar_lea.hbm %s0, %s186
          %s188 = sshll.u32 %s178, 4
          %s189 = int_to_ptr.vmem [resolvable:$true] %s188
          %194 = dma.hbm_to_vmem [thread:$0]  %s187, 4608, %s189, %s175, 192, 192, 12
        $region28: #{graph_sequential_forward.7} parent=23 // pred_fallthru
          _
      $region24: #{graph_sequential_forward.7} parent=5 // pred_fallthru
        _
      %p195 = scmp.le.s32.totalorder 1, %s12
      %p196 = scmp.lt.s32.totalorder %s12, 3
      %p197 = pnand %p195, %p196
      %p198 = pneg %p197
      // Predicated region
      $region29: #{graph_sequential_forward.7} parent=5 // pred_check
        _
      $region30: #{graph_sequential_forward.7} parent=5 // pred_check_branch
        %200 = sbr.rel (%p197) target = $region32
      $region31: #{graph_sequential_forward.7} parent=5 // pred_region
        %s201 = ssub.s32 %s12, 1
        %s202 = sand.u32 %s46, 1
        %s203 = scalar_lea.sflag [#allocation4], %s202
        %s204 = sand.u32 %s46, 1
        %s205 = smul.addr %s204, 288
        %s206 = scalar_lea.vmem [#allocation3], %s205
        // Predicated region
        $region33: #{graph_sequential_forward.7} parent=31 // pred_check
          %p207 = pneg %p59
        $region34: #{graph_sequential_forward.7} parent=31 // pred_check_branch
          %209 = sbr.rel (%p207) target = $region36
        $region35: #{graph_sequential_forward.7} parent=31 // pred_region
          %210 = dma.done %s203, 4608
        $region36: #{graph_sequential_forward.7} parent=31 // pred_fallthru
          _
        %s211 = sand.u32 %s46, 1
        %s212 = scalar_lea.sflag [#allocation4], %s211
        %s213 = sand.u32 %s46, 1
        %s214 = smul.addr %s213, 288
        %s215 = scalar_lea.vmem [#allocation3], %s214
        %p216 = pneg %p59
        %p217 = pneg %p56
        %p218 = scmp.lt.s32.totalorder %s23, 0
        %s219 = scalar_select %p218, %s23, 0
        %s220 = smul.addr %s219, 4
        %s221 = scalar_lea.vmem %s1, %s220
        %p222 = pneg %p85
        %p223 = pneg %p82
        %p224 = scmp.lt.s32.totalorder %s23, 0
        %s225 = scalar_select %p224, %s23, 0
        %s226 = scalar_lea.vmem %s2, %s225
        %p227 = pneg %p111
        %p228 = pneg %p108
        %p229 = pneg %p139
        %p230 = pneg %p136
        %s231 = smul.u32 24, %s22
        %p232 = scmp.lt.s32.totalorder %s231, 47
        %s233 = scalar_select %p232, %s231, 47
        %p234 = scmp.lt.s32.totalorder %s23, 0
        %s235 = scalar_select %p234, %s23, 0
        %s236 = sadd.s32 %s235, %s233
        %s237 = smul.addr %s236, 4
        %s238 = scalar_lea.vmem %s3, %s237
        %s239 = smul.u32 24, %s22
        %s240 = smul.u32 3, %s24
        %p241 = scmp.lt.s32.totalorder %s23, 0
        %s242 = scalar_select %p241, %s23, 0
        %s243 = smul.addr %s242, 4
        %s244 = scalar_lea.vmem %s1, %s243
        %p245 = scmp.lt.s32.totalorder %s23, 0
        %s246 = scalar_select %p245, %s23, 0
        %s247 = scalar_lea.vmem %s2, %s246
        %s248 = smul.u32 24, %s22
        %p249 = scmp.lt.s32.totalorder %s248, 47
        %s250 = scalar_select %p249, %s248, 47
        %p251 = scmp.lt.s32.totalorder %s23, 0
        %s252 = scalar_select %p251, %s23, 0
        %s253 = sadd.s32 %s252, %s250
        %s254 = smul.addr %s253, 4
        %s255 = scalar_lea.vmem %s3, %s254
        %s256 = smul.u32 24, %s22
        %p258 = scmp.eq.s32.totalorder %s24, 0
        // Predicated region
        $region37: #{graph_sequential_forward.7} parent=31 // pred_check
          %p259 = pneg %p258
        $region38: #{graph_sequential_forward.7} parent=31 // pred_check_branch
          %261 = sbr.rel (%p259) target = $region40
        $region39: #{graph_sequential_forward.7} parent=31 // pred_region
          %262 = vst [vmem:[#allocation2] sm:$0xff] 0.0
          %263 = vst [vmem:[#allocation2 + $0x8] sm:$0xff] 0.0
          %264 = vst [vmem:[#allocation2 + $0x10] sm:$0xff] 0.0
          %265 = vst [vmem:[#allocation2 + $0x18] sm:$0xff] 0.0
          %266 = vst [vmem:[#allocation2 + $0x20] sm:$0xff] 0.0
          %267 = vst [vmem:[#allocation2 + $0x28] sm:$0xff] 0.0
          %268 = vst [vmem:[#allocation2 + $0x30] sm:$0xff] 0.0
          %269 = vst [vmem:[#allocation2 + $0x38] sm:$0xff] 0.0
          %270 = vst [vmem:[#allocation2 + $0x40] sm:$0xff] 0.0
          %271 = vst [vmem:[#allocation2 + $0x48] sm:$0xff] 0.0
          %272 = vst [vmem:[#allocation2 + $0x50] sm:$0xff] 0.0
          %273 = vst [vmem:[#allocation2 + $0x58] sm:$0xff] 0.0
          %274 = vst [vmem:[#allocation2 + $0x60] sm:$0xff] 0.0
          %275 = vst [vmem:[#allocation2 + $0x68] sm:$0xff] 0.0
          %276 = vst [vmem:[#allocation2 + $0x70] sm:$0xff] 0.0
          %277 = vst [vmem:[#allocation2 + $0x78] sm:$0xff] 0.0
          %278 = vst [vmem:[#allocation2 + $0x80] sm:$0xff] 0.0
          %279 = vst [vmem:[#allocation2 + $0x88] sm:$0xff] 0.0
          %280 = vst [vmem:[#allocation2 + $0x90] sm:$0xff] 0.0
          %281 = vst [vmem:[#allocation2 + $0x98] sm:$0xff] 0.0
          %282 = vst [vmem:[#allocation2 + $0xa0] sm:$0xff] 0.0
          %283 = vst [vmem:[#allocation2 + $0xa8] sm:$0xff] 0.0
          %284 = vst [vmem:[#allocation2 + $0xb0] sm:$0xff] 0.0
          %285 = vst [vmem:[#allocation2 + $0xb8] sm:$0xff] 0.0
        $region40: #{graph_sequential_forward.7} parent=31 // pred_fallthru
          _
        %s286 = smul.u32 %s24, 384
        %s287 = sshra.s32 %s286, 3
        %s288 = sand.u32 %s286, 7
        %s289 = smul.addr %s287, 4
        %s290 = scalar_lea.vmem %s244, %s289
        %v291 = vld [vmem:[%s290] sm:$0xf]
        %v292 = vld [vmem:[%s290 + $0x4] sm:$0xf]
        %v293 = vld [vmem:[%s290 + $0x8] sm:$0xf]
        %v294 = vld [vmem:[%s290 + $0xc] sm:$0xf]
        %v295 = vld [vmem:[%s290 + $0x10] sm:$0xf]
        %v296 = vld [vmem:[%s290 + $0x14] sm:$0xf]
        %v297 = vld [vmem:[%s290 + $0x18] sm:$0xf]
        %v298 = vld [vmem:[%s290 + $0x1c] sm:$0xf]
        %v299 = vld [vmem:[%s290 + $0x20] sm:$0xf]
        %v300 = vld [vmem:[%s290 + $0x24] sm:$0xf]
        %v301 = vld [vmem:[%s290 + $0x28] sm:$0xf]
        %v302 = vld [vmem:[%s290 + $0x2c] sm:$0xf]
        %v303 = vld [vmem:[%s290 + $0x30] sm:$0xf]
        %v304 = vld [vmem:[%s290 + $0x34] sm:$0xf]
        %v305 = vld [vmem:[%s290 + $0x38] sm:$0xf]
        %v306 = vld [vmem:[%s290 + $0x3c] sm:$0xf]
        %v307 = vld [vmem:[%s290 + $0x40] sm:$0xf]
        %v308 = vld [vmem:[%s290 + $0x44] sm:$0xf]
        %v309 = vld [vmem:[%s290 + $0x48] sm:$0xf]
        %v310 = vld [vmem:[%s290 + $0x4c] sm:$0xf]
        %v311 = vld [vmem:[%s290 + $0x50] sm:$0xf]
        %v312 = vld [vmem:[%s290 + $0x54] sm:$0xf]
        %v313 = vld [vmem:[%s290 + $0x58] sm:$0xf]
        %v314 = vld [vmem:[%s290 + $0x5c] sm:$0xf]
        %v315 = vld [vmem:[%s290 + $0x60] sm:$0xf]
        %v316 = vld [vmem:[%s290 + $0x64] sm:$0xf]
        %v317 = vld [vmem:[%s290 + $0x68] sm:$0xf]
        %v318 = vld [vmem:[%s290 + $0x6c] sm:$0xf]
        %v319 = vld [vmem:[%s290 + $0x70] sm:$0xf]
        %v320 = vld [vmem:[%s290 + $0x74] sm:$0xf]
        %v321 = vld [vmem:[%s290 + $0x78] sm:$0xf]
        %v322 = vld [vmem:[%s290 + $0x7c] sm:$0xf]
        %v323 = vld [vmem:[%s290 + $0x80] sm:$0xf]
        %v324 = vld [vmem:[%s290 + $0x84] sm:$0xf]
        %v325 = vld [vmem:[%s290 + $0x88] sm:$0xf]
        %v326 = vld [vmem:[%s290 + $0x8c] sm:$0xf]
        %v327 = vld [vmem:[%s290 + $0x90] sm:$0xf]
        %v328 = vld [vmem:[%s290 + $0x94] sm:$0xf]
        %v329 = vld [vmem:[%s290 + $0x98] sm:$0xf]
        %v330 = vld [vmem:[%s290 + $0x9c] sm:$0xf]
        %v331 = vld [vmem:[%s290 + $0xa0] sm:$0xf]
        %v332 = vld [vmem:[%s290 + $0xa4] sm:$0xf]
        %v333 = vld [vmem:[%s290 + $0xa8] sm:$0xf]
        %v334 = vld [vmem:[%s290 + $0xac] sm:$0xf]
        %v335 = vld [vmem:[%s290 + $0xb0] sm:$0xf]
        %v336 = vld [vmem:[%s290 + $0xb4] sm:$0xf]
        %v337 = vld [vmem:[%s290 + $0xb8] sm:$0xf]
        %v338 = vld [vmem:[%s290 + $0xbc] sm:$0xf]
        %v339 = vld [vmem:[#allocation2] sm:$0xff]
        %v340 = vld [vmem:[#allocation2 + $0x8] sm:$0xff]
        %v341 = vld [vmem:[#allocation2 + $0x10] sm:$0xff]
        %v342 = vld [vmem:[#allocation2 + $0x18] sm:$0xff]
        %v343 = vld [vmem:[#allocation2 + $0x20] sm:$0xff]
        %v344 = vld [vmem:[#allocation2 + $0x28] sm:$0xff]
        %v345 = vld [vmem:[#allocation2 + $0x30] sm:$0xff]
        %v346 = vld [vmem:[#allocation2 + $0x38] sm:$0xff]
        %v347 = vld [vmem:[#allocation2 + $0x40] sm:$0xff]
        %v348 = vld [vmem:[#allocation2 + $0x48] sm:$0xff]
        %v349 = vld [vmem:[#allocation2 + $0x50] sm:$0xff]
        %v350 = vld [vmem:[#allocation2 + $0x58] sm:$0xff]
        %v351 = vld [vmem:[#allocation2 + $0x60] sm:$0xff]
        %v352 = vld [vmem:[#allocation2 + $0x68] sm:$0xff]
        %v353 = vld [vmem:[#allocation2 + $0x70] sm:$0xff]
        %v354 = vld [vmem:[#allocation2 + $0x78] sm:$0xff]
        %v355 = vld [vmem:[#allocation2 + $0x80] sm:$0xff]
        %v356 = vld [vmem:[#allocation2 + $0x88] sm:$0xff]
        %v357 = vld [vmem:[#allocation2 + $0x90] sm:$0xff]
        %v358 = vld [vmem:[#allocation2 + $0x98] sm:$0xff]
        %v359 = vld [vmem:[#allocation2 + $0xa0] sm:$0xff]
        %v360 = vld [vmem:[#allocation2 + $0xa8] sm:$0xff]
        %v361 = vld [vmem:[#allocation2 + $0xb0] sm:$0xff]
        %v362 = vld [vmem:[#allocation2 + $0xb8] sm:$0xff]
        %v363 = vld [vmem:[%s206] sm:$0xff]
        %v364 = vld [vmem:[%s206 + $0x8] sm:$0xf]
        %v365 = vld [vmem:[%s206 + $0xc] sm:$0xff]
        %v366 = vld [vmem:[%s206 + $0x14] sm:$0xf]
        %v367 = vld [vmem:[%s206 + $0x18] sm:$0xff]
        %v368 = vld [vmem:[%s206 + $0x20] sm:$0xf]
        %v369 = vld [vmem:[%s206 + $0x24] sm:$0xff]
        %v370 = vld [vmem:[%s206 + $0x2c] sm:$0xf]
        %v371 = vld [vmem:[%s206 + $0x30] sm:$0xff]
        %v372 = vld [vmem:[%s206 + $0x38] sm:$0xf]
        %v373 = vld [vmem:[%s206 + $0x3c] sm:$0xff]
        %v374 = vld [vmem:[%s206 + $0x44] sm:$0xf]
        %v375 = vld [vmem:[%s206 + $0x48] sm:$0xff]
        %v376 = vld [vmem:[%s206 + $0x50] sm:$0xf]
        %v377 = vld [vmem:[%s206 + $0x54] sm:$0xff]
        %v378 = vld [vmem:[%s206 + $0x5c] sm:$0xf]
        %v379 = vld [vmem:[%s206 + $0x60] sm:$0xff]
        %v380 = vld [vmem:[%s206 + $0x68] sm:$0xf]
        %v381 = vld [vmem:[%s206 + $0x6c] sm:$0xff]
        %v382 = vld [vmem:[%s206 + $0x74] sm:$0xf]
        %v383 = vld [vmem:[%s206 + $0x78] sm:$0xff]
        %v384 = vld [vmem:[%s206 + $0x80] sm:$0xf]
        %v385 = vld [vmem:[%s206 + $0x84] sm:$0xff]
        %v386 = vld [vmem:[%s206 + $0x8c] sm:$0xf]
        %v387 = vld [vmem:[%s206 + $0x90] sm:$0xff]
        %v388 = vld [vmem:[%s206 + $0x98] sm:$0xf]
        %v389 = vld [vmem:[%s206 + $0x9c] sm:$0xff]
        %v390 = vld [vmem:[%s206 + $0xa4] sm:$0xf]
        %v391 = vld [vmem:[%s206 + $0xa8] sm:$0xff]
        %v392 = vld [vmem:[%s206 + $0xb0] sm:$0xf]
        %v393 = vld [vmem:[%s206 + $0xb4] sm:$0xff]
        %v394 = vld [vmem:[%s206 + $0xbc] sm:$0xf]
        %v395 = vld [vmem:[%s206 + $0xc0] sm:$0xff]
        %v396 = vld [vmem:[%s206 + $0xc8] sm:$0xf]
        %v397 = vld [vmem:[%s206 + $0xcc] sm:$0xff]
        %v398 = vld [vmem:[%s206 + $0xd4] sm:$0xf]
        %v399 = vld [vmem:[%s206 + $0xd8] sm:$0xff]
        %v400 = vld [vmem:[%s206 + $0xe0] sm:$0xf]
        %v401 = vld [vmem:[%s206 + $0xe4] sm:$0xff]
        %v402 = vld [vmem:[%s206 + $0xec] sm:$0xf]
        %v403 = vld [vmem:[%s206 + $0xf0] sm:$0xff]
        %v404 = vld [vmem:[%s206 + $0xf8] sm:$0xf]
        %v405 = vld [vmem:[%s206 + $0xfc] sm:$0xff]
        %v406 = vld [vmem:[%s206 + $0x104] sm:$0xf]
        %v407 = vld [vmem:[%s206 + $0x108] sm:$0xff]
        %v408 = vld [vmem:[%s206 + $0x110] sm:$0xf]
        %v409 = vld [vmem:[%s206 + $0x114] sm:$0xff]
        %v410 = vld [vmem:[%s206 + $0x11c] sm:$0xf]
        %v459 = vunpack.c.l.b16 %v363
        %v460 = vunpack.c.h.b16 %v363
        %v461 = vunpack.c.l.b16 %v364
        %v462 = vunpack.c.l.b16 %v365
        %v463 = vunpack.c.h.b16 %v365
        %v464 = vunpack.c.l.b16 %v366
        %v465 = vunpack.c.l.b16 %v367
        %v466 = vunpack.c.h.b16 %v367
        %v467 = vunpack.c.l.b16 %v368
        %v468 = vunpack.c.l.b16 %v369
        %v469 = vunpack.c.h.b16 %v369
        %v470 = vunpack.c.l.b16 %v370
        %v471 = vunpack.c.l.b16 %v371
        %v472 = vunpack.c.h.b16 %v371
        %v473 = vunpack.c.l.b16 %v372
        %v474 = vunpack.c.l.b16 %v373
        %v475 = vunpack.c.h.b16 %v373
        %v476 = vunpack.c.l.b16 %v374
        %v477 = vunpack.c.l.b16 %v375
        %v478 = vunpack.c.h.b16 %v375
        %v479 = vunpack.c.l.b16 %v376
        %v480 = vunpack.c.l.b16 %v377
        %v481 = vunpack.c.h.b16 %v377
        %v482 = vunpack.c.l.b16 %v378
        %v483 = vunpack.c.l.b16 %v379
        %v484 = vunpack.c.h.b16 %v379
        %v485 = vunpack.c.l.b16 %v380
        %v486 = vunpack.c.l.b16 %v381
        %v487 = vunpack.c.h.b16 %v381
        %v488 = vunpack.c.l.b16 %v382
        %v489 = vunpack.c.l.b16 %v383
        %v490 = vunpack.c.h.b16 %v383
        %v491 = vunpack.c.l.b16 %v384
        %v492 = vunpack.c.l.b16 %v385
        %v493 = vunpack.c.h.b16 %v385
        %v494 = vunpack.c.l.b16 %v386
        %v495 = vunpack.c.l.b16 %v387
        %v496 = vunpack.c.h.b16 %v387
        %v497 = vunpack.c.l.b16 %v388
        %v498 = vunpack.c.l.b16 %v389
        %v499 = vunpack.c.h.b16 %v389
        %v500 = vunpack.c.l.b16 %v390
        %v501 = vunpack.c.l.b16 %v391
        %v502 = vunpack.c.h.b16 %v391
        %v503 = vunpack.c.l.b16 %v392
        %v504 = vunpack.c.l.b16 %v393
        %v505 = vunpack.c.h.b16 %v393
        %v506 = vunpack.c.l.b16 %v394
        %v507 = vunpack.c.l.b16 %v395
        %v508 = vunpack.c.h.b16 %v395
        %v509 = vunpack.c.l.b16 %v396
        %v510 = vunpack.c.l.b16 %v397
        %v511 = vunpack.c.h.b16 %v397
        %v512 = vunpack.c.l.b16 %v398
        %v513 = vunpack.c.l.b16 %v399
        %v514 = vunpack.c.h.b16 %v399
        %v515 = vunpack.c.l.b16 %v400
        %v516 = vunpack.c.l.b16 %v401
        %v517 = vunpack.c.h.b16 %v401
        %v518 = vunpack.c.l.b16 %v402
        %v519 = vunpack.c.l.b16 %v403
        %v520 = vunpack.c.h.b16 %v403
        %v521 = vunpack.c.l.b16 %v404
        %v522 = vunpack.c.l.b16 %v405
        %v523 = vunpack.c.h.b16 %v405
        %v524 = vunpack.c.l.b16 %v406
        %v525 = vunpack.c.l.b16 %v407
        %v526 = vunpack.c.h.b16 %v407
        %v527 = vunpack.c.l.b16 %v408
        %v528 = vunpack.c.l.b16 %v409
        %v529 = vunpack.c.h.b16 %v409
        %v530 = vunpack.c.l.b16 %v410
        %v531 = vpack.c.b16 %v462, %v459
        %v532 = vpack.c.b16 %v463, %v460
        %v533 = vpack.c.b16 %v464, %v461
        %v534 = vpack.c.b16 %v468, %v465
        %v535 = vpack.c.b16 %v469, %v466
        %v536 = vpack.c.b16 %v470, %v467
        %v537 = vpack.c.b16 %v474, %v471
        %v538 = vpack.c.b16 %v475, %v472
        %v539 = vpack.c.b16 %v476, %v473
        %v540 = vpack.c.b16 %v480, %v477
        %v541 = vpack.c.b16 %v481, %v478
        %v542 = vpack.c.b16 %v482, %v479
        %v543 = vpack.c.b16 %v486, %v483
        %v544 = vpack.c.b16 %v487, %v484
        %v545 = vpack.c.b16 %v488, %v485
        %v546 = vpack.c.b16 %v492, %v489
        %v547 = vpack.c.b16 %v493, %v490
        %v548 = vpack.c.b16 %v494, %v491
        %v549 = vpack.c.b16 %v498, %v495
        %v550 = vpack.c.b16 %v499, %v496
        %v551 = vpack.c.b16 %v500, %v497
        %v552 = vpack.c.b16 %v504, %v501
        %v553 = vpack.c.b16 %v505, %v502
        %v554 = vpack.c.b16 %v506, %v503
        %v555 = vpack.c.b16 %v510, %v507
        %v556 = vpack.c.b16 %v511, %v508
        %v557 = vpack.c.b16 %v512, %v509
        %v558 = vpack.c.b16 %v516, %v513
        %v559 = vpack.c.b16 %v517, %v514
        %v560 = vpack.c.b16 %v518, %v515
        %v561 = vpack.c.b16 %v522, %v519
        %v562 = vpack.c.b16 %v523, %v520
        %v563 = vpack.c.b16 %v524, %v521
        %v564 = vpack.c.b16 %v528, %v525
        %v565 = vpack.c.b16 %v529, %v526
        %v566 = vpack.c.b16 %v530, %v527
        %v651 = vunpack.c.l.b16 %v291
        %v652 = vunpack.c.l.b16 %v292
        %v653 = vunpack.c.l.b16 %v293
        %v654 = vunpack.c.l.b16 %v294
        %v655 = vunpack.c.l.b16 %v295
        %v656 = vunpack.c.l.b16 %v296
        %v657 = vunpack.c.l.b16 %v297
        %v658 = vunpack.c.l.b16 %v298
        %v659 = vunpack.c.l.b16 %v299
        %v660 = vunpack.c.l.b16 %v300
        %v661 = vunpack.c.l.b16 %v301
        %v662 = vunpack.c.l.b16 %v302
        %v663 = vunpack.c.l.b16 %v303
        %v664 = vunpack.c.l.b16 %v304
        %v665 = vunpack.c.l.b16 %v305
        %v666 = vunpack.c.l.b16 %v306
        %v667 = vunpack.c.l.b16 %v307
        %v668 = vunpack.c.l.b16 %v308
        %v669 = vunpack.c.l.b16 %v309
        %v670 = vunpack.c.l.b16 %v310
        %v671 = vunpack.c.l.b16 %v311
        %v672 = vunpack.c.l.b16 %v312
        %v673 = vunpack.c.l.b16 %v313
        %v674 = vunpack.c.l.b16 %v314
        %v675 = vunpack.c.l.b16 %v315
        %v676 = vunpack.c.l.b16 %v316
        %v677 = vunpack.c.l.b16 %v317
        %v678 = vunpack.c.l.b16 %v318
        %v679 = vunpack.c.l.b16 %v319
        %v680 = vunpack.c.l.b16 %v320
        %v681 = vunpack.c.l.b16 %v321
        %v682 = vunpack.c.l.b16 %v322
        %v683 = vunpack.c.l.b16 %v323
        %v684 = vunpack.c.l.b16 %v324
        %v685 = vunpack.c.l.b16 %v325
        %v686 = vunpack.c.l.b16 %v326
        %v687 = vunpack.c.l.b16 %v327
        %v688 = vunpack.c.l.b16 %v328
        %v689 = vunpack.c.l.b16 %v329
        %v690 = vunpack.c.l.b16 %v330
        %v691 = vunpack.c.l.b16 %v331
        %v692 = vunpack.c.l.b16 %v332
        %v693 = vunpack.c.l.b16 %v333
        %v694 = vunpack.c.l.b16 %v334
        %v695 = vunpack.c.l.b16 %v335
        %v696 = vunpack.c.l.b16 %v336
        %v697 = vunpack.c.l.b16 %v337
        %v698 = vunpack.c.l.b16 %v338
        %v699 = vpack.c.b16 %v652, %v651
        %v700 = vpack.c.b16 %v654, %v653
        %v701 = vpack.c.b16 %v656, %v655
        %v702 = vpack.c.b16 %v658, %v657
        %v703 = vpack.c.b16 %v660, %v659
        %v704 = vpack.c.b16 %v662, %v661
        %v705 = vpack.c.b16 %v664, %v663
        %v706 = vpack.c.b16 %v666, %v665
        %v707 = vpack.c.b16 %v668, %v667
        %v708 = vpack.c.b16 %v670, %v669
        %v709 = vpack.c.b16 %v672, %v671
        %v710 = vpack.c.b16 %v674, %v673
        %v711 = vpack.c.b16 %v676, %v675
        %v712 = vpack.c.b16 %v678, %v677
        %v713 = vpack.c.b16 %v680, %v679
        %v714 = vpack.c.b16 %v682, %v681
        %v715 = vpack.c.b16 %v684, %v683
        %v716 = vpack.c.b16 %v686, %v685
        %v717 = vpack.c.b16 %v688, %v687
        %v718 = vpack.c.b16 %v690, %v689
        %v719 = vpack.c.b16 %v692, %v691
        %v720 = vpack.c.b16 %v694, %v693
        %v721 = vpack.c.b16 %v696, %v695
        %v722 = vpack.c.b16 %v698, %v697
        %747 = vmatprep.subr.bf16.mxu0 0
        %748 = vmatpush1.bf16.msra.mxu0 %v706
        %749 = vmatprep.subr.bf16.mxu0 0
        %750 = vmatpush1.bf16.msra.mxu0 %v705
        %751 = vmatprep.subr.bf16.mxu0 0
        %752 = vmatpush1.bf16.msra.mxu0 %v704
        %753 = vmatprep.subr.bf16.mxu0 0
        %754 = vmatpush1.bf16.msra.mxu0 %v703
        %755 = vmatprep.subr.bf16.mxu0 0
        %756 = vmatpush1.bf16.msra.mxu0 %v702
        %757 = vmatprep.subr.bf16.mxu0 0
        %758 = vmatpush1.bf16.msra.mxu0 %v701
        %759 = vmatprep.subr.bf16.mxu0 0
        %760 = vmatpush1.bf16.msra.mxu0 %v700
        %761 = vmatprep.subr.bf16.mxu0 0
        %762 = vmatpush1.bf16.msra.mxu0 %v699
        %763 = vmatprep.subr.bf16.mxu0 0
        %764 = vmatpush2.bf16.msra.mxu0 %v714
        %765 = vmatprep.subr.bf16.mxu0 0
        %766 = vmatpush2.bf16.msra.mxu0 %v713
        %767 = vmatprep.subr.bf16.mxu0 0
        %768 = vmatpush2.bf16.msra.mxu0 %v712
        %769 = vmatprep.subr.bf16.mxu0 0
        %770 = vmatpush2.bf16.msra.mxu0 %v711
        %771 = vmatprep.subr.bf16.mxu0 0
        %772 = vmatpush2.bf16.msra.mxu0 %v710
        %773 = vmatprep.subr.bf16.mxu0 0
        %774 = vmatpush2.bf16.msra.mxu0 %v709
        %775 = vmatprep.subr.bf16.mxu0 0
        %776 = vmatpush2.bf16.msra.mxu0 %v708
        %777 = vmatprep.subr.bf16.mxu0 0
        %778 = vmatpush2.bf16.msra.mxu0 %v707
        %779 = vmatprep.mubr.bf16.mxu0 %v532
        %780 = vmatmul.mubr.bf16.gmra.mxu0 %v531
        %v781 = vpop.f32.mrf.mxu0
        %v782 = vadd.f32 0.0, %v781
        %v783 = vpop.f32.mrf.mxu0
        %v784 = vpop.f32.mrf.mxu0
        %v785 = vadd.f32 0.0, %v784
        %v786 = vpop.f32.mrf.mxu0
        %787 = vmatprep.mubr.bf16.mxu0 %v535
        %788 = vmatmul.mubr.bf16.gmra.mxu0 %v534
        %v789 = vpop.f32.mrf.mxu0
        %v790 = vadd.f32 0.0, %v789
        %v791 = vpop.f32.mrf.mxu0
        %v792 = vpop.f32.mrf.mxu0
        %v793 = vadd.f32 0.0, %v792
        %v794 = vpop.f32.mrf.mxu0
        %795 = vmatprep.mubr.bf16.mxu0 %v538
        %796 = vmatmul.mubr.bf16.gmra.mxu0 %v537
        %v797 = vpop.f32.mrf.mxu0
        %v798 = vadd.f32 0.0, %v797
        %v799 = vpop.f32.mrf.mxu0
        %v800 = vpop.f32.mrf.mxu0
        %v801 = vadd.f32 0.0, %v800
        %v802 = vpop.f32.mrf.mxu0
        %803 = vmatprep.mubr.bf16.mxu0 %v541
        %804 = vmatmul.mubr.bf16.gmra.mxu0 %v540
        %v805 = vpop.f32.mrf.mxu0
        %v806 = vadd.f32 0.0, %v805
        %v807 = vpop.f32.mrf.mxu0
        %v808 = vpop.f32.mrf.mxu0
        %v809 = vadd.f32 0.0, %v808
        %v810 = vpop.f32.mrf.mxu0
        %811 = vmatprep.mubr.bf16.mxu0 %v544
        %812 = vmatmul.mubr.bf16.gmra.mxu0 %v543
        %v813 = vpop.f32.mrf.mxu0
        %v814 = vadd.f32 0.0, %v813
        %v815 = vpop.f32.mrf.mxu0
        %v816 = vpop.f32.mrf.mxu0
        %v817 = vadd.f32 0.0, %v816
        %v818 = vpop.f32.mrf.mxu0
        %819 = vmatprep.mubr.bf16.mxu0 %v547
        %820 = vmatmul.mubr.bf16.gmra.mxu0 %v546
        %v821 = vpop.f32.mrf.mxu0
        %v822 = vadd.f32 0.0, %v821
        %v823 = vpop.f32.mrf.mxu0
        %v824 = vpop.f32.mrf.mxu0
        %v825 = vadd.f32 0.0, %v824
        %v826 = vpop.f32.mrf.mxu0
        %827 = vmatprep.mubr.bf16.mxu0 %v550
        %828 = vmatmul.mubr.bf16.gmra.mxu0 %v549
        %v829 = vpop.f32.mrf.mxu0
        %v830 = vadd.f32 0.0, %v829
        %v831 = vpop.f32.mrf.mxu0
        %v832 = vpop.f32.mrf.mxu0
        %v833 = vadd.f32 0.0, %v832
        %v834 = vpop.f32.mrf.mxu0
        %835 = vmatprep.mubr.bf16.mxu0 %v553
        %836 = vmatmul.mubr.bf16.gmra.mxu0 %v552
        %v837 = vpop.f32.mrf.mxu0
        %v838 = vadd.f32 0.0, %v837
        %v839 = vpop.f32.mrf.mxu0
        %v840 = vpop.f32.mrf.mxu0
        %v841 = vadd.f32 0.0, %v840
        %v842 = vpop.f32.mrf.mxu0
        %843 = vmatprep.mubr.bf16.mxu0 %v556
        %844 = vmatmul.mubr.bf16.gmra.mxu0 %v555
        %v845 = vpop.f32.mrf.mxu0
        %v846 = vadd.f32 0.0, %v845
        %v847 = vpop.f32.mrf.mxu0
        %v848 = vpop.f32.mrf.mxu0
        %v849 = vadd.f32 0.0, %v848
        %v850 = vpop.f32.mrf.mxu0
        %851 = vmatprep.mubr.bf16.mxu0 %v559
        %852 = vmatmul.mubr.bf16.gmra.mxu0 %v558
        %v853 = vpop.f32.mrf.mxu0
        %v854 = vadd.f32 0.0, %v853
        %v855 = vpop.f32.mrf.mxu0
        %v856 = vpop.f32.mrf.mxu0
        %v857 = vadd.f32 0.0, %v856
        %v858 = vpop.f32.mrf.mxu0
        %859 = vmatprep.mubr.bf16.mxu0 %v562
        %860 = vmatmul.mubr.bf16.gmra.mxu0 %v561
        %v861 = vpop.f32.mrf.mxu0
        %v862 = vadd.f32 0.0, %v861
        %v863 = vpop.f32.mrf.mxu0
        %v864 = vpop.f32.mrf.mxu0
        %v865 = vadd.f32 0.0, %v864
        %v866 = vpop.f32.mrf.mxu0
        %867 = vmatprep.mubr.bf16.mxu0 %v565
        %868 = vmatmul.mubr.bf16.gmra.mxu0 %v564
        %v869 = vpop.f32.mrf.mxu0
        %v870 = vadd.f32 0.0, %v869
        %v871 = vpop.f32.mrf.mxu0
        %v872 = vpop.f32.mrf.mxu0
        %v873 = vadd.f32 0.0, %v872
        %v874 = vpop.f32.mrf.mxu0
        %875 = vdwg.mxu0
        %876 = vmatprep.subr.bf16.mxu0 0
        %877 = vmatpush1.bf16.msra.mxu0 %v722
        %878 = vmatprep.subr.bf16.mxu0 0
        %879 = vmatpush1.bf16.msra.mxu0 %v721
        %880 = vmatprep.subr.bf16.mxu0 0
        %881 = vmatpush1.bf16.msra.mxu0 %v720
        %882 = vmatprep.subr.bf16.mxu0 0
        %883 = vmatpush1.bf16.msra.mxu0 %v719
        %884 = vmatprep.subr.bf16.mxu0 0
        %885 = vmatpush1.bf16.msra.mxu0 %v718
        %886 = vmatprep.subr.bf16.mxu0 0
        %887 = vmatpush1.bf16.msra.mxu0 %v717
        %888 = vmatprep.subr.bf16.mxu0 0
        %889 = vmatpush1.bf16.msra.mxu0 %v716
        %890 = vmatprep.subr.bf16.mxu0 0
        %891 = vmatpush1.bf16.msra.mxu0 %v715
        %892 = vmatprep.subr.bf16.mxu0 0
        %893 = vmatpush2.bf16.msra.mxu0 0
        %894 = vmatprep.subr.bf16.mxu0 0
        %895 = vmatpush2.bf16.msra.mxu0 0
        %896 = vmatprep.subr.bf16.mxu0 0
        %897 = vmatpush2.bf16.msra.mxu0 0
        %898 = vmatprep.subr.bf16.mxu0 0
        %899 = vmatpush2.bf16.msra.mxu0 0
        %900 = vmatprep.subr.bf16.mxu0 0
        %901 = vmatpush2.bf16.msra.mxu0 0
        %902 = vmatprep.subr.bf16.mxu0 0
        %903 = vmatpush2.bf16.msra.mxu0 0
        %904 = vmatprep.subr.bf16.mxu0 0
        %905 = vmatpush2.bf16.msra.mxu0 0
        %906 = vmatprep.subr.bf16.mxu0 0
        %907 = vmatpush2.bf16.msra.mxu0 0
        %908 = vmatprep.mubr.bf16.mxu0 0
        %909 = vmatmul.mubr.bf16.gmra.mxu0 %v533
        %v910 = vpop.f32.mrf.mxu0
        %v911 = vadd.f32 %v782, %v910
        %v912 = vpop.f32.mrf.mxu0
        %v913 = vpop.f32.mrf.mxu0
        %v914 = vadd.f32 %v785, %v913
        %v915 = vpop.f32.mrf.mxu0
        %916 = vmatprep.mubr.bf16.mxu0 0
        %917 = vmatmul.mubr.bf16.gmra.mxu0 %v536
        %v918 = vpop.f32.mrf.mxu0
        %v919 = vadd.f32 %v790, %v918
        %v920 = vpop.f32.mrf.mxu0
        %v921 = vpop.f32.mrf.mxu0
        %v922 = vadd.f32 %v793, %v921
        %v923 = vpop.f32.mrf.mxu0
        %924 = vmatprep.mubr.bf16.mxu0 0
        %925 = vmatmul.mubr.bf16.gmra.mxu0 %v539
        %v926 = vpop.f32.mrf.mxu0
        %v927 = vadd.f32 %v798, %v926
        %v928 = vpop.f32.mrf.mxu0
        %v929 = vpop.f32.mrf.mxu0
        %v930 = vadd.f32 %v801, %v929
        %v931 = vpop.f32.mrf.mxu0
        %932 = vmatprep.mubr.bf16.mxu0 0
        %933 = vmatmul.mubr.bf16.gmra.mxu0 %v542
        %v934 = vpop.f32.mrf.mxu0
        %v935 = vadd.f32 %v806, %v934
        %v936 = vpop.f32.mrf.mxu0
        %v937 = vpop.f32.mrf.mxu0
        %v938 = vadd.f32 %v809, %v937
        %v939 = vpop.f32.mrf.mxu0
        %940 = vmatprep.mubr.bf16.mxu0 0
        %941 = vmatmul.mubr.bf16.gmra.mxu0 %v545
        %v942 = vpop.f32.mrf.mxu0
        %v943 = vadd.f32 %v814, %v942
        %v944 = vpop.f32.mrf.mxu0
        %v945 = vpop.f32.mrf.mxu0
        %v946 = vadd.f32 %v817, %v945
        %v947 = vpop.f32.mrf.mxu0
        %948 = vmatprep.mubr.bf16.mxu0 0
        %949 = vmatmul.mubr.bf16.gmra.mxu0 %v548
        %v950 = vpop.f32.mrf.mxu0
        %v951 = vadd.f32 %v822, %v950
        %v952 = vpop.f32.mrf.mxu0
        %v953 = vpop.f32.mrf.mxu0
        %v954 = vadd.f32 %v825, %v953
        %v955 = vpop.f32.mrf.mxu0
        %956 = vmatprep.mubr.bf16.mxu0 0
        %957 = vmatmul.mubr.bf16.gmra.mxu0 %v551
        %v958 = vpop.f32.mrf.mxu0
        %v959 = vadd.f32 %v830, %v958
        %v960 = vpop.f32.mrf.mxu0
        %v961 = vpop.f32.mrf.mxu0
        %v962 = vadd.f32 %v833, %v961
        %v963 = vpop.f32.mrf.mxu0
        %964 = vmatprep.mubr.bf16.mxu0 0
        %965 = vmatmul.mubr.bf16.gmra.mxu0 %v554
        %v966 = vpop.f32.mrf.mxu0
        %v967 = vadd.f32 %v838, %v966
        %v968 = vpop.f32.mrf.mxu0
        %v969 = vpop.f32.mrf.mxu0
        %v970 = vadd.f32 %v841, %v969
        %v971 = vpop.f32.mrf.mxu0
        %972 = vmatprep.mubr.bf16.mxu0 0
        %973 = vmatmul.mubr.bf16.gmra.mxu0 %v557
        %v974 = vpop.f32.mrf.mxu0
        %v975 = vadd.f32 %v846, %v974
        %v976 = vpop.f32.mrf.mxu0
        %v977 = vpop.f32.mrf.mxu0
        %v978 = vadd.f32 %v849, %v977
        %v979 = vpop.f32.mrf.mxu0
        %980 = vmatprep.mubr.bf16.mxu0 0
        %981 = vmatmul.mubr.bf16.gmra.mxu0 %v560
        %v982 = vpop.f32.mrf.mxu0
        %v983 = vadd.f32 %v854, %v982
        %v984 = vpop.f32.mrf.mxu0
        %v985 = vpop.f32.mrf.mxu0
        %v986 = vadd.f32 %v857, %v985
        %v987 = vpop.f32.mrf.mxu0
        %988 = vmatprep.mubr.bf16.mxu0 0
        %989 = vmatmul.mubr.bf16.gmra.mxu0 %v563
        %v990 = vpop.f32.mrf.mxu0
        %v991 = vadd.f32 %v862, %v990
        %v992 = vpop.f32.mrf.mxu0
        %v993 = vpop.f32.mrf.mxu0
        %v994 = vadd.f32 %v865, %v993
        %v995 = vpop.f32.mrf.mxu0
        %996 = vmatprep.mubr.bf16.mxu0 0
        %997 = vmatmul.mubr.bf16.gmra.mxu0 %v566
        %v998 = vpop.f32.mrf.mxu0
        %v999 = vadd.f32 %v870, %v998
        %v1000 = vpop.f32.mrf.mxu0
        %v1001 = vpop.f32.mrf.mxu0
        %v1002 = vadd.f32 %v873, %v1001
        %v1003 = vpop.f32.mrf.mxu0
        %1004 = vdwg.mxu0
        %v1005 = vadd.f32 %v339, %v911
        %v1006 = vadd.f32 %v340, %v914
        %v1007 = vadd.f32 %v341, %v919
        %v1008 = vadd.f32 %v342, %v922
        %v1009 = vadd.f32 %v343, %v927
        %v1010 = vadd.f32 %v344, %v930
        %v1011 = vadd.f32 %v345, %v935
        %v1012 = vadd.f32 %v346, %v938
        %v1013 = vadd.f32 %v347, %v943
        %v1014 = vadd.f32 %v348, %v946
        %v1015 = vadd.f32 %v349, %v951
        %v1016 = vadd.f32 %v350, %v954
        %v1017 = vadd.f32 %v351, %v959
        %v1018 = vadd.f32 %v352, %v962
        %v1019 = vadd.f32 %v353, %v967
        %v1020 = vadd.f32 %v354, %v970
        %v1021 = vadd.f32 %v355, %v975
        %v1022 = vadd.f32 %v356, %v978
        %v1023 = vadd.f32 %v357, %v983
        %v1024 = vadd.f32 %v358, %v986
        %v1025 = vadd.f32 %v359, %v991
        %v1026 = vadd.f32 %v360, %v994
        %v1027 = vadd.f32 %v361, %v999
        %v1028 = vadd.f32 %v362, %v1002
        %1029 = vst [vmem:[#allocation2] sm:$0xff] %v1005
        %1030 = vst [vmem:[#allocation2 + $0x8] sm:$0xff] %v1006
        %1031 = vst [vmem:[#allocation2 + $0x10] sm:$0xff] %v1007
        %1032 = vst [vmem:[#allocation2 + $0x18] sm:$0xff] %v1008
        %1033 = vst [vmem:[#allocation2 + $0x20] sm:$0xff] %v1009
        %1034 = vst [vmem:[#allocation2 + $0x28] sm:$0xff] %v1010
        %1035 = vst [vmem:[#allocation2 + $0x30] sm:$0xff] %v1011
        %1036 = vst [vmem:[#allocation2 + $0x38] sm:$0xff] %v1012
        %1037 = vst [vmem:[#allocation2 + $0x40] sm:$0xff] %v1013
        %1038 = vst [vmem:[#allocation2 + $0x48] sm:$0xff] %v1014
        %1039 = vst [vmem:[#allocation2 + $0x50] sm:$0xff] %v1015
        %1040 = vst [vmem:[#allocation2 + $0x58] sm:$0xff] %v1016
        %1041 = vst [vmem:[#allocation2 + $0x60] sm:$0xff] %v1017
        %1042 = vst [vmem:[#allocation2 + $0x68] sm:$0xff] %v1018
        %1043 = vst [vmem:[#allocation2 + $0x70] sm:$0xff] %v1019
        %1044 = vst [vmem:[#allocation2 + $0x78] sm:$0xff] %v1020
        %1045 = vst [vmem:[#allocation2 + $0x80] sm:$0xff] %v1021
        %1046 = vst [vmem:[#allocation2 + $0x88] sm:$0xff] %v1022
        %1047 = vst [vmem:[#allocation2 + $0x90] sm:$0xff] %v1023
        %1048 = vst [vmem:[#allocation2 + $0x98] sm:$0xff] %v1024
        %1049 = vst [vmem:[#allocation2 + $0xa0] sm:$0xff] %v1025
        %1050 = vst [vmem:[#allocation2 + $0xa8] sm:$0xff] %v1026
        %1051 = vst [vmem:[#allocation2 + $0xb0] sm:$0xff] %v1027
        %1052 = vst [vmem:[#allocation2 + $0xb8] sm:$0xff] %v1028
        // Predicated region
        $region41: #{graph_sequential_forward.7} parent=31 // pred_check
          %p1053 = pneg %p258
        $region42: #{graph_sequential_forward.7} parent=31 // pred_check_branch
          %1055 = sbr.rel (%p1053) target = $region44
        $region43: #{graph_sequential_forward.7} parent=31 // pred_region
          %v1056 = vld [vmem:[#allocation2] sm:$0xff]
          %v1057 = vld [vmem:[#allocation2 + $0x8] sm:$0xff]
          %v1058 = vld [vmem:[#allocation2 + $0x10] sm:$0xff]
          %v1059 = vld [vmem:[#allocation2 + $0x18] sm:$0xff]
          %v1060 = vld [vmem:[#allocation2 + $0x20] sm:$0xff]
          %v1061 = vld [vmem:[#allocation2 + $0x28] sm:$0xff]
          %v1062 = vld [vmem:[#allocation2 + $0x30] sm:$0xff]
          %v1063 = vld [vmem:[#allocation2 + $0x38] sm:$0xff]
          %v1064 = vld [vmem:[#allocation2 + $0x40] sm:$0xff]
          %v1065 = vld [vmem:[#allocation2 + $0x48] sm:$0xff]
          %v1066 = vld [vmem:[#allocation2 + $0x50] sm:$0xff]
          %v1067 = vld [vmem:[#allocation2 + $0x58] sm:$0xff]
          %v1068 = vld [vmem:[#allocation2 + $0x60] sm:$0xff]
          %v1069 = vld [vmem:[#allocation2 + $0x68] sm:$0xff]
          %v1070 = vld [vmem:[#allocation2 + $0x70] sm:$0xff]
          %v1071 = vld [vmem:[#allocation2 + $0x78] sm:$0xff]
          %v1072 = vld [vmem:[#allocation2 + $0x80] sm:$0xff]
          %v1073 = vld [vmem:[#allocation2 + $0x88] sm:$0xff]
          %v1074 = vld [vmem:[#allocation2 + $0x90] sm:$0xff]
          %v1075 = vld [vmem:[#allocation2 + $0x98] sm:$0xff]
          %v1076 = vld [vmem:[#allocation2 + $0xa0] sm:$0xff]
          %v1077 = vld [vmem:[#allocation2 + $0xa8] sm:$0xff]
          %v1078 = vld [vmem:[#allocation2 + $0xb0] sm:$0xff]
          %v1079 = vld [vmem:[#allocation2 + $0xb8] sm:$0xff]
          %v1080 = vld [vmem:[%s247] sm:$0x1]
          %v1082 = vlaneseq
          %v1083 = vshrl.u32 %v1082, 7
          %v1084 = vsub.s32 0, %v1083
          %v1085 = vrot.slane %v1080, %v1084
          %v1087 = vadd.f32 %v1056, %v1085
          %v1088 = vadd.f32 %v1057, %v1085
          %v1089 = vadd.f32 %v1058, %v1085
          %v1090 = vadd.f32 %v1059, %v1085
          %v1091 = vadd.f32 %v1060, %v1085
          %v1092 = vadd.f32 %v1061, %v1085
          %v1093 = vadd.f32 %v1062, %v1085
          %v1094 = vadd.f32 %v1063, %v1085
          %v1095 = vadd.f32 %v1064, %v1085
          %v1096 = vadd.f32 %v1065, %v1085
          %v1097 = vadd.f32 %v1066, %v1085
          %v1098 = vadd.f32 %v1067, %v1085
          %v1099 = vadd.f32 %v1068, %v1085
          %v1100 = vadd.f32 %v1069, %v1085
          %v1101 = vadd.f32 %v1070, %v1085
          %v1102 = vadd.f32 %v1071, %v1085
          %v1103 = vadd.f32 %v1072, %v1085
          %v1104 = vadd.f32 %v1073, %v1085
          %v1105 = vadd.f32 %v1074, %v1085
          %v1106 = vadd.f32 %v1075, %v1085
          %v1107 = vadd.f32 %v1076, %v1085
          %v1108 = vadd.f32 %v1077, %v1085
          %v1109 = vadd.f32 %v1078, %v1085
          %v1110 = vadd.f32 %v1079, %v1085
          %v1111 = vmax.f32 %v1087, 0.0
          %v1112 = vmax.f32 %v1088, 0.0
          %v1113 = vmax.f32 %v1089, 0.0
          %v1114 = vmax.f32 %v1090, 0.0
          %v1115 = vmax.f32 %v1091, 0.0
          %v1116 = vmax.f32 %v1092, 0.0
          %v1117 = vmax.f32 %v1093, 0.0
          %v1118 = vmax.f32 %v1094, 0.0
          %v1119 = vmax.f32 %v1095, 0.0
          %v1120 = vmax.f32 %v1096, 0.0
          %v1121 = vmax.f32 %v1097, 0.0
          %v1122 = vmax.f32 %v1098, 0.0
          %v1123 = vmax.f32 %v1099, 0.0
          %v1124 = vmax.f32 %v1100, 0.0
          %v1125 = vmax.f32 %v1101, 0.0
          %v1126 = vmax.f32 %v1102, 0.0
          %v1127 = vmax.f32 %v1103, 0.0
          %v1128 = vmax.f32 %v1104, 0.0
          %v1129 = vmax.f32 %v1105, 0.0
          %v1130 = vmax.f32 %v1106, 0.0
          %v1131 = vmax.f32 %v1107, 0.0
          %v1132 = vmax.f32 %v1108, 0.0
          %v1133 = vmax.f32 %v1109, 0.0
          %v1134 = vmax.f32 %v1110, 0.0
          %v1135 = vpack.c.bf16 %v1112, %v1111
          %v1136 = vpack.c.bf16 %v1114, %v1113
          %v1137 = vpack.c.bf16 %v1116, %v1115
          %v1138 = vpack.c.bf16 %v1118, %v1117
          %v1139 = vpack.c.bf16 %v1120, %v1119
          %v1140 = vpack.c.bf16 %v1122, %v1121
          %v1141 = vpack.c.bf16 %v1124, %v1123
          %v1142 = vpack.c.bf16 %v1126, %v1125
          %v1143 = vpack.c.bf16 %v1128, %v1127
          %v1144 = vpack.c.bf16 %v1130, %v1129
          %v1145 = vpack.c.bf16 %v1132, %v1131
          %v1146 = vpack.c.bf16 %v1134, %v1133
          %v1159 = vunpack.c.l.b16 %v1135
          %v1160 = vunpack.c.h.b16 %v1135
          %v1161 = vunpack.c.l.b16 %v1136
          %v1162 = vunpack.c.h.b16 %v1136
          %v1163 = vunpack.c.l.b16 %v1137
          %v1164 = vunpack.c.h.b16 %v1137
          %v1165 = vunpack.c.l.b16 %v1138
          %v1166 = vunpack.c.h.b16 %v1138
          %v1167 = vunpack.c.l.b16 %v1139
          %v1168 = vunpack.c.h.b16 %v1139
          %v1169 = vunpack.c.l.b16 %v1140
          %v1170 = vunpack.c.h.b16 %v1140
          %v1171 = vunpack.c.l.b16 %v1141
          %v1172 = vunpack.c.h.b16 %v1141
          %v1173 = vunpack.c.l.b16 %v1142
          %v1174 = vunpack.c.h.b16 %v1142
          %v1175 = vunpack.c.l.b16 %v1143
          %v1176 = vunpack.c.h.b16 %v1143
          %v1177 = vunpack.c.l.b16 %v1144
          %v1178 = vunpack.c.h.b16 %v1144
          %v1179 = vunpack.c.l.b16 %v1145
          %v1180 = vunpack.c.h.b16 %v1145
          %v1181 = vunpack.c.l.b16 %v1146
          %v1182 = vunpack.c.h.b16 %v1146
          %v1183 = vpack.c.b16 %v1159, %v1159
          %v1184 = vpack.c.b16 %v1160, %v1160
          %v1185 = vpack.c.b16 %v1161, %v1161
          %v1186 = vpack.c.b16 %v1162, %v1162
          %v1187 = vpack.c.b16 %v1163, %v1163
          %v1188 = vpack.c.b16 %v1164, %v1164
          %v1189 = vpack.c.b16 %v1165, %v1165
          %v1190 = vpack.c.b16 %v1166, %v1166
          %v1191 = vpack.c.b16 %v1167, %v1167
          %v1192 = vpack.c.b16 %v1168, %v1168
          %v1193 = vpack.c.b16 %v1169, %v1169
          %v1194 = vpack.c.b16 %v1170, %v1170
          %v1195 = vpack.c.b16 %v1171, %v1171
          %v1196 = vpack.c.b16 %v1172, %v1172
          %v1197 = vpack.c.b16 %v1173, %v1173
          %v1198 = vpack.c.b16 %v1174, %v1174
          %v1199 = vpack.c.b16 %v1175, %v1175
          %v1200 = vpack.c.b16 %v1176, %v1176
          %v1201 = vpack.c.b16 %v1177, %v1177
          %v1202 = vpack.c.b16 %v1178, %v1178
          %v1203 = vpack.c.b16 %v1179, %v1179
          %v1204 = vpack.c.b16 %v1180, %v1180
          %v1205 = vpack.c.b16 %v1181, %v1181
          %v1206 = vpack.c.b16 %v1182, %v1182
          %1231 = vst [vmem:[%s255] sm:$0xf] %v1183
          %1232 = vst [vmem:[%s255 + $0x4] sm:$0xf] %v1184
          %1233 = vst [vmem:[%s255 + $0x8] sm:$0xf] %v1185
          %1234 = vst [vmem:[%s255 + $0xc] sm:$0xf] %v1186
          %1235 = vst [vmem:[%s255 + $0x10] sm:$0xf] %v1187
          %1236 = vst [vmem:[%s255 + $0x14] sm:$0xf] %v1188
          %1237 = vst [vmem:[%s255 + $0x18] sm:$0xf] %v1189
          %1238 = vst [vmem:[%s255 + $0x1c] sm:$0xf] %v1190
          %1239 = vst [vmem:[%s255 + $0x20] sm:$0xf] %v1191
          %1240 = vst [vmem:[%s255 + $0x24] sm:$0xf] %v1192
          %1241 = vst [vmem:[%s255 + $0x28] sm:$0xf] %v1193
          %1242 = vst [vmem:[%s255 + $0x2c] sm:$0xf] %v1194
          %1243 = vst [vmem:[%s255 + $0x30] sm:$0xf] %v1195
          %1244 = vst [vmem:[%s255 + $0x34] sm:$0xf] %v1196
          %1245 = vst [vmem:[%s255 + $0x38] sm:$0xf] %v1197
          %1246 = vst [vmem:[%s255 + $0x3c] sm:$0xf] %v1198
          %1247 = vst [vmem:[%s255 + $0x40] sm:$0xf] %v1199
          %1248 = vst [vmem:[%s255 + $0x44] sm:$0xf] %v1200
          %1249 = vst [vmem:[%s255 + $0x48] sm:$0xf] %v1201
          %1250 = vst [vmem:[%s255 + $0x4c] sm:$0xf] %v1202
          %1251 = vst [vmem:[%s255 + $0x50] sm:$0xf] %v1203
          %1252 = vst [vmem:[%s255 + $0x54] sm:$0xf] %v1204
          %1253 = vst [vmem:[%s255 + $0x58] sm:$0xf] %v1205
          %1254 = vst [vmem:[%s255 + $0x5c] sm:$0xf] %v1206
        $region44: #{graph_sequential_forward.7} parent=31 // pred_fallthru
          _
        %s1255 = smul.u32 24, %s22
        %p1256 = scmp.lt.s32.totalorder %s1255, 47
        %s1257 = scalar_select %p1256, %s1255, 47
        %p1258 = scmp.lt.s32.totalorder %s23, 0
        %s1259 = scalar_select %p1258, %s23, 0
        %s1260 = sadd.s32 %s1259, %s1257
        %s1261 = smul.addr %s1260, 4
        %s1262 = scalar_lea.vmem %s3, %s1261
        // Predicated region
        $region45: #{graph_sequential_forward.7} parent=31 // pred_check
          %p1263 = pneg %p136
        $region46: #{graph_sequential_forward.7} parent=31 // pred_check_branch
          %1265 = sbr.rel (%p1263) target = $region48
        $region47: #{graph_sequential_forward.7} parent=31 // pred_region
          %s1266 = smul.u32 24, %s22
        $region48: #{graph_sequential_forward.7} parent=31 // pred_fallthru
          _
      $region32: #{graph_sequential_forward.7} parent=5 // pred_fallthru
        _
      %p1267 = scmp.le.s32.totalorder 2, %s12
      // Predicated region
      $region49: #{graph_sequential_forward.7} parent=5 // pred_check
        %p1268 = pneg %p1267
      $region50: #{graph_sequential_forward.7} parent=5 // pred_check_branch
        %1270 = sbr.rel (%p1268) target = $region52
      $region51: #{graph_sequential_forward.7} parent=5 // pred_region
        %s1271 = ssub.s32 %s12, 2
        // Predicated region
        $region53: #{graph_sequential_forward.7} parent=51 // pred_check
          %p1272 = pneg %p142
        $region54: #{graph_sequential_forward.7} parent=51 // pred_check_branch
          %1274 = sbr.rel (%p1272) target = $region56
        $region55: #{graph_sequential_forward.7} parent=51 // pred_region
          %s1275 = smul.u32 24, %s25
          %p1276 = scmp.lt.s32.totalorder %s1275, 47
          %s1277 = scalar_select %p1276, %s1275, 47
          %p1278 = scmp.lt.s32.totalorder %s26, 0
          %s1279 = scalar_select %p1278, %s26, 0
          %s1280 = sadd.s32 %s1279, %s1277
          %s1281 = smul.addr %s1280, 4
          %s1282 = scalar_lea.vmem %s3, %s1281
        $region56: #{graph_sequential_forward.7} parent=51 // pred_fallthru
          _
      $region52: #{graph_sequential_forward.7} parent=5 // pred_fallthru
        _
    $region6: #{graph_sequential_forward.7} parent=1 // loop_footer
      %s16 = sadd.s32 1, %s12
    $region7: #{graph_sequential_forward.7} parent=1 // loop_footer_branch
      %11 = sbr.rel target = $region3
    $region8: #{graph_sequential_forward.7} parent=1 // loop_exit
      _
    %1283 = vsyncpa [#allocation4], 1
    %s1284 = scalar_lea.sflag [#allocation4], 1
    %1285 = vsyncpa %s1284, 1

// kernel: graph_sequential_forward.9
$region0: #{graph_sequential_forward.9}
  #allocation0 [shape = 'u32[]', space=smem, size = 0x4, offset = 0x4, fixed_abs, tag = 'smem constant byte address 0x4 - core index']
  #allocation1 [shape = 'u32[144,128]{1,0:T(1,128)}', space=vmem, size = 0x12000, scoped, tag = 'internal scratch']
  #allocation2 [shape = 'f32[192,128]{1,0:T(8,128)}', space=vmem, size = 0x18000, scoped, tag = 'scratch operand']
  %s0 = inlined_call_operand.vmem [shape: bf16[384,384], index: 0, kind: input, shape index: {}]
  %s1 = inlined_call_operand.vmem [shape: bf16[384,128], index: 1, kind: input, shape index: {}]
  %s2 = inlined_call_operand.vmem [shape: f32[1,128], index: 2, kind: input, shape index: {}]
  %s3 = inlined_call_operand.vmem [shape: bf16[384,128], index: 3, kind: input, shape index: {}, may-alias: {3,4}]
  %s4 = inlined_call_operand.vmem [shape: bf16[384,128], index: 4, kind: output, shape index: {}, may-alias: {3,4}]
  %s5 = sld [smem:[#allocation0]]
  $region57: #{graph_sequential_forward.9} parent=0
    _
  %s7 = ssub.s32 1, %s5
  %s8 = scalar_select 0, %s7, %s5
  loop: start=0, step=1, limit=4
  $region2: #{graph_sequential_forward.9} parent=0 // loop_pre_header
    _
  $region3: #{graph_sequential_forward.9} parent=0 // loop_header
    %s10 = sphi 0, %s14
    %p11 = scmp.ge.s32.totalorder %s10, 4
    %s17 = sphi 0, %s36
    %s18 = sphi 0, %s32
    %s19 = sphi 0, %s28
    %s20 = sphi 0, %s17
    %s21 = sphi 0, %s18
    %s22 = sphi 0, %s19
    %s23 = sphi 0, %s20
    %s24 = sphi 0, %s21
    %s25 = sphi 0, %s22
    %s41 = sphi 0, %s43
    %s44 = sphi 0, %s41
    %s45 = sphi 0, %s44
    %s61 = sphi 0, %s45
    %s67 = sphi 0, %s69
    %s70 = sphi 0, %s67
    %s71 = sphi 0, %s70
    %s87 = sphi 0, %s71
    %s93 = sphi 0, %s95
    %s96 = sphi 0, %s93
    %s97 = sphi 0, %s96
    %s113 = sphi 0, %s97
    %s121 = sphi 0, %s123
    %s124 = sphi 0, %s121
    %s125 = sphi 0, %s124
    %s141 = sphi 0, %s125
    %s149 = sphi 0, %s151
    %s152 = sphi 0, %s149
    %s153 = sphi 0, %s152
    %s169 = sphi 0, %s153
  $region4: #{graph_sequential_forward.9} parent=0 // loop_header_branch
    %13 = sbr.rel (%p11) target = $region8
  $region5: #{graph_sequential_forward.9} parent=0 // loop_body
    %s15 = ssub.s32 %s10, 1
    %s16 = ssub.s32 %s10, 2
    %s26 = sadd.s32 1, %s19
    %p27 = scmp.ge.s32.totalorder %s26, 1
    %s28 = scalar_select %p27, 0, %s26
    %s29 = sadd.s32 1, %s18
    %s30 = scalar_select %p27, %s29, %s18
    %p31 = scmp.ge.s32.totalorder %s30, 1
    %s32 = scalar_select %p31, 0, %s30
    %s33 = sadd.s32 1, %s17
    %s34 = scalar_select %p31, %s33, %s17
    %p35 = scmp.ge.s32.totalorder %s34, 2
    %s36 = scalar_select %p35, 0, %s34
    %s37 = ssub.s32 %s17, %s36
    %s38 = ssub.s32 %s19, %s28
    %s39 = sor.u32 %s37, %s38
    %p40 = scmp.eq.s32.totalorder %s39, 0
    %s42 = sadd.s32 %s41, 1
    %s43 = scalar_select %p40, %s41, %s42
    %p46 = pneg %p40
    %p47 = scmp.eq.s32.totalorder %s10, 1
    %p48 = por %p46, %p47
    %p49 = scmp.ne.s32.totalorder %s41, %s44
    %p50 = scmp.eq.s32.totalorder %s10, 0
    %p51 = por %p49, %p50
    %p52 = scmp.ne.s32.totalorder %s41, %s44
    %p53 = scmp.eq.s32.totalorder %s15, 1
    %p54 = por %p52, %p53
    %p55 = scmp.ne.s32.totalorder %s44, %s45
    %p56 = scmp.eq.s32.totalorder %s15, 0
    %p57 = por %p55, %p56
    %p58 = scmp.ne.s32.totalorder %s44, %s45
    %p59 = scmp.eq.s32.totalorder %s16, 1
    %p60 = por %p58, %p59
    %p62 = scmp.ne.s32.totalorder %s45, %s61
    %p63 = scmp.eq.s32.totalorder %s16, 0
    %p64 = por %p62, %p63
    %s65 = ssub.s32 %s18, %s32
    %p66 = scmp.eq.s32.totalorder %s65, 0
    %s68 = sadd.s32 %s67, 1
    %s69 = scalar_select %p66, %s67, %s68
    %p72 = pneg %p66
    %p73 = scmp.eq.s32.totalorder %s10, 1
    %p74 = por %p72, %p73
    %p75 = scmp.ne.s32.totalorder %s67, %s70
    %p76 = scmp.eq.s32.totalorder %s10, 0
    %p77 = por %p75, %p76
    %p78 = scmp.ne.s32.totalorder %s67, %s70
    %p79 = scmp.eq.s32.totalorder %s15, 1
    %p80 = por %p78, %p79
    %p81 = scmp.ne.s32.totalorder %s70, %s71
    %p82 = scmp.eq.s32.totalorder %s15, 0
    %p83 = por %p81, %p82
    %p84 = scmp.ne.s32.totalorder %s70, %s71
    %p85 = scmp.eq.s32.totalorder %s16, 1
    %p86 = por %p84, %p85
    %p88 = scmp.ne.s32.totalorder %s71, %s87
    %p89 = scmp.eq.s32.totalorder %s16, 0
    %p90 = por %p88, %p89
    %s91 = ssub.s32 %s18, %s32
    %p92 = scmp.eq.s32.totalorder %s91, 0
    %s94 = sadd.s32 %s93, 1
    %s95 = scalar_select %p92, %s93, %s94
    %p98 = pneg %p92
    %p99 = scmp.eq.s32.totalorder %s10, 1
    %p100 = por %p98, %p99
    %p101 = scmp.ne.s32.totalorder %s93, %s96
    %p102 = scmp.eq.s32.totalorder %s10, 0
    %p103 = por %p101, %p102
    %p104 = scmp.ne.s32.totalorder %s93, %s96
    %p105 = scmp.eq.s32.totalorder %s15, 1
    %p106 = por %p104, %p105
    %p107 = scmp.ne.s32.totalorder %s96, %s97
    %p108 = scmp.eq.s32.totalorder %s15, 0
    %p109 = por %p107, %p108
    %p110 = scmp.ne.s32.totalorder %s96, %s97
    %p111 = scmp.eq.s32.totalorder %s16, 1
    %p112 = por %p110, %p111
    %p114 = scmp.ne.s32.totalorder %s97, %s113
    %p115 = scmp.eq.s32.totalorder %s16, 0
    %p116 = por %p114, %p115
    %s117 = ssub.s32 %s17, %s36
    %s118 = ssub.s32 %s18, %s32
    %s119 = sor.u32 %s117, %s118
    %p120 = scmp.eq.s32.totalorder %s119, 0
    %s122 = sadd.s32 %s121, 1
    %s123 = scalar_select %p120, %s121, %s122
    %p126 = pneg %p120
    %p127 = scmp.eq.s32.totalorder %s10, 1
    %p128 = por %p126, %p127
    %p129 = scmp.ne.s32.totalorder %s121, %s124
    %p130 = scmp.eq.s32.totalorder %s10, 0
    %p131 = por %p129, %p130
    %p132 = scmp.ne.s32.totalorder %s121, %s124
    %p133 = scmp.eq.s32.totalorder %s15, 1
    %p134 = por %p132, %p133
    %p135 = scmp.ne.s32.totalorder %s124, %s125
    %p136 = scmp.eq.s32.totalorder %s15, 0
    %p137 = por %p135, %p136
    %p138 = scmp.ne.s32.totalorder %s124, %s125
    %p139 = scmp.eq.s32.totalorder %s16, 1
    %p140 = por %p138, %p139
    %p142 = scmp.ne.s32.totalorder %s125, %s141
    %p143 = scmp.eq.s32.totalorder %s16, 0
    %p144 = por %p142, %p143
    %s145 = ssub.s32 %s17, %s36
    %s146 = ssub.s32 %s18, %s32
    %s147 = sor.u32 %s145, %s146
    %p148 = scmp.eq.s32.totalorder %s147, 0
    %s150 = sadd.s32 %s149, 1
    %s151 = scalar_select %p148, %s149, %s150
    %p154 = pneg %p148
    %p155 = scmp.eq.s32.totalorder %s10, 1
    %p156 = por %p154, %p155
    %p157 = scmp.ne.s32.totalorder %s149, %s152
    %p158 = scmp.eq.s32.totalorder %s10, 0
    %p159 = por %p157, %p158
    %p160 = scmp.ne.s32.totalorder %s149, %s152
    %p161 = scmp.eq.s32.totalorder %s15, 1
    %p162 = por %p160, %p161
    %p163 = scmp.ne.s32.totalorder %s152, %s153
    %p164 = scmp.eq.s32.totalorder %s15, 0
    %p165 = por %p163, %p164
    %p166 = scmp.ne.s32.totalorder %s152, %s153
    %p167 = scmp.eq.s32.totalorder %s16, 1
    %p168 = por %p166, %p167
    %p170 = scmp.ne.s32.totalorder %s153, %s169
    %p171 = scmp.eq.s32.totalorder %s16, 0
    %p172 = por %p170, %p171
    %p173 = scmp.le.s32.totalorder 1, %s10
    %p174 = scmp.lt.s32.totalorder %s10, 3
    %p175 = pnand %p173, %p174
    %p176 = pneg %p175
    // Predicated region
    $region9: #{graph_sequential_forward.9} parent=5 // pred_check
      _
    $region10: #{graph_sequential_forward.9} parent=5 // pred_check_branch
      %178 = sbr.rel (%p175) target = $region12
    $region11: #{graph_sequential_forward.9} parent=5 // pred_region
      %s179 = ssub.s32 %s10, 1
      // Predicated region
      $region13: #{graph_sequential_forward.9} parent=11 // pred_check
        %p180 = pneg %p83
      $region14: #{graph_sequential_forward.9} parent=11 // pred_check_branch
        %182 = sbr.rel (%p180) target = $region16
      $region15: #{graph_sequential_forward.9} parent=11 // pred_region
        %p183 = scmp.lt.s32.totalorder %s21, 0
        %s184 = scalar_select %p183, %s21, 0
        %s185 = smul.addr %s184, 4
        %s186 = scalar_lea.vmem %s1, %s185
      $region16: #{graph_sequential_forward.9} parent=11 // pred_fallthru
        _
      // Predicated region
      $region17: #{graph_sequential_forward.9} parent=11 // pred_check
        %p187 = pneg %p109
      $region18: #{graph_sequential_forward.9} parent=11 // pred_check_branch
        %189 = sbr.rel (%p187) target = $region20
      $region19: #{graph_sequential_forward.9} parent=11 // pred_region
        %p190 = scmp.lt.s32.totalorder %s21, 0
        %s191 = scalar_select %p190, %s21, 0
        %s192 = scalar_lea.vmem %s2, %s191
      $region20: #{graph_sequential_forward.9} parent=11 // pred_fallthru
        _
    $region12: #{graph_sequential_forward.9} parent=5 // pred_fallthru
      _
    %p193 = scmp.lt.s32.totalorder %s10, 2
    // Predicated region
    $region21: #{graph_sequential_forward.9} parent=5 // pred_check
      %p194 = pneg %p193
    $region22: #{graph_sequential_forward.9} parent=5 // pred_check_branch
      %196 = sbr.rel (%p194) target = $region24
    $region23: #{graph_sequential_forward.9} parent=5 // pred_region
      // Predicated region
      $region25: #{graph_sequential_forward.9} parent=23 // pred_check
        %p197 = pneg %p51
      $region26: #{graph_sequential_forward.9} parent=23 // pred_check_branch
        %199 = sbr.rel (%p197) target = $region28
      $region27: #{graph_sequential_forward.9} parent=23 // pred_region
        %s200 = smul.u32 24, %s17
        %s201 = smul.u32 3, %s19
        %p202 = scmp.lt.s32.totalorder %s200, 47
        %s203 = scalar_select %p202, %s200, 47
        %p204 = scmp.lt.s32.totalorder %s201, 2
        %s205 = scalar_select %p204, %s201, 2
        %s206 = smul.addr %s203, 3
        %s207 = sadd.s32 %s205, %s206
        %s208 = smul.addr %s207, 4
        %s209 = scalar_lea.vmem %s0, %s208
        %s210 = smul.u32 24, %s17
        %s211 = smul.u32 3, %s19
      $region28: #{graph_sequential_forward.9} parent=23 // pred_fallthru
        _
      // Predicated region
      $region29: #{graph_sequential_forward.9} parent=23 // pred_check
        %p212 = pneg %p131
      $region30: #{graph_sequential_forward.9} parent=23 // pred_check_branch
        %214 = sbr.rel (%p212) target = $region32
      $region31: #{graph_sequential_forward.9} parent=23 // pred_region
        %s215 = smul.u32 24, %s17
        %p216 = scmp.lt.s32.totalorder %s215, 47
        %s217 = scalar_select %p216, %s215, 47
        %p218 = scmp.lt.s32.totalorder %s18, 0
        %s219 = scalar_select %p218, %s18, 0
        %s220 = sadd.s32 %s219, %s217
        %s221 = smul.addr %s220, 4
        %s222 = scalar_lea.vmem %s3, %s221
        %s223 = smul.u32 24, %s17
      $region32: #{graph_sequential_forward.9} parent=23 // pred_fallthru
        _
    $region24: #{graph_sequential_forward.9} parent=5 // pred_fallthru
      _
    %p224 = scmp.le.s32.totalorder 1, %s10
    %p225 = scmp.lt.s32.totalorder %s10, 3
    %p226 = pnand %p224, %p225
    %p227 = pneg %p226
    // Predicated region
    $region33: #{graph_sequential_forward.9} parent=5 // pred_check
      _
    $region34: #{graph_sequential_forward.9} parent=5 // pred_check_branch
      %229 = sbr.rel (%p226) target = $region36
    $region35: #{graph_sequential_forward.9} parent=5 // pred_region
      %s230 = ssub.s32 %s10, 1
      %s231 = smul.u32 24, %s20
      %s232 = smul.u32 3, %s22
      %p233 = scmp.lt.s32.totalorder %s231, 47
      %s234 = scalar_select %p233, %s231, 47
      %p235 = scmp.lt.s32.totalorder %s232, 2
      %s236 = scalar_select %p235, %s232, 2
      %s237 = smul.addr %s234, 3
      %s238 = sadd.s32 %s236, %s237
      %s239 = smul.addr %s238, 4
      %s240 = scalar_lea.vmem %s0, %s239
      %p241 = pneg %p57
      %p242 = pneg %p54
      %p243 = scmp.lt.s32.totalorder %s21, 0
      %s244 = scalar_select %p243, %s21, 0
      %s245 = smul.addr %s244, 4
      %s246 = scalar_lea.vmem %s1, %s245
      %p247 = pneg %p83
      %p248 = pneg %p80
      %p249 = scmp.lt.s32.totalorder %s21, 0
      %s250 = scalar_select %p249, %s21, 0
      %s251 = scalar_lea.vmem %s2, %s250
      %p252 = pneg %p109
      %p253 = pneg %p106
      %s254 = smul.u32 24, %s20
      %p255 = scmp.lt.s32.totalorder %s254, 47
      %s256 = scalar_select %p255, %s254, 47
      %p257 = scmp.lt.s32.totalorder %s21, 0
      %s258 = scalar_select %p257, %s21, 0
      %s259 = sadd.s32 %s258, %s256
      %s260 = smul.addr %s259, 4
      %s261 = scalar_lea.vmem %s3, %s260
      %p262 = pneg %p137
      %p263 = pneg %p134
      %p264 = pneg %p165
      %p265 = pneg %p162
      %s266 = smul.u32 24, %s20
      %p267 = scmp.lt.s32.totalorder %s266, 47
      %s268 = scalar_select %p267, %s266, 47
      %p269 = scmp.lt.s32.totalorder %s21, 0
      %s270 = scalar_select %p269, %s21, 0
      %s271 = sadd.s32 %s270, %s268
      %s272 = smul.addr %s271, 4
      %s273 = scalar_lea.vmem %s4, %s272
      %s274 = smul.u32 24, %s20
      %s275 = smul.u32 3, %s22
      %p276 = scmp.lt.s32.totalorder %s274, 47
      %s277 = scalar_select %p276, %s274, 47
      %p278 = scmp.lt.s32.totalorder %s275, 2
      %s279 = scalar_select %p278, %s275, 2
      %s280 = smul.addr %s277, 3
      %s281 = sadd.s32 %s279, %s280
      %s282 = smul.addr %s281, 4
      %s283 = scalar_lea.vmem %s0, %s282
      %s284 = smul.u32 24, %s20
      %s285 = smul.u32 3, %s22
      %p286 = scmp.lt.s32.totalorder %s21, 0
      %s287 = scalar_select %p286, %s21, 0
      %s288 = smul.addr %s287, 4
      %s289 = scalar_lea.vmem %s1, %s288
      %p290 = scmp.lt.s32.totalorder %s21, 0
      %s291 = scalar_select %p290, %s21, 0
      %s292 = scalar_lea.vmem %s2, %s291
      %s293 = smul.u32 24, %s20
      %p294 = scmp.lt.s32.totalorder %s293, 47
      %s295 = scalar_select %p294, %s293, 47
      %p296 = scmp.lt.s32.totalorder %s21, 0
      %s297 = scalar_select %p296, %s21, 0
      %s298 = sadd.s32 %s297, %s295
      %s299 = smul.addr %s298, 4
      %s300 = scalar_lea.vmem %s3, %s299
      %s301 = smul.u32 24, %s20
      %s302 = smul.u32 24, %s20
      %p303 = scmp.lt.s32.totalorder %s302, 47
      %s304 = scalar_select %p303, %s302, 47
      %p305 = scmp.lt.s32.totalorder %s21, 0
      %s306 = scalar_select %p305, %s21, 0
      %s307 = sadd.s32 %s306, %s304
      %s308 = smul.addr %s307, 4
      %s309 = scalar_lea.vmem %s4, %s308
      %s310 = smul.u32 24, %s20
      %p312 = scmp.eq.s32.totalorder %s22, 0
      // Predicated region
      $region37: #{graph_sequential_forward.9} parent=35 // pred_check
        %p313 = pneg %p312
      $region38: #{graph_sequential_forward.9} parent=35 // pred_check_branch
        %315 = sbr.rel (%p313) target = $region40
      $region39: #{graph_sequential_forward.9} parent=35 // pred_region
        %316 = vst [vmem:[#allocation2] sm:$0xff] 0.0
        %317 = vst [vmem:[#allocation2 + $0x8] sm:$0xff] 0.0
        %318 = vst [vmem:[#allocation2 + $0x10] sm:$0xff] 0.0
        %319 = vst [vmem:[#allocation2 + $0x18] sm:$0xff] 0.0
        %320 = vst [vmem:[#allocation2 + $0x20] sm:$0xff] 0.0
        %321 = vst [vmem:[#allocation2 + $0x28] sm:$0xff] 0.0
        %322 = vst [vmem:[#allocation2 + $0x30] sm:$0xff] 0.0
        %323 = vst [vmem:[#allocation2 + $0x38] sm:$0xff] 0.0
        %324 = vst [vmem:[#allocation2 + $0x40] sm:$0xff] 0.0
        %325 = vst [vmem:[#allocation2 + $0x48] sm:$0xff] 0.0
        %326 = vst [vmem:[#allocation2 + $0x50] sm:$0xff] 0.0
        %327 = vst [vmem:[#allocation2 + $0x58] sm:$0xff] 0.0
        %328 = vst [vmem:[#allocation2 + $0x60] sm:$0xff] 0.0
        %329 = vst [vmem:[#allocation2 + $0x68] sm:$0xff] 0.0
        %330 = vst [vmem:[#allocation2 + $0x70] sm:$0xff] 0.0
        %331 = vst [vmem:[#allocation2 + $0x78] sm:$0xff] 0.0
        %332 = vst [vmem:[#allocation2 + $0x80] sm:$0xff] 0.0
        %333 = vst [vmem:[#allocation2 + $0x88] sm:$0xff] 0.0
        %334 = vst [vmem:[#allocation2 + $0x90] sm:$0xff] 0.0
        %335 = vst [vmem:[#allocation2 + $0x98] sm:$0xff] 0.0
        %336 = vst [vmem:[#allocation2 + $0xa0] sm:$0xff] 0.0
        %337 = vst [vmem:[#allocation2 + $0xa8] sm:$0xff] 0.0
        %338 = vst [vmem:[#allocation2 + $0xb0] sm:$0xff] 0.0
        %339 = vst [vmem:[#allocation2 + $0xb8] sm:$0xff] 0.0
      $region40: #{graph_sequential_forward.9} parent=35 // pred_fallthru
        _
      %s340 = smul.u32 %s22, 384
      %s341 = sshra.s32 %s340, 3
      %s342 = sand.u32 %s340, 7
      %s343 = smul.addr %s341, 4
      %s344 = scalar_lea.vmem %s289, %s343
      %v345 = vld [vmem:[%s344] sm:$0xf]
      %v346 = vld [vmem:[%s344 + $0x4] sm:$0xf]
      %v347 = vld [vmem:[%s344 + $0x8] sm:$0xf]
      %v348 = vld [vmem:[%s344 + $0xc] sm:$0xf]
      %v349 = vld [vmem:[%s344 + $0x10] sm:$0xf]
      %v350 = vld [vmem:[%s344 + $0x14] sm:$0xf]
      %v351 = vld [vmem:[%s344 + $0x18] sm:$0xf]
      %v352 = vld [vmem:[%s344 + $0x1c] sm:$0xf]
      %v353 = vld [vmem:[%s344 + $0x20] sm:$0xf]
      %v354 = vld [vmem:[%s344 + $0x24] sm:$0xf]
      %v355 = vld [vmem:[%s344 + $0x28] sm:$0xf]
      %v356 = vld [vmem:[%s344 + $0x2c] sm:$0xf]
      %v357 = vld [vmem:[%s344 + $0x30] sm:$0xf]
      %v358 = vld [vmem:[%s344 + $0x34] sm:$0xf]
      %v359 = vld [vmem:[%s344 + $0x38] sm:$0xf]
      %v360 = vld [vmem:[%s344 + $0x3c] sm:$0xf]
      %v361 = vld [vmem:[%s344 + $0x40] sm:$0xf]
      %v362 = vld [vmem:[%s344 + $0x44] sm:$0xf]
      %v363 = vld [vmem:[%s344 + $0x48] sm:$0xf]
      %v364 = vld [vmem:[%s344 + $0x4c] sm:$0xf]
      %v365 = vld [vmem:[%s344 + $0x50] sm:$0xf]
      %v366 = vld [vmem:[%s344 + $0x54] sm:$0xf]
      %v367 = vld [vmem:[%s344 + $0x58] sm:$0xf]
      %v368 = vld [vmem:[%s344 + $0x5c] sm:$0xf]
      %v369 = vld [vmem:[%s344 + $0x60] sm:$0xf]
      %v370 = vld [vmem:[%s344 + $0x64] sm:$0xf]
      %v371 = vld [vmem:[%s344 + $0x68] sm:$0xf]
      %v372 = vld [vmem:[%s344 + $0x6c] sm:$0xf]
      %v373 = vld [vmem:[%s344 + $0x70] sm:$0xf]
      %v374 = vld [vmem:[%s344 + $0x74] sm:$0xf]
      %v375 = vld [vmem:[%s344 + $0x78] sm:$0xf]
      %v376 = vld [vmem:[%s344 + $0x7c] sm:$0xf]
      %v377 = vld [vmem:[%s344 + $0x80] sm:$0xf]
      %v378 = vld [vmem:[%s344 + $0x84] sm:$0xf]
      %v379 = vld [vmem:[%s344 + $0x88] sm:$0xf]
      %v380 = vld [vmem:[%s344 + $0x8c] sm:$0xf]
      %v381 = vld [vmem:[%s344 + $0x90] sm:$0xf]
      %v382 = vld [vmem:[%s344 + $0x94] sm:$0xf]
      %v383 = vld [vmem:[%s344 + $0x98] sm:$0xf]
      %v384 = vld [vmem:[%s344 + $0x9c] sm:$0xf]
      %v385 = vld [vmem:[%s344 + $0xa0] sm:$0xf]
      %v386 = vld [vmem:[%s344 + $0xa4] sm:$0xf]
      %v387 = vld [vmem:[%s344 + $0xa8] sm:$0xf]
      %v388 = vld [vmem:[%s344 + $0xac] sm:$0xf]
      %v389 = vld [vmem:[%s344 + $0xb0] sm:$0xf]
      %v390 = vld [vmem:[%s344 + $0xb4] sm:$0xf]
      %v391 = vld [vmem:[%s344 + $0xb8] sm:$0xf]
      %v392 = vld [vmem:[%s344 + $0xbc] sm:$0xf]
      %v393 = vld [vmem:[#allocation2] sm:$0xff]
      %v394 = vld [vmem:[#allocation2 + $0x8] sm:$0xff]
      %v395 = vld [vmem:[#allocation2 + $0x10] sm:$0xff]
      %v396 = vld [vmem:[#allocation2 + $0x18] sm:$0xff]
      %v397 = vld [vmem:[#allocation2 + $0x20] sm:$0xff]
      %v398 = vld [vmem:[#allocation2 + $0x28] sm:$0xff]
      %v399 = vld [vmem:[#allocation2 + $0x30] sm:$0xff]
      %v400 = vld [vmem:[#allocation2 + $0x38] sm:$0xff]
      %v401 = vld [vmem:[#allocation2 + $0x40] sm:$0xff]
      %v402 = vld [vmem:[#allocation2 + $0x48] sm:$0xff]
      %v403 = vld [vmem:[#allocation2 + $0x50] sm:$0xff]
      %v404 = vld [vmem:[#allocation2 + $0x58] sm:$0xff]
      %v405 = vld [vmem:[#allocation2 + $0x60] sm:$0xff]
      %v406 = vld [vmem:[#allocation2 + $0x68] sm:$0xff]
      %v407 = vld [vmem:[#allocation2 + $0x70] sm:$0xff]
      %v408 = vld [vmem:[#allocation2 + $0x78] sm:$0xff]
      %v409 = vld [vmem:[#allocation2 + $0x80] sm:$0xff]
      %v410 = vld [vmem:[#allocation2 + $0x88] sm:$0xff]
      %v411 = vld [vmem:[#allocation2 + $0x90] sm:$0xff]
      %v412 = vld [vmem:[#allocation2 + $0x98] sm:$0xff]
      %v413 = vld [vmem:[#allocation2 + $0xa0] sm:$0xff]
      %v414 = vld [vmem:[#allocation2 + $0xa8] sm:$0xff]
      %v415 = vld [vmem:[#allocation2 + $0xb0] sm:$0xff]
      %v416 = vld [vmem:[#allocation2 + $0xb8] sm:$0xff]
      %v417 = vld [vmem:[%s283] sm:$0xff]
      %v418 = vld [vmem:[%s283 + $0x8] sm:$0xf]
      %v419 = vld [vmem:[%s283 + $0xc] sm:$0xff]
      %v420 = vld [vmem:[%s283 + $0x14] sm:$0xf]
      %v421 = vld [vmem:[%s283 + $0x18] sm:$0xff]
      %v422 = vld [vmem:[%s283 + $0x20] sm:$0xf]
      %v423 = vld [vmem:[%s283 + $0x24] sm:$0xff]
      %v424 = vld [vmem:[%s283 + $0x2c] sm:$0xf]
      %v425 = vld [vmem:[%s283 + $0x30] sm:$0xff]
      %v426 = vld [vmem:[%s283 + $0x38] sm:$0xf]
      %v427 = vld [vmem:[%s283 + $0x3c] sm:$0xff]
      %v428 = vld [vmem:[%s283 + $0x44] sm:$0xf]
      %v429 = vld [vmem:[%s283 + $0x48] sm:$0xff]
      %v430 = vld [vmem:[%s283 + $0x50] sm:$0xf]
      %v431 = vld [vmem:[%s283 + $0x54] sm:$0xff]
      %v432 = vld [vmem:[%s283 + $0x5c] sm:$0xf]
      %v433 = vld [vmem:[%s283 + $0x60] sm:$0xff]
      %v434 = vld [vmem:[%s283 + $0x68] sm:$0xf]
      %v435 = vld [vmem:[%s283 + $0x6c] sm:$0xff]
      %v436 = vld [vmem:[%s283 + $0x74] sm:$0xf]
      %v437 = vld [vmem:[%s283 + $0x78] sm:$0xff]
      %v438 = vld [vmem:[%s283 + $0x80] sm:$0xf]
      %v439 = vld [vmem:[%s283 + $0x84] sm:$0xff]
      %v440 = vld [vmem:[%s283 + $0x8c] sm:$0xf]
      %v441 = vld [vmem:[%s283 + $0x90] sm:$0xff]
      %v442 = vld [vmem:[%s283 + $0x98] sm:$0xf]
      %v443 = vld [vmem:[%s283 + $0x9c] sm:$0xff]
      %v444 = vld [vmem:[%s283 + $0xa4] sm:$0xf]
      %v445 = vld [vmem:[%s283 + $0xa8] sm:$0xff]
      %v446 = vld [vmem:[%s283 + $0xb0] sm:$0xf]
      %v447 = vld [vmem:[%s283 + $0xb4] sm:$0xff]
      %v448 = vld [vmem:[%s283 + $0xbc] sm:$0xf]
      %v449 = vld [vmem:[%s283 + $0xc0] sm:$0xff]
      %v450 = vld [vmem:[%s283 + $0xc8] sm:$0xf]
      %v451 = vld [vmem:[%s283 + $0xcc] sm:$0xff]
      %v452 = vld [vmem:[%s283 + $0xd4] sm:$0xf]
      %v453 = vld [vmem:[%s283 + $0xd8] sm:$0xff]
      %v454 = vld [vmem:[%s283 + $0xe0] sm:$0xf]
      %v455 = vld [vmem:[%s283 + $0xe4] sm:$0xff]
      %v456 = vld [vmem:[%s283 + $0xec] sm:$0xf]
      %v457 = vld [vmem:[%s283 + $0xf0] sm:$0xff]
      %v458 = vld [vmem:[%s283 + $0xf8] sm:$0xf]
      %v459 = vld [vmem:[%s283 + $0xfc] sm:$0xff]
      %v460 = vld [vmem:[%s283 + $0x104] sm:$0xf]
      %v461 = vld [vmem:[%s283 + $0x108] sm:$0xff]
      %v462 = vld [vmem:[%s283 + $0x110] sm:$0xf]
      %v463 = vld [vmem:[%s283 + $0x114] sm:$0xff]
      %v464 = vld [vmem:[%s283 + $0x11c] sm:$0xf]
      %v513 = vunpack.c.l.b16 %v417
      %v514 = vunpack.c.h.b16 %v417
      %v515 = vunpack.c.l.b16 %v418
      %v516 = vunpack.c.l.b16 %v419
      %v517 = vunpack.c.h.b16 %v419
      %v518 = vunpack.c.l.b16 %v420
      %v519 = vunpack.c.l.b16 %v421
      %v520 = vunpack.c.h.b16 %v421
      %v521 = vunpack.c.l.b16 %v422
      %v522 = vunpack.c.l.b16 %v423
      %v523 = vunpack.c.h.b16 %v423
      %v524 = vunpack.c.l.b16 %v424
      %v525 = vunpack.c.l.b16 %v425
      %v526 = vunpack.c.h.b16 %v425
      %v527 = vunpack.c.l.b16 %v426
      %v528 = vunpack.c.l.b16 %v427
      %v529 = vunpack.c.h.b16 %v427
      %v530 = vunpack.c.l.b16 %v428
      %v531 = vunpack.c.l.b16 %v429
      %v532 = vunpack.c.h.b16 %v429
      %v533 = vunpack.c.l.b16 %v430
      %v534 = vunpack.c.l.b16 %v431
      %v535 = vunpack.c.h.b16 %v431
      %v536 = vunpack.c.l.b16 %v432
      %v537 = vunpack.c.l.b16 %v433
      %v538 = vunpack.c.h.b16 %v433
      %v539 = vunpack.c.l.b16 %v434
      %v540 = vunpack.c.l.b16 %v435
      %v541 = vunpack.c.h.b16 %v435
      %v542 = vunpack.c.l.b16 %v436
      %v543 = vunpack.c.l.b16 %v437
      %v544 = vunpack.c.h.b16 %v437
      %v545 = vunpack.c.l.b16 %v438
      %v546 = vunpack.c.l.b16 %v439
      %v547 = vunpack.c.h.b16 %v439
      %v548 = vunpack.c.l.b16 %v440
      %v549 = vunpack.c.l.b16 %v441
      %v550 = vunpack.c.h.b16 %v441
      %v551 = vunpack.c.l.b16 %v442
      %v552 = vunpack.c.l.b16 %v443
      %v553 = vunpack.c.h.b16 %v443
      %v554 = vunpack.c.l.b16 %v444
      %v555 = vunpack.c.l.b16 %v445
      %v556 = vunpack.c.h.b16 %v445
      %v557 = vunpack.c.l.b16 %v446
      %v558 = vunpack.c.l.b16 %v447
      %v559 = vunpack.c.h.b16 %v447
      %v560 = vunpack.c.l.b16 %v448
      %v561 = vunpack.c.l.b16 %v449
      %v562 = vunpack.c.h.b16 %v449
      %v563 = vunpack.c.l.b16 %v450
      %v564 = vunpack.c.l.b16 %v451
      %v565 = vunpack.c.h.b16 %v451
      %v566 = vunpack.c.l.b16 %v452
      %v567 = vunpack.c.l.b16 %v453
      %v568 = vunpack.c.h.b16 %v453
      %v569 = vunpack.c.l.b16 %v454
      %v570 = vunpack.c.l.b16 %v455
      %v571 = vunpack.c.h.b16 %v455
      %v572 = vunpack.c.l.b16 %v456
      %v573 = vunpack.c.l.b16 %v457
      %v574 = vunpack.c.h.b16 %v457
      %v575 = vunpack.c.l.b16 %v458
      %v576 = vunpack.c.l.b16 %v459
      %v577 = vunpack.c.h.b16 %v459
      %v578 = vunpack.c.l.b16 %v460
      %v579 = vunpack.c.l.b16 %v461
      %v580 = vunpack.c.h.b16 %v461
      %v581 = vunpack.c.l.b16 %v462
      %v582 = vunpack.c.l.b16 %v463
      %v583 = vunpack.c.h.b16 %v463
      %v584 = vunpack.c.l.b16 %v464
      %v585 = vpack.c.b16 %v516, %v513
      %v586 = vpack.c.b16 %v517, %v514
      %v587 = vpack.c.b16 %v518, %v515
      %v588 = vpack.c.b16 %v522, %v519
      %v589 = vpack.c.b16 %v523, %v520
      %v590 = vpack.c.b16 %v524, %v521
      %v591 = vpack.c.b16 %v528, %v525
      %v592 = vpack.c.b16 %v529, %v526
      %v593 = vpack.c.b16 %v530, %v527
      %v594 = vpack.c.b16 %v534, %v531
      %v595 = vpack.c.b16 %v535, %v532
      %v596 = vpack.c.b16 %v536, %v533
      %v597 = vpack.c.b16 %v540, %v537
      %v598 = vpack.c.b16 %v541, %v538
      %v599 = vpack.c.b16 %v542, %v539
      %v600 = vpack.c.b16 %v546, %v543
      %v601 = vpack.c.b16 %v547, %v544
      %v602 = vpack.c.b16 %v548, %v545
      %v603 = vpack.c.b16 %v552, %v549
      %v604 = vpack.c.b16 %v553, %v550
      %v605 = vpack.c.b16 %v554, %v551
      %v606 = vpack.c.b16 %v558, %v555
      %v607 = vpack.c.b16 %v559, %v556
      %v608 = vpack.c.b16 %v560, %v557
      %v609 = vpack.c.b16 %v564, %v561
      %v610 = vpack.c.b16 %v565, %v562
      %v611 = vpack.c.b16 %v566, %v563
      %v612 = vpack.c.b16 %v570, %v567
      %v613 = vpack.c.b16 %v571, %v568
      %v614 = vpack.c.b16 %v572, %v569
      %v615 = vpack.c.b16 %v576, %v573
      %v616 = vpack.c.b16 %v577, %v574
      %v617 = vpack.c.b16 %v578, %v575
      %v618 = vpack.c.b16 %v582, %v579
      %v619 = vpack.c.b16 %v583, %v580
      %v620 = vpack.c.b16 %v584, %v581
      %v705 = vunpack.c.l.b16 %v345
      %v706 = vunpack.c.l.b16 %v346
      %v707 = vunpack.c.l.b16 %v347
      %v708 = vunpack.c.l.b16 %v348
      %v709 = vunpack.c.l.b16 %v349
      %v710 = vunpack.c.l.b16 %v350
      %v711 = vunpack.c.l.b16 %v351
      %v712 = vunpack.c.l.b16 %v352
      %v713 = vunpack.c.l.b16 %v353
      %v714 = vunpack.c.l.b16 %v354
      %v715 = vunpack.c.l.b16 %v355
      %v716 = vunpack.c.l.b16 %v356
      %v717 = vunpack.c.l.b16 %v357
      %v718 = vunpack.c.l.b16 %v358
      %v719 = vunpack.c.l.b16 %v359
      %v720 = vunpack.c.l.b16 %v360
      %v721 = vunpack.c.l.b16 %v361
      %v722 = vunpack.c.l.b16 %v362
      %v723 = vunpack.c.l.b16 %v363
      %v724 = vunpack.c.l.b16 %v364
      %v725 = vunpack.c.l.b16 %v365
      %v726 = vunpack.c.l.b16 %v366
      %v727 = vunpack.c.l.b16 %v367
      %v728 = vunpack.c.l.b16 %v368
      %v729 = vunpack.c.l.b16 %v369
      %v730 = vunpack.c.l.b16 %v370
      %v731 = vunpack.c.l.b16 %v371
      %v732 = vunpack.c.l.b16 %v372
      %v733 = vunpack.c.l.b16 %v373
      %v734 = vunpack.c.l.b16 %v374
      %v735 = vunpack.c.l.b16 %v375
      %v736 = vunpack.c.l.b16 %v376
      %v737 = vunpack.c.l.b16 %v377
      %v738 = vunpack.c.l.b16 %v378
      %v739 = vunpack.c.l.b16 %v379
      %v740 = vunpack.c.l.b16 %v380
      %v741 = vunpack.c.l.b16 %v381
      %v742 = vunpack.c.l.b16 %v382
      %v743 = vunpack.c.l.b16 %v383
      %v744 = vunpack.c.l.b16 %v384
      %v745 = vunpack.c.l.b16 %v385
      %v746 = vunpack.c.l.b16 %v386
      %v747 = vunpack.c.l.b16 %v387
      %v748 = vunpack.c.l.b16 %v388
      %v749 = vunpack.c.l.b16 %v389
      %v750 = vunpack.c.l.b16 %v390
      %v751 = vunpack.c.l.b16 %v391
      %v752 = vunpack.c.l.b16 %v392
      %v753 = vpack.c.b16 %v706, %v705
      %v754 = vpack.c.b16 %v708, %v707
      %v755 = vpack.c.b16 %v710, %v709
      %v756 = vpack.c.b16 %v712, %v711
      %v757 = vpack.c.b16 %v714, %v713
      %v758 = vpack.c.b16 %v716, %v715
      %v759 = vpack.c.b16 %v718, %v717
      %v760 = vpack.c.b16 %v720, %v719
      %v761 = vpack.c.b16 %v722, %v721
      %v762 = vpack.c.b16 %v724, %v723
      %v763 = vpack.c.b16 %v726, %v725
      %v764 = vpack.c.b16 %v728, %v727
      %v765 = vpack.c.b16 %v730, %v729
      %v766 = vpack.c.b16 %v732, %v731
      %v767 = vpack.c.b16 %v734, %v733
      %v768 = vpack.c.b16 %v736, %v735
      %v769 = vpack.c.b16 %v738, %v737
      %v770 = vpack.c.b16 %v740, %v739
      %v771 = vpack.c.b16 %v742, %v741
      %v772 = vpack.c.b16 %v744, %v743
      %v773 = vpack.c.b16 %v746, %v745
      %v774 = vpack.c.b16 %v748, %v747
      %v775 = vpack.c.b16 %v750, %v749
      %v776 = vpack.c.b16 %v752, %v751
      %801 = vmatprep.subr.bf16.mxu0 0
      %802 = vmatpush1.bf16.msra.mxu0 %v760
      %803 = vmatprep.subr.bf16.mxu0 0
      %804 = vmatpush1.bf16.msra.mxu0 %v759
      %805 = vmatprep.subr.bf16.mxu0 0
      %806 = vmatpush1.bf16.msra.mxu0 %v758
      %807 = vmatprep.subr.bf16.mxu0 0
      %808 = vmatpush1.bf16.msra.mxu0 %v757
      %809 = vmatprep.subr.bf16.mxu0 0
      %810 = vmatpush1.bf16.msra.mxu0 %v756
      %811 = vmatprep.subr.bf16.mxu0 0
      %812 = vmatpush1.bf16.msra.mxu0 %v755
      %813 = vmatprep.subr.bf16.mxu0 0
      %814 = vmatpush1.bf16.msra.mxu0 %v754
      %815 = vmatprep.subr.bf16.mxu0 0
      %816 = vmatpush1.bf16.msra.mxu0 %v753
      %817 = vmatprep.subr.bf16.mxu0 0
      %818 = vmatpush2.bf16.msra.mxu0 %v768
      %819 = vmatprep.subr.bf16.mxu0 0
      %820 = vmatpush2.bf16.msra.mxu0 %v767
      %821 = vmatprep.subr.bf16.mxu0 0
      %822 = vmatpush2.bf16.msra.mxu0 %v766
      %823 = vmatprep.subr.bf16.mxu0 0
      %824 = vmatpush2.bf16.msra.mxu0 %v765
      %825 = vmatprep.subr.bf16.mxu0 0
      %826 = vmatpush2.bf16.msra.mxu0 %v764
      %827 = vmatprep.subr.bf16.mxu0 0
      %828 = vmatpush2.bf16.msra.mxu0 %v763
      %829 = vmatprep.subr.bf16.mxu0 0
      %830 = vmatpush2.bf16.msra.mxu0 %v762
      %831 = vmatprep.subr.bf16.mxu0 0
      %832 = vmatpush2.bf16.msra.mxu0 %v761
      %833 = vmatprep.mubr.bf16.mxu0 %v586
      %834 = vmatmul.mubr.bf16.gmra.mxu0 %v585
      %v835 = vpop.f32.mrf.mxu0
      %v836 = vadd.f32 0.0, %v835
      %v837 = vpop.f32.mrf.mxu0
      %v838 = vpop.f32.mrf.mxu0
      %v839 = vadd.f32 0.0, %v838
      %v840 = vpop.f32.mrf.mxu0
      %841 = vmatprep.mubr.bf16.mxu0 %v589
      %842 = vmatmul.mubr.bf16.gmra.mxu0 %v588
      %v843 = vpop.f32.mrf.mxu0
      %v844 = vadd.f32 0.0, %v843
      %v845 = vpop.f32.mrf.mxu0
      %v846 = vpop.f32.mrf.mxu0
      %v847 = vadd.f32 0.0, %v846
      %v848 = vpop.f32.mrf.mxu0
      %849 = vmatprep.mubr.bf16.mxu0 %v592
      %850 = vmatmul.mubr.bf16.gmra.mxu0 %v591
      %v851 = vpop.f32.mrf.mxu0
      %v852 = vadd.f32 0.0, %v851
      %v853 = vpop.f32.mrf.mxu0
      %v854 = vpop.f32.mrf.mxu0
      %v855 = vadd.f32 0.0, %v854
      %v856 = vpop.f32.mrf.mxu0
      %857 = vmatprep.mubr.bf16.mxu0 %v595
      %858 = vmatmul.mubr.bf16.gmra.mxu0 %v594
      %v859 = vpop.f32.mrf.mxu0
      %v860 = vadd.f32 0.0, %v859
      %v861 = vpop.f32.mrf.mxu0
      %v862 = vpop.f32.mrf.mxu0
      %v863 = vadd.f32 0.0, %v862
      %v864 = vpop.f32.mrf.mxu0
      %865 = vmatprep.mubr.bf16.mxu0 %v598
      %866 = vmatmul.mubr.bf16.gmra.mxu0 %v597
      %v867 = vpop.f32.mrf.mxu0
      %v868 = vadd.f32 0.0, %v867
      %v869 = vpop.f32.mrf.mxu0
      %v870 = vpop.f32.mrf.mxu0
      %v871 = vadd.f32 0.0, %v870
      %v872 = vpop.f32.mrf.mxu0
      %873 = vmatprep.mubr.bf16.mxu0 %v601
      %874 = vmatmul.mubr.bf16.gmra.mxu0 %v600
      %v875 = vpop.f32.mrf.mxu0
      %v876 = vadd.f32 0.0, %v875
      %v877 = vpop.f32.mrf.mxu0
      %v878 = vpop.f32.mrf.mxu0
      %v879 = vadd.f32 0.0, %v878
      %v880 = vpop.f32.mrf.mxu0
      %881 = vmatprep.mubr.bf16.mxu0 %v604
      %882 = vmatmul.mubr.bf16.gmra.mxu0 %v603
      %v883 = vpop.f32.mrf.mxu0
      %v884 = vadd.f32 0.0, %v883
      %v885 = vpop.f32.mrf.mxu0
      %v886 = vpop.f32.mrf.mxu0
      %v887 = vadd.f32 0.0, %v886
      %v888 = vpop.f32.mrf.mxu0
      %889 = vmatprep.mubr.bf16.mxu0 %v607
      %890 = vmatmul.mubr.bf16.gmra.mxu0 %v606
      %v891 = vpop.f32.mrf.mxu0
      %v892 = vadd.f32 0.0, %v891
      %v893 = vpop.f32.mrf.mxu0
      %v894 = vpop.f32.mrf.mxu0
      %v895 = vadd.f32 0.0, %v894
      %v896 = vpop.f32.mrf.mxu0
      %897 = vmatprep.mubr.bf16.mxu0 %v610
      %898 = vmatmul.mubr.bf16.gmra.mxu0 %v609
      %v899 = vpop.f32.mrf.mxu0
      %v900 = vadd.f32 0.0, %v899
      %v901 = vpop.f32.mrf.mxu0
      %v902 = vpop.f32.mrf.mxu0
      %v903 = vadd.f32 0.0, %v902
      %v904 = vpop.f32.mrf.mxu0
      %905 = vmatprep.mubr.bf16.mxu0 %v613
      %906 = vmatmul.mubr.bf16.gmra.mxu0 %v612
      %v907 = vpop.f32.mrf.mxu0
      %v908 = vadd.f32 0.0, %v907
      %v909 = vpop.f32.mrf.mxu0
      %v910 = vpop.f32.mrf.mxu0
      %v911 = vadd.f32 0.0, %v910
      %v912 = vpop.f32.mrf.mxu0
      %913 = vmatprep.mubr.bf16.mxu0 %v616
      %914 = vmatmul.mubr.bf16.gmra.mxu0 %v615
      %v915 = vpop.f32.mrf.mxu0
      %v916 = vadd.f32 0.0, %v915
      %v917 = vpop.f32.mrf.mxu0
      %v918 = vpop.f32.mrf.mxu0
      %v919 = vadd.f32 0.0, %v918
      %v920 = vpop.f32.mrf.mxu0
      %921 = vmatprep.mubr.bf16.mxu0 %v619
      %922 = vmatmul.mubr.bf16.gmra.mxu0 %v618
      %v923 = vpop.f32.mrf.mxu0
      %v924 = vadd.f32 0.0, %v923
      %v925 = vpop.f32.mrf.mxu0
      %v926 = vpop.f32.mrf.mxu0
      %v927 = vadd.f32 0.0, %v926
      %v928 = vpop.f32.mrf.mxu0
      %929 = vdwg.mxu0
      %930 = vmatprep.subr.bf16.mxu0 0
      %931 = vmatpush1.bf16.msra.mxu0 %v776
      %932 = vmatprep.subr.bf16.mxu0 0
      %933 = vmatpush1.bf16.msra.mxu0 %v775
      %934 = vmatprep.subr.bf16.mxu0 0
      %935 = vmatpush1.bf16.msra.mxu0 %v774
      %936 = vmatprep.subr.bf16.mxu0 0
      %937 = vmatpush1.bf16.msra.mxu0 %v773
      %938 = vmatprep.subr.bf16.mxu0 0
      %939 = vmatpush1.bf16.msra.mxu0 %v772
      %940 = vmatprep.subr.bf16.mxu0 0
      %941 = vmatpush1.bf16.msra.mxu0 %v771
      %942 = vmatprep.subr.bf16.mxu0 0
      %943 = vmatpush1.bf16.msra.mxu0 %v770
      %944 = vmatprep.subr.bf16.mxu0 0
      %945 = vmatpush1.bf16.msra.mxu0 %v769
      %946 = vmatprep.subr.bf16.mxu0 0
      %947 = vmatpush2.bf16.msra.mxu0 0
      %948 = vmatprep.subr.bf16.mxu0 0
      %949 = vmatpush2.bf16.msra.mxu0 0
      %950 = vmatprep.subr.bf16.mxu0 0
      %951 = vmatpush2.bf16.msra.mxu0 0
      %952 = vmatprep.subr.bf16.mxu0 0
      %953 = vmatpush2.bf16.msra.mxu0 0
      %954 = vmatprep.subr.bf16.mxu0 0
      %955 = vmatpush2.bf16.msra.mxu0 0
      %956 = vmatprep.subr.bf16.mxu0 0
      %957 = vmatpush2.bf16.msra.mxu0 0
      %958 = vmatprep.subr.bf16.mxu0 0
      %959 = vmatpush2.bf16.msra.mxu0 0
      %960 = vmatprep.subr.bf16.mxu0 0
      %961 = vmatpush2.bf16.msra.mxu0 0
      %962 = vmatprep.mubr.bf16.mxu0 0
      %963 = vmatmul.mubr.bf16.gmra.mxu0 %v587
      %v964 = vpop.f32.mrf.mxu0
      %v965 = vadd.f32 %v836, %v964
      %v966 = vpop.f32.mrf.mxu0
      %v967 = vpop.f32.mrf.mxu0
      %v968 = vadd.f32 %v839, %v967
      %v969 = vpop.f32.mrf.mxu0
      %970 = vmatprep.mubr.bf16.mxu0 0
      %971 = vmatmul.mubr.bf16.gmra.mxu0 %v590
      %v972 = vpop.f32.mrf.mxu0
      %v973 = vadd.f32 %v844, %v972
      %v974 = vpop.f32.mrf.mxu0
      %v975 = vpop.f32.mrf.mxu0
      %v976 = vadd.f32 %v847, %v975
      %v977 = vpop.f32.mrf.mxu0
      %978 = vmatprep.mubr.bf16.mxu0 0
      %979 = vmatmul.mubr.bf16.gmra.mxu0 %v593
      %v980 = vpop.f32.mrf.mxu0
      %v981 = vadd.f32 %v852, %v980
      %v982 = vpop.f32.mrf.mxu0
      %v983 = vpop.f32.mrf.mxu0
      %v984 = vadd.f32 %v855, %v983
      %v985 = vpop.f32.mrf.mxu0
      %986 = vmatprep.mubr.bf16.mxu0 0
      %987 = vmatmul.mubr.bf16.gmra.mxu0 %v596
      %v988 = vpop.f32.mrf.mxu0
      %v989 = vadd.f32 %v860, %v988
      %v990 = vpop.f32.mrf.mxu0
      %v991 = vpop.f32.mrf.mxu0
      %v992 = vadd.f32 %v863, %v991
      %v993 = vpop.f32.mrf.mxu0
      %994 = vmatprep.mubr.bf16.mxu0 0
      %995 = vmatmul.mubr.bf16.gmra.mxu0 %v599
      %v996 = vpop.f32.mrf.mxu0
      %v997 = vadd.f32 %v868, %v996
      %v998 = vpop.f32.mrf.mxu0
      %v999 = vpop.f32.mrf.mxu0
      %v1000 = vadd.f32 %v871, %v999
      %v1001 = vpop.f32.mrf.mxu0
      %1002 = vmatprep.mubr.bf16.mxu0 0
      %1003 = vmatmul.mubr.bf16.gmra.mxu0 %v602
      %v1004 = vpop.f32.mrf.mxu0
      %v1005 = vadd.f32 %v876, %v1004
      %v1006 = vpop.f32.mrf.mxu0
      %v1007 = vpop.f32.mrf.mxu0
      %v1008 = vadd.f32 %v879, %v1007
      %v1009 = vpop.f32.mrf.mxu0
      %1010 = vmatprep.mubr.bf16.mxu0 0
      %1011 = vmatmul.mubr.bf16.gmra.mxu0 %v605
      %v1012 = vpop.f32.mrf.mxu0
      %v1013 = vadd.f32 %v884, %v1012
      %v1014 = vpop.f32.mrf.mxu0
      %v1015 = vpop.f32.mrf.mxu0
      %v1016 = vadd.f32 %v887, %v1015
      %v1017 = vpop.f32.mrf.mxu0
      %1018 = vmatprep.mubr.bf16.mxu0 0
      %1019 = vmatmul.mubr.bf16.gmra.mxu0 %v608
      %v1020 = vpop.f32.mrf.mxu0
      %v1021 = vadd.f32 %v892, %v1020
      %v1022 = vpop.f32.mrf.mxu0
      %v1023 = vpop.f32.mrf.mxu0
      %v1024 = vadd.f32 %v895, %v1023
      %v1025 = vpop.f32.mrf.mxu0
      %1026 = vmatprep.mubr.bf16.mxu0 0
      %1027 = vmatmul.mubr.bf16.gmra.mxu0 %v611
      %v1028 = vpop.f32.mrf.mxu0
      %v1029 = vadd.f32 %v900, %v1028
      %v1030 = vpop.f32.mrf.mxu0
      %v1031 = vpop.f32.mrf.mxu0
      %v1032 = vadd.f32 %v903, %v1031
      %v1033 = vpop.f32.mrf.mxu0
      %1034 = vmatprep.mubr.bf16.mxu0 0
      %1035 = vmatmul.mubr.bf16.gmra.mxu0 %v614
      %v1036 = vpop.f32.mrf.mxu0
      %v1037 = vadd.f32 %v908, %v1036
      %v1038 = vpop.f32.mrf.mxu0
      %v1039 = vpop.f32.mrf.mxu0
      %v1040 = vadd.f32 %v911, %v1039
      %v1041 = vpop.f32.mrf.mxu0
      %1042 = vmatprep.mubr.bf16.mxu0 0
      %1043 = vmatmul.mubr.bf16.gmra.mxu0 %v617
      %v1044 = vpop.f32.mrf.mxu0
      %v1045 = vadd.f32 %v916, %v1044
      %v1046 = vpop.f32.mrf.mxu0
      %v1047 = vpop.f32.mrf.mxu0
      %v1048 = vadd.f32 %v919, %v1047
      %v1049 = vpop.f32.mrf.mxu0
      %1050 = vmatprep.mubr.bf16.mxu0 0
      %1051 = vmatmul.mubr.bf16.gmra.mxu0 %v620
      %v1052 = vpop.f32.mrf.mxu0
      %v1053 = vadd.f32 %v924, %v1052
      %v1054 = vpop.f32.mrf.mxu0
      %v1055 = vpop.f32.mrf.mxu0
      %v1056 = vadd.f32 %v927, %v1055
      %v1057 = vpop.f32.mrf.mxu0
      %1058 = vdwg.mxu0
      %v1059 = vadd.f32 %v393, %v965
      %v1060 = vadd.f32 %v394, %v968
      %v1061 = vadd.f32 %v395, %v973
      %v1062 = vadd.f32 %v396, %v976
      %v1063 = vadd.f32 %v397, %v981
      %v1064 = vadd.f32 %v398, %v984
      %v1065 = vadd.f32 %v399, %v989
      %v1066 = vadd.f32 %v400, %v992
      %v1067 = vadd.f32 %v401, %v997
      %v1068 = vadd.f32 %v402, %v1000
      %v1069 = vadd.f32 %v403, %v1005
      %v1070 = vadd.f32 %v404, %v1008
      %v1071 = vadd.f32 %v405, %v1013
      %v1072 = vadd.f32 %v406, %v1016
      %v1073 = vadd.f32 %v407, %v1021
      %v1074 = vadd.f32 %v408, %v1024
      %v1075 = vadd.f32 %v409, %v1029
      %v1076 = vadd.f32 %v410, %v1032
      %v1077 = vadd.f32 %v411, %v1037
      %v1078 = vadd.f32 %v412, %v1040
      %v1079 = vadd.f32 %v413, %v1045
      %v1080 = vadd.f32 %v414, %v1048
      %v1081 = vadd.f32 %v415, %v1053
      %v1082 = vadd.f32 %v416, %v1056
      %1083 = vst [vmem:[#allocation2] sm:$0xff] %v1059
      %1084 = vst [vmem:[#allocation2 + $0x8] sm:$0xff] %v1060
      %1085 = vst [vmem:[#allocation2 + $0x10] sm:$0xff] %v1061
      %1086 = vst [vmem:[#allocation2 + $0x18] sm:$0xff] %v1062
      %1087 = vst [vmem:[#allocation2 + $0x20] sm:$0xff] %v1063
      %1088 = vst [vmem:[#allocation2 + $0x28] sm:$0xff] %v1064
      %1089 = vst [vmem:[#allocation2 + $0x30] sm:$0xff] %v1065
      %1090 = vst [vmem:[#allocation2 + $0x38] sm:$0xff] %v1066
      %1091 = vst [vmem:[#allocation2 + $0x40] sm:$0xff] %v1067
      %1092 = vst [vmem:[#allocation2 + $0x48] sm:$0xff] %v1068
      %1093 = vst [vmem:[#allocation2 + $0x50] sm:$0xff] %v1069
      %1094 = vst [vmem:[#allocation2 + $0x58] sm:$0xff] %v1070
      %1095 = vst [vmem:[#allocation2 + $0x60] sm:$0xff] %v1071
      %1096 = vst [vmem:[#allocation2 + $0x68] sm:$0xff] %v1072
      %1097 = vst [vmem:[#allocation2 + $0x70] sm:$0xff] %v1073
      %1098 = vst [vmem:[#allocation2 + $0x78] sm:$0xff] %v1074
      %1099 = vst [vmem:[#allocation2 + $0x80] sm:$0xff] %v1075
      %1100 = vst [vmem:[#allocation2 + $0x88] sm:$0xff] %v1076
      %1101 = vst [vmem:[#allocation2 + $0x90] sm:$0xff] %v1077
      %1102 = vst [vmem:[#allocation2 + $0x98] sm:$0xff] %v1078
      %1103 = vst [vmem:[#allocation2 + $0xa0] sm:$0xff] %v1079
      %1104 = vst [vmem:[#allocation2 + $0xa8] sm:$0xff] %v1080
      %1105 = vst [vmem:[#allocation2 + $0xb0] sm:$0xff] %v1081
      %1106 = vst [vmem:[#allocation2 + $0xb8] sm:$0xff] %v1082
      // Predicated region
      $region41: #{graph_sequential_forward.9} parent=35 // pred_check
        %p1107 = pneg %p312
      $region42: #{graph_sequential_forward.9} parent=35 // pred_check_branch
        %1109 = sbr.rel (%p1107) target = $region44
      $region43: #{graph_sequential_forward.9} parent=35 // pred_region
        %v1110 = vld [vmem:[#allocation2] sm:$0xff]
        %v1111 = vld [vmem:[#allocation2 + $0x8] sm:$0xff]
        %v1112 = vld [vmem:[#allocation2 + $0x10] sm:$0xff]
        %v1113 = vld [vmem:[#allocation2 + $0x18] sm:$0xff]
        %v1114 = vld [vmem:[#allocation2 + $0x20] sm:$0xff]
        %v1115 = vld [vmem:[#allocation2 + $0x28] sm:$0xff]
        %v1116 = vld [vmem:[#allocation2 + $0x30] sm:$0xff]
        %v1117 = vld [vmem:[#allocation2 + $0x38] sm:$0xff]
        %v1118 = vld [vmem:[#allocation2 + $0x40] sm:$0xff]
        %v1119 = vld [vmem:[#allocation2 + $0x48] sm:$0xff]
        %v1120 = vld [vmem:[#allocation2 + $0x50] sm:$0xff]
        %v1121 = vld [vmem:[#allocation2 + $0x58] sm:$0xff]
        %v1122 = vld [vmem:[#allocation2 + $0x60] sm:$0xff]
        %v1123 = vld [vmem:[#allocation2 + $0x68] sm:$0xff]
        %v1124 = vld [vmem:[#allocation2 + $0x70] sm:$0xff]
        %v1125 = vld [vmem:[#allocation2 + $0x78] sm:$0xff]
        %v1126 = vld [vmem:[#allocation2 + $0x80] sm:$0xff]
        %v1127 = vld [vmem:[#allocation2 + $0x88] sm:$0xff]
        %v1128 = vld [vmem:[#allocation2 + $0x90] sm:$0xff]
        %v1129 = vld [vmem:[#allocation2 + $0x98] sm:$0xff]
        %v1130 = vld [vmem:[#allocation2 + $0xa0] sm:$0xff]
        %v1131 = vld [vmem:[#allocation2 + $0xa8] sm:$0xff]
        %v1132 = vld [vmem:[#allocation2 + $0xb0] sm:$0xff]
        %v1133 = vld [vmem:[#allocation2 + $0xb8] sm:$0xff]
        %v1134 = vld [vmem:[%s292] sm:$0x1]
        %v1136 = vlaneseq
        %v1137 = vshrl.u32 %v1136, 7
        %v1138 = vsub.s32 0, %v1137
        %v1139 = vrot.slane %v1134, %v1138
        %v1141 = vadd.f32 %v1110, %v1139
        %v1142 = vadd.f32 %v1111, %v1139
        %v1143 = vadd.f32 %v1112, %v1139
        %v1144 = vadd.f32 %v1113, %v1139
        %v1145 = vadd.f32 %v1114, %v1139
        %v1146 = vadd.f32 %v1115, %v1139
        %v1147 = vadd.f32 %v1116, %v1139
        %v1148 = vadd.f32 %v1117, %v1139
        %v1149 = vadd.f32 %v1118, %v1139
        %v1150 = vadd.f32 %v1119, %v1139
        %v1151 = vadd.f32 %v1120, %v1139
        %v1152 = vadd.f32 %v1121, %v1139
        %v1153 = vadd.f32 %v1122, %v1139
        %v1154 = vadd.f32 %v1123, %v1139
        %v1155 = vadd.f32 %v1124, %v1139
        %v1156 = vadd.f32 %v1125, %v1139
        %v1157 = vadd.f32 %v1126, %v1139
        %v1158 = vadd.f32 %v1127, %v1139
        %v1159 = vadd.f32 %v1128, %v1139
        %v1160 = vadd.f32 %v1129, %v1139
        %v1161 = vadd.f32 %v1130, %v1139
        %v1162 = vadd.f32 %v1131, %v1139
        %v1163 = vadd.f32 %v1132, %v1139
        %v1164 = vadd.f32 %v1133, %v1139
        %v1165 = vld [vmem:[%s300] sm:$0xf]
        %v1166 = vld [vmem:[%s300 + $0x4] sm:$0xf]
        %v1167 = vld [vmem:[%s300 + $0x8] sm:$0xf]
        %v1168 = vld [vmem:[%s300 + $0xc] sm:$0xf]
        %v1169 = vld [vmem:[%s300 + $0x10] sm:$0xf]
        %v1170 = vld [vmem:[%s300 + $0x14] sm:$0xf]
        %v1171 = vld [vmem:[%s300 + $0x18] sm:$0xf]
        %v1172 = vld [vmem:[%s300 + $0x1c] sm:$0xf]
        %v1173 = vld [vmem:[%s300 + $0x20] sm:$0xf]
        %v1174 = vld [vmem:[%s300 + $0x24] sm:$0xf]
        %v1175 = vld [vmem:[%s300 + $0x28] sm:$0xf]
        %v1176 = vld [vmem:[%s300 + $0x2c] sm:$0xf]
        %v1177 = vld [vmem:[%s300 + $0x30] sm:$0xf]
        %v1178 = vld [vmem:[%s300 + $0x34] sm:$0xf]
        %v1179 = vld [vmem:[%s300 + $0x38] sm:$0xf]
        %v1180 = vld [vmem:[%s300 + $0x3c] sm:$0xf]
        %v1181 = vld [vmem:[%s300 + $0x40] sm:$0xf]
        %v1182 = vld [vmem:[%s300 + $0x44] sm:$0xf]
        %v1183 = vld [vmem:[%s300 + $0x48] sm:$0xf]
        %v1184 = vld [vmem:[%s300 + $0x4c] sm:$0xf]
        %v1185 = vld [vmem:[%s300 + $0x50] sm:$0xf]
        %v1186 = vld [vmem:[%s300 + $0x54] sm:$0xf]
        %v1187 = vld [vmem:[%s300 + $0x58] sm:$0xf]
        %v1188 = vld [vmem:[%s300 + $0x5c] sm:$0xf]
        %v1189 = vunpack.c.l.bf16 %v1165
        %v1190 = vunpack.c.l.bf16 %v1166
        %v1191 = vunpack.c.l.bf16 %v1167
        %v1192 = vunpack.c.l.bf16 %v1168
        %v1193 = vunpack.c.l.bf16 %v1169
        %v1194 = vunpack.c.l.bf16 %v1170
        %v1195 = vunpack.c.l.bf16 %v1171
        %v1196 = vunpack.c.l.bf16 %v1172
        %v1197 = vunpack.c.l.bf16 %v1173
        %v1198 = vunpack.c.l.bf16 %v1174
        %v1199 = vunpack.c.l.bf16 %v1175
        %v1200 = vunpack.c.l.bf16 %v1176
        %v1201 = vunpack.c.l.bf16 %v1177
        %v1202 = vunpack.c.l.bf16 %v1178
        %v1203 = vunpack.c.l.bf16 %v1179
        %v1204 = vunpack.c.l.bf16 %v1180
        %v1205 = vunpack.c.l.bf16 %v1181
        %v1206 = vunpack.c.l.bf16 %v1182
        %v1207 = vunpack.c.l.bf16 %v1183
        %v1208 = vunpack.c.l.bf16 %v1184
        %v1209 = vunpack.c.l.bf16 %v1185
        %v1210 = vunpack.c.l.bf16 %v1186
        %v1211 = vunpack.c.l.bf16 %v1187
        %v1212 = vunpack.c.l.bf16 %v1188
        %v1213 = vadd.f32 %v1189, %v1141
        %v1214 = vadd.f32 %v1190, %v1142
        %v1215 = vadd.f32 %v1191, %v1143
        %v1216 = vadd.f32 %v1192, %v1144
        %v1217 = vadd.f32 %v1193, %v1145
        %v1218 = vadd.f32 %v1194, %v1146
        %v1219 = vadd.f32 %v1195, %v1147
        %v1220 = vadd.f32 %v1196, %v1148
        %v1221 = vadd.f32 %v1197, %v1149
        %v1222 = vadd.f32 %v1198, %v1150
        %v1223 = vadd.f32 %v1199, %v1151
        %v1224 = vadd.f32 %v1200, %v1152
        %v1225 = vadd.f32 %v1201, %v1153
        %v1226 = vadd.f32 %v1202, %v1154
        %v1227 = vadd.f32 %v1203, %v1155
        %v1228 = vadd.f32 %v1204, %v1156
        %v1229 = vadd.f32 %v1205, %v1157
        %v1230 = vadd.f32 %v1206, %v1158
        %v1231 = vadd.f32 %v1207, %v1159
        %v1232 = vadd.f32 %v1208, %v1160
        %v1233 = vadd.f32 %v1209, %v1161
        %v1234 = vadd.f32 %v1210, %v1162
        %v1235 = vadd.f32 %v1211, %v1163
        %v1236 = vadd.f32 %v1212, %v1164
        %v1237 = vmax.f32 %v1213, 0.0
        %v1238 = vmax.f32 %v1214, 0.0
        %v1239 = vmax.f32 %v1215, 0.0
        %v1240 = vmax.f32 %v1216, 0.0
        %v1241 = vmax.f32 %v1217, 0.0
        %v1242 = vmax.f32 %v1218, 0.0
        %v1243 = vmax.f32 %v1219, 0.0
        %v1244 = vmax.f32 %v1220, 0.0
        %v1245 = vmax.f32 %v1221, 0.0
        %v1246 = vmax.f32 %v1222, 0.0
        %v1247 = vmax.f32 %v1223, 0.0
        %v1248 = vmax.f32 %v1224, 0.0
        %v1249 = vmax.f32 %v1225, 0.0
        %v1250 = vmax.f32 %v1226, 0.0
        %v1251 = vmax.f32 %v1227, 0.0
        %v1252 = vmax.f32 %v1228, 0.0
        %v1253 = vmax.f32 %v1229, 0.0
        %v1254 = vmax.f32 %v1230, 0.0
        %v1255 = vmax.f32 %v1231, 0.0
        %v1256 = vmax.f32 %v1232, 0.0
        %v1257 = vmax.f32 %v1233, 0.0
        %v1258 = vmax.f32 %v1234, 0.0
        %v1259 = vmax.f32 %v1235, 0.0
        %v1260 = vmax.f32 %v1236, 0.0
        %v1261 = vpack.c.bf16 %v1238, %v1237
        %v1262 = vpack.c.bf16 %v1240, %v1239
        %v1263 = vpack.c.bf16 %v1242, %v1241
        %v1264 = vpack.c.bf16 %v1244, %v1243
        %v1265 = vpack.c.bf16 %v1246, %v1245
        %v1266 = vpack.c.bf16 %v1248, %v1247
        %v1267 = vpack.c.bf16 %v1250, %v1249
        %v1268 = vpack.c.bf16 %v1252, %v1251
        %v1269 = vpack.c.bf16 %v1254, %v1253
        %v1270 = vpack.c.bf16 %v1256, %v1255
        %v1271 = vpack.c.bf16 %v1258, %v1257
        %v1272 = vpack.c.bf16 %v1260, %v1259
        %v1285 = vunpack.c.l.b16 %v1261
        %v1286 = vunpack.c.h.b16 %v1261
        %v1287 = vunpack.c.l.b16 %v1262
        %v1288 = vunpack.c.h.b16 %v1262
        %v1289 = vunpack.c.l.b16 %v1263
        %v1290 = vunpack.c.h.b16 %v1263
        %v1291 = vunpack.c.l.b16 %v1264
        %v1292 = vunpack.c.h.b16 %v1264
        %v1293 = vunpack.c.l.b16 %v1265
        %v1294 = vunpack.c.h.b16 %v1265
        %v1295 = vunpack.c.l.b16 %v1266
        %v1296 = vunpack.c.h.b16 %v1266
        %v1297 = vunpack.c.l.b16 %v1267
        %v1298 = vunpack.c.h.b16 %v1267
        %v1299 = vunpack.c.l.b16 %v1268
        %v1300 = vunpack.c.h.b16 %v1268
        %v1301 = vunpack.c.l.b16 %v1269
        %v1302 = vunpack.c.h.b16 %v1269
        %v1303 = vunpack.c.l.b16 %v1270
        %v1304 = vunpack.c.h.b16 %v1270
        %v1305 = vunpack.c.l.b16 %v1271
        %v1306 = vunpack.c.h.b16 %v1271
        %v1307 = vunpack.c.l.b16 %v1272
        %v1308 = vunpack.c.h.b16 %v1272
        %v1309 = vpack.c.b16 %v1285, %v1285
        %v1310 = vpack.c.b16 %v1286, %v1286
        %v1311 = vpack.c.b16 %v1287, %v1287
        %v1312 = vpack.c.b16 %v1288, %v1288
        %v1313 = vpack.c.b16 %v1289, %v1289
        %v1314 = vpack.c.b16 %v1290, %v1290
        %v1315 = vpack.c.b16 %v1291, %v1291
        %v1316 = vpack.c.b16 %v1292, %v1292
        %v1317 = vpack.c.b16 %v1293, %v1293
        %v1318 = vpack.c.b16 %v1294, %v1294
        %v1319 = vpack.c.b16 %v1295, %v1295
        %v1320 = vpack.c.b16 %v1296, %v1296
        %v1321 = vpack.c.b16 %v1297, %v1297
        %v1322 = vpack.c.b16 %v1298, %v1298
        %v1323 = vpack.c.b16 %v1299, %v1299
        %v1324 = vpack.c.b16 %v1300, %v1300
        %v1325 = vpack.c.b16 %v1301, %v1301
        %v1326 = vpack.c.b16 %v1302, %v1302
        %v1327 = vpack.c.b16 %v1303, %v1303
        %v1328 = vpack.c.b16 %v1304, %v1304
        %v1329 = vpack.c.b16 %v1305, %v1305
        %v1330 = vpack.c.b16 %v1306, %v1306
        %v1331 = vpack.c.b16 %v1307, %v1307
        %v1332 = vpack.c.b16 %v1308, %v1308
        %1357 = vst [vmem:[%s309] sm:$0xf] %v1309
        %1358 = vst [vmem:[%s309 + $0x4] sm:$0xf] %v1310
        %1359 = vst [vmem:[%s309 + $0x8] sm:$0xf] %v1311
        %1360 = vst [vmem:[%s309 + $0xc] sm:$0xf] %v1312
        %1361 = vst [vmem:[%s309 + $0x10] sm:$0xf] %v1313
        %1362 = vst [vmem:[%s309 + $0x14] sm:$0xf] %v1314
        %1363 = vst [vmem:[%s309 + $0x18] sm:$0xf] %v1315
        %1364 = vst [vmem:[%s309 + $0x1c] sm:$0xf] %v1316
        %1365 = vst [vmem:[%s309 + $0x20] sm:$0xf] %v1317
        %1366 = vst [vmem:[%s309 + $0x24] sm:$0xf] %v1318
        %1367 = vst [vmem:[%s309 + $0x28] sm:$0xf] %v1319
        %1368 = vst [vmem:[%s309 + $0x2c] sm:$0xf] %v1320
        %1369 = vst [vmem:[%s309 + $0x30] sm:$0xf] %v1321
        %1370 = vst [vmem:[%s309 + $0x34] sm:$0xf] %v1322
        %1371 = vst [vmem:[%s309 + $0x38] sm:$0xf] %v1323
        %1372 = vst [vmem:[%s309 + $0x3c] sm:$0xf] %v1324
        %1373 = vst [vmem:[%s309 + $0x40] sm:$0xf] %v1325
        %1374 = vst [vmem:[%s309 + $0x44] sm:$0xf] %v1326
        %1375 = vst [vmem:[%s309 + $0x48] sm:$0xf] %v1327
        %1376 = vst [vmem:[%s309 + $0x4c] sm:$0xf] %v1328
        %1377 = vst [vmem:[%s309 + $0x50] sm:$0xf] %v1329
        %1378 = vst [vmem:[%s309 + $0x54] sm:$0xf] %v1330
        %1379 = vst [vmem:[%s309 + $0x58] sm:$0xf] %v1331
        %1380 = vst [vmem:[%s309 + $0x5c] sm:$0xf] %v1332
      $region44: #{graph_sequential_forward.9} parent=35 // pred_fallthru
        _
      %s1381 = smul.u32 24, %s20
      %p1382 = scmp.lt.s32.totalorder %s1381, 47
      %s1383 = scalar_select %p1382, %s1381, 47
      %p1384 = scmp.lt.s32.totalorder %s21, 0
      %s1385 = scalar_select %p1384, %s21, 0
      %s1386 = sadd.s32 %s1385, %s1383
      %s1387 = smul.addr %s1386, 4
      %s1388 = scalar_lea.vmem %s4, %s1387
      // Predicated region
      $region45: #{graph_sequential_forward.9} parent=35 // pred_check
        %p1389 = pneg %p162
      $region46: #{graph_sequential_forward.9} parent=35 // pred_check_branch
        %1391 = sbr.rel (%p1389) target = $region48
      $region47: #{graph_sequential_forward.9} parent=35 // pred_region
        %s1392 = smul.u32 24, %s20
      $region48: #{graph_sequential_forward.9} parent=35 // pred_fallthru
        _
    $region36: #{graph_sequential_forward.9} parent=5 // pred_fallthru
      _
    %p1393 = scmp.le.s32.totalorder 2, %s10
    // Predicated region
    $region49: #{graph_sequential_forward.9} parent=5 // pred_check
      %p1394 = pneg %p1393
    $region50: #{graph_sequential_forward.9} parent=5 // pred_check_branch
      %1396 = sbr.rel (%p1394) target = $region52
    $region51: #{graph_sequential_forward.9} parent=5 // pred_region
      %s1397 = ssub.s32 %s10, 2
      // Predicated region
      $region53: #{graph_sequential_forward.9} parent=51 // pred_check
        %p1398 = pneg %p168
      $region54: #{graph_sequential_forward.9} parent=51 // pred_check_branch
        %1400 = sbr.rel (%p1398) target = $region56
      $region55: #{graph_sequential_forward.9} parent=51 // pred_region
        %s1401 = smul.u32 24, %s23
        %p1402 = scmp.lt.s32.totalorder %s1401, 47
        %s1403 = scalar_select %p1402, %s1401, 47
        %p1404 = scmp.lt.s32.totalorder %s24, 0
        %s1405 = scalar_select %p1404, %s24, 0
        %s1406 = sadd.s32 %s1405, %s1403
        %s1407 = smul.addr %s1406, 4
        %s1408 = scalar_lea.vmem %s4, %s1407
      $region56: #{graph_sequential_forward.9} parent=51 // pred_fallthru
        _
    $region52: #{graph_sequential_forward.9} parent=5 // pred_fallthru
      _
  $region6: #{graph_sequential_forward.9} parent=0 // loop_footer
    %s14 = sadd.s32 1, %s10
  $region7: #{graph_sequential_forward.9} parent=0 // loop_footer_branch
    %9 = sbr.rel target = $region3
  $region8: #{graph_sequential_forward.9} parent=0 // loop_exit
    _

// kernel: graph_sequential_forward.11
$region0: #{graph_sequential_forward.11}
  #allocation0 [shape = 'u32[]', space=smem, size = 0x4, offset = 0x4, fixed_abs, tag = 'smem constant byte address 0x4 - core index']
  #allocation1 [shape = 'u32[144,128]{1,0:T(1,128)}', space=vmem, size = 0x12000, scoped, tag = 'internal scratch']
  #allocation2 [shape = 'f32[192,128]{1,0:T(8,128)}', space=vmem, size = 0x18000, scoped, tag = 'scratch operand']
  %s0 = inlined_call_operand.vmem [shape: bf16[384,384], index: 0, kind: input, shape index: {}]
  %s1 = inlined_call_operand.vmem [shape: bf16[384,128], index: 1, kind: input, shape index: {}]
  %s2 = inlined_call_operand.vmem [shape: f32[1,128], index: 2, kind: input, shape index: {}]
  %s3 = inlined_call_operand.hbm [shape: bf16[384,128], index: 3, kind: output, shape index: {}]
  %s4 = sld [smem:[#allocation0]]
  $region53: #{graph_sequential_forward.11} parent=0
    _
  %s6 = ssub.s32 1, %s4
  %s7 = scalar_select 0, %s6, %s4
  $region1: #{graph_sequential_forward.11} parent=0
    #allocation3 [shape = 'u8[98304]{0}', space=vmem, size = 0x18000, scoped, tag = 'output window, operand 0']
    #allocation4 [shape = 's32[2]{0}', space=sflag, size = 0x8, scoped, tag = 'scoped memory for graph_sequential_forward.11']
    %8 = vsyncpa [#allocation4], 0
    %s9 = scalar_lea.sflag [#allocation4], 1
    %10 = vsyncpa %s9, 0
    loop: start=0, step=1, limit=4
    $region2: #{graph_sequential_forward.11} parent=1 // loop_pre_header
      _
    $region3: #{graph_sequential_forward.11} parent=1 // loop_header
      %s12 = sphi 0, %s16
      %p13 = scmp.ge.s32.totalorder %s12, 4
      %s19 = sphi 0, %s38
      %s20 = sphi 0, %s34
      %s21 = sphi 0, %s30
      %s22 = sphi 0, %s19
      %s23 = sphi 0, %s20
      %s24 = sphi 0, %s21
      %s25 = sphi 0, %s22
      %s26 = sphi 0, %s23
      %s27 = sphi 0, %s24
      %s43 = sphi 0, %s45
      %s46 = sphi 0, %s43
      %s47 = sphi 0, %s46
      %s63 = sphi 0, %s47
      %s69 = sphi 0, %s71
      %s72 = sphi 0, %s69
      %s73 = sphi 0, %s72
      %s89 = sphi 0, %s73
      %s95 = sphi 0, %s97
      %s98 = sphi 0, %s95
      %s99 = sphi 0, %s98
      %s115 = sphi 0, %s99
      %s123 = sphi 0, %s125
      %s126 = sphi 0, %s123
      %s127 = sphi 0, %s126
      %s143 = sphi 0, %s127
    $region4: #{graph_sequential_forward.11} parent=1 // loop_header_branch
      %15 = sbr.rel (%p13) target = $region8
    $region5: #{graph_sequential_forward.11} parent=1 // loop_body
      %s17 = ssub.s32 %s12, 1
      %s18 = ssub.s32 %s12, 2
      %s28 = sadd.s32 1, %s21
      %p29 = scmp.ge.s32.totalorder %s28, 1
      %s30 = scalar_select %p29, 0, %s28
      %s31 = sadd.s32 1, %s20
      %s32 = scalar_select %p29, %s31, %s20
      %p33 = scmp.ge.s32.totalorder %s32, 1
      %s34 = scalar_select %p33, 0, %s32
      %s35 = sadd.s32 1, %s19
      %s36 = scalar_select %p33, %s35, %s19
      %p37 = scmp.ge.s32.totalorder %s36, 2
      %s38 = scalar_select %p37, 0, %s36
      %s39 = ssub.s32 %s19, %s38
      %s40 = ssub.s32 %s21, %s30
      %s41 = sor.u32 %s39, %s40
      %p42 = scmp.eq.s32.totalorder %s41, 0
      %s44 = sadd.s32 %s43, 1
      %s45 = scalar_select %p42, %s43, %s44
      %p48 = pneg %p42
      %p49 = scmp.eq.s32.totalorder %s12, 1
      %p50 = por %p48, %p49
      %p51 = scmp.ne.s32.totalorder %s43, %s46
      %p52 = scmp.eq.s32.totalorder %s12, 0
      %p53 = por %p51, %p52
      %p54 = scmp.ne.s32.totalorder %s43, %s46
      %p55 = scmp.eq.s32.totalorder %s17, 1
      %p56 = por %p54, %p55
      %p57 = scmp.ne.s32.totalorder %s46, %s47
      %p58 = scmp.eq.s32.totalorder %s17, 0
      %p59 = por %p57, %p58
      %p60 = scmp.ne.s32.totalorder %s46, %s47
      %p61 = scmp.eq.s32.totalorder %s18, 1
      %p62 = por %p60, %p61
      %p64 = scmp.ne.s32.totalorder %s47, %s63
      %p65 = scmp.eq.s32.totalorder %s18, 0
      %p66 = por %p64, %p65
      %s67 = ssub.s32 %s20, %s34
      %p68 = scmp.eq.s32.totalorder %s67, 0
      %s70 = sadd.s32 %s69, 1
      %s71 = scalar_select %p68, %s69, %s70
      %p74 = pneg %p68
      %p75 = scmp.eq.s32.totalorder %s12, 1
      %p76 = por %p74, %p75
      %p77 = scmp.ne.s32.totalorder %s69, %s72
      %p78 = scmp.eq.s32.totalorder %s12, 0
      %p79 = por %p77, %p78
      %p80 = scmp.ne.s32.totalorder %s69, %s72
      %p81 = scmp.eq.s32.totalorder %s17, 1
      %p82 = por %p80, %p81
      %p83 = scmp.ne.s32.totalorder %s72, %s73
      %p84 = scmp.eq.s32.totalorder %s17, 0
      %p85 = por %p83, %p84
      %p86 = scmp.ne.s32.totalorder %s72, %s73
      %p87 = scmp.eq.s32.totalorder %s18, 1
      %p88 = por %p86, %p87
      %p90 = scmp.ne.s32.totalorder %s73, %s89
      %p91 = scmp.eq.s32.totalorder %s18, 0
      %p92 = por %p90, %p91
      %s93 = ssub.s32 %s20, %s34
      %p94 = scmp.eq.s32.totalorder %s93, 0
      %s96 = sadd.s32 %s95, 1
      %s97 = scalar_select %p94, %s95, %s96
      %p100 = pneg %p94
      %p101 = scmp.eq.s32.totalorder %s12, 1
      %p102 = por %p100, %p101
      %p103 = scmp.ne.s32.totalorder %s95, %s98
      %p104 = scmp.eq.s32.totalorder %s12, 0
      %p105 = por %p103, %p104
      %p106 = scmp.ne.s32.totalorder %s95, %s98
      %p107 = scmp.eq.s32.totalorder %s17, 1
      %p108 = por %p106, %p107
      %p109 = scmp.ne.s32.totalorder %s98, %s99
      %p110 = scmp.eq.s32.totalorder %s17, 0
      %p111 = por %p109, %p110
      %p112 = scmp.ne.s32.totalorder %s98, %s99
      %p113 = scmp.eq.s32.totalorder %s18, 1
      %p114 = por %p112, %p113
      %p116 = scmp.ne.s32.totalorder %s99, %s115
      %p117 = scmp.eq.s32.totalorder %s18, 0
      %p118 = por %p116, %p117
      %s119 = ssub.s32 %s19, %s38
      %s120 = ssub.s32 %s20, %s34
      %s121 = sor.u32 %s119, %s120
      %p122 = scmp.eq.s32.totalorder %s121, 0
      %s124 = sadd.s32 %s123, 1
      %s125 = scalar_select %p122, %s123, %s124
      %p128 = pneg %p122
      %p129 = scmp.eq.s32.totalorder %s12, 1
      %p130 = por %p128, %p129
      %p131 = scmp.ne.s32.totalorder %s123, %s126
      %p132 = scmp.eq.s32.totalorder %s12, 0
      %p133 = por %p131, %p132
      %p134 = scmp.ne.s32.totalorder %s123, %s126
      %p135 = scmp.eq.s32.totalorder %s17, 1
      %p136 = por %p134, %p135
      %p137 = scmp.ne.s32.totalorder %s126, %s127
      %p138 = scmp.eq.s32.totalorder %s17, 0
      %p139 = por %p137, %p138
      %p140 = scmp.ne.s32.totalorder %s126, %s127
      %p141 = scmp.eq.s32.totalorder %s18, 1
      %p142 = por %p140, %p141
      %p144 = scmp.ne.s32.totalorder %s127, %s143
      %p145 = scmp.eq.s32.totalorder %s18, 0
      %p146 = por %p144, %p145
      %p147 = scmp.le.s32.totalorder 1, %s12
      %p148 = scmp.lt.s32.totalorder %s12, 3
      %p149 = pnand %p147, %p148
      %p150 = pneg %p149
      // Predicated region
      $region9: #{graph_sequential_forward.11} parent=5 // pred_check
        _
      $region10: #{graph_sequential_forward.11} parent=5 // pred_check_branch
        %152 = sbr.rel (%p149) target = $region12
      $region11: #{graph_sequential_forward.11} parent=5 // pred_region
        %s153 = ssub.s32 %s12, 1
        // Predicated region
        $region13: #{graph_sequential_forward.11} parent=11 // pred_check
          %p154 = pneg %p85
        $region14: #{graph_sequential_forward.11} parent=11 // pred_check_branch
          %156 = sbr.rel (%p154) target = $region16
        $region15: #{graph_sequential_forward.11} parent=11 // pred_region
          %p157 = scmp.lt.s32.totalorder %s23, 0
          %s158 = scalar_select %p157, %s23, 0
          %s159 = smul.addr %s158, 4
          %s160 = scalar_lea.vmem %s1, %s159
        $region16: #{graph_sequential_forward.11} parent=11 // pred_fallthru
          _
        // Predicated region
        $region17: #{graph_sequential_forward.11} parent=11 // pred_check
          %p161 = pneg %p111
        $region18: #{graph_sequential_forward.11} parent=11 // pred_check_branch
          %163 = sbr.rel (%p161) target = $region20
        $region19: #{graph_sequential_forward.11} parent=11 // pred_region
          %p164 = scmp.lt.s32.totalorder %s23, 0
          %s165 = scalar_select %p164, %s23, 0
          %s166 = scalar_lea.vmem %s2, %s165
        $region20: #{graph_sequential_forward.11} parent=11 // pred_fallthru
          _
      $region12: #{graph_sequential_forward.11} parent=5 // pred_fallthru
        _
      %p167 = scmp.lt.s32.totalorder %s12, 2
      // Predicated region
      $region21: #{graph_sequential_forward.11} parent=5 // pred_check
        %p168 = pneg %p167
      $region22: #{graph_sequential_forward.11} parent=5 // pred_check_branch
        %170 = sbr.rel (%p168) target = $region24
      $region23: #{graph_sequential_forward.11} parent=5 // pred_region
        // Predicated region
        $region25: #{graph_sequential_forward.11} parent=23 // pred_check
          %p171 = pneg %p53
        $region26: #{graph_sequential_forward.11} parent=23 // pred_check_branch
          %173 = sbr.rel (%p171) target = $region28
        $region27: #{graph_sequential_forward.11} parent=23 // pred_region
          %s174 = smul.u32 24, %s19
          %s175 = smul.u32 3, %s21
          %p176 = scmp.lt.s32.totalorder %s174, 47
          %s177 = scalar_select %p176, %s174, 47
          %p178 = scmp.lt.s32.totalorder %s175, 2
          %s179 = scalar_select %p178, %s175, 2
          %s180 = smul.addr %s177, 3
          %s181 = sadd.s32 %s179, %s180
          %s182 = smul.addr %s181, 4
          %s183 = scalar_lea.vmem %s0, %s182
          %s184 = smul.u32 24, %s19
          %s185 = smul.u32 3, %s21
        $region28: #{graph_sequential_forward.11} parent=23 // pred_fallthru
          _
      $region24: #{graph_sequential_forward.11} parent=5 // pred_fallthru
        _
      %p186 = scmp.le.s32.totalorder 1, %s12
      %p187 = scmp.lt.s32.totalorder %s12, 3
      %p188 = pnand %p186, %p187
      %p189 = pneg %p188
      // Predicated region
      $region29: #{graph_sequential_forward.11} parent=5 // pred_check
        _
      $region30: #{graph_sequential_forward.11} parent=5 // pred_check_branch
        %191 = sbr.rel (%p188) target = $region32
      $region31: #{graph_sequential_forward.11} parent=5 // pred_region
        %s192 = ssub.s32 %s12, 1
        %s193 = smul.u32 24, %s22
        %s194 = smul.u32 3, %s24
        %p195 = scmp.lt.s32.totalorder %s193, 47
        %s196 = scalar_select %p195, %s193, 47
        %p197 = scmp.lt.s32.totalorder %s194, 2
        %s198 = scalar_select %p197, %s194, 2
        %s199 = smul.addr %s196, 3
        %s200 = sadd.s32 %s198, %s199
        %s201 = smul.addr %s200, 4
        %s202 = scalar_lea.vmem %s0, %s201
        %p203 = pneg %p59
        %p204 = pneg %p56
        %p205 = scmp.lt.s32.totalorder %s23, 0
        %s206 = scalar_select %p205, %s23, 0
        %s207 = smul.addr %s206, 4
        %s208 = scalar_lea.vmem %s1, %s207
        %p209 = pneg %p85
        %p210 = pneg %p82
        %p211 = scmp.lt.s32.totalorder %s23, 0
        %s212 = scalar_select %p211, %s23, 0
        %s213 = scalar_lea.vmem %s2, %s212
        %p214 = pneg %p111
        %p215 = pneg %p108
        %p216 = pneg %p139
        %p217 = pneg %p136
        %s218 = sand.u32 %s126, 1
        %s219 = scalar_lea.sflag [#allocation4], %s218
        %s220 = sand.u32 %s126, 1
        %s221 = smul.addr %s220, 96
        %s222 = scalar_lea.vmem [#allocation3], %s221
        %s223 = smul.u32 24, %s22
        %s224 = smul.u32 3, %s24
        %p225 = scmp.lt.s32.totalorder %s223, 47
        %s226 = scalar_select %p225, %s223, 47
        %p227 = scmp.lt.s32.totalorder %s224, 2
        %s228 = scalar_select %p227, %s224, 2
        %s229 = smul.addr %s226, 3
        %s230 = sadd.s32 %s228, %s229
        %s231 = smul.addr %s230, 4
        %s232 = scalar_lea.vmem %s0, %s231
        %s233 = smul.u32 24, %s22
        %s234 = smul.u32 3, %s24
        %p235 = scmp.lt.s32.totalorder %s23, 0
        %s236 = scalar_select %p235, %s23, 0
        %s237 = smul.addr %s236, 4
        %s238 = scalar_lea.vmem %s1, %s237
        %p239 = scmp.lt.s32.totalorder %s23, 0
        %s240 = scalar_select %p239, %s23, 0
        %s241 = scalar_lea.vmem %s2, %s240
        %s242 = smul.u32 24, %s22
        %p244 = scmp.eq.s32.totalorder %s24, 0
        // Predicated region
        $region33: #{graph_sequential_forward.11} parent=31 // pred_check
          %p245 = pneg %p244
        $region34: #{graph_sequential_forward.11} parent=31 // pred_check_branch
          %247 = sbr.rel (%p245) target = $region36
        $region35: #{graph_sequential_forward.11} parent=31 // pred_region
          %248 = vst [vmem:[#allocation2] sm:$0xff] 0.0
          %249 = vst [vmem:[#allocation2 + $0x8] sm:$0xff] 0.0
          %250 = vst [vmem:[#allocation2 + $0x10] sm:$0xff] 0.0
          %251 = vst [vmem:[#allocation2 + $0x18] sm:$0xff] 0.0
          %252 = vst [vmem:[#allocation2 + $0x20] sm:$0xff] 0.0
          %253 = vst [vmem:[#allocation2 + $0x28] sm:$0xff] 0.0
          %254 = vst [vmem:[#allocation2 + $0x30] sm:$0xff] 0.0
          %255 = vst [vmem:[#allocation2 + $0x38] sm:$0xff] 0.0
          %256 = vst [vmem:[#allocation2 + $0x40] sm:$0xff] 0.0
          %257 = vst [vmem:[#allocation2 + $0x48] sm:$0xff] 0.0
          %258 = vst [vmem:[#allocation2 + $0x50] sm:$0xff] 0.0
          %259 = vst [vmem:[#allocation2 + $0x58] sm:$0xff] 0.0
          %260 = vst [vmem:[#allocation2 + $0x60] sm:$0xff] 0.0
          %261 = vst [vmem:[#allocation2 + $0x68] sm:$0xff] 0.0
          %262 = vst [vmem:[#allocation2 + $0x70] sm:$0xff] 0.0
          %263 = vst [vmem:[#allocation2 + $0x78] sm:$0xff] 0.0
          %264 = vst [vmem:[#allocation2 + $0x80] sm:$0xff] 0.0
          %265 = vst [vmem:[#allocation2 + $0x88] sm:$0xff] 0.0
          %266 = vst [vmem:[#allocation2 + $0x90] sm:$0xff] 0.0
          %267 = vst [vmem:[#allocation2 + $0x98] sm:$0xff] 0.0
          %268 = vst [vmem:[#allocation2 + $0xa0] sm:$0xff] 0.0
          %269 = vst [vmem:[#allocation2 + $0xa8] sm:$0xff] 0.0
          %270 = vst [vmem:[#allocation2 + $0xb0] sm:$0xff] 0.0
          %271 = vst [vmem:[#allocation2 + $0xb8] sm:$0xff] 0.0
        $region36: #{graph_sequential_forward.11} parent=31 // pred_fallthru
          _
        %s272 = smul.u32 %s24, 384
        %s273 = sshra.s32 %s272, 3
        %s274 = sand.u32 %s272, 7
        %s275 = smul.addr %s273, 4
        %s276 = scalar_lea.vmem %s238, %s275
        %v277 = vld [vmem:[%s276] sm:$0xf]
        %v278 = vld [vmem:[%s276 + $0x4] sm:$0xf]
        %v279 = vld [vmem:[%s276 + $0x8] sm:$0xf]
        %v280 = vld [vmem:[%s276 + $0xc] sm:$0xf]
        %v281 = vld [vmem:[%s276 + $0x10] sm:$0xf]
        %v282 = vld [vmem:[%s276 + $0x14] sm:$0xf]
        %v283 = vld [vmem:[%s276 + $0x18] sm:$0xf]
        %v284 = vld [vmem:[%s276 + $0x1c] sm:$0xf]
        %v285 = vld [vmem:[%s276 + $0x20] sm:$0xf]
        %v286 = vld [vmem:[%s276 + $0x24] sm:$0xf]
        %v287 = vld [vmem:[%s276 + $0x28] sm:$0xf]
        %v288 = vld [vmem:[%s276 + $0x2c] sm:$0xf]
        %v289 = vld [vmem:[%s276 + $0x30] sm:$0xf]
        %v290 = vld [vmem:[%s276 + $0x34] sm:$0xf]
        %v291 = vld [vmem:[%s276 + $0x38] sm:$0xf]
        %v292 = vld [vmem:[%s276 + $0x3c] sm:$0xf]
        %v293 = vld [vmem:[%s276 + $0x40] sm:$0xf]
        %v294 = vld [vmem:[%s276 + $0x44] sm:$0xf]
        %v295 = vld [vmem:[%s276 + $0x48] sm:$0xf]
        %v296 = vld [vmem:[%s276 + $0x4c] sm:$0xf]
        %v297 = vld [vmem:[%s276 + $0x50] sm:$0xf]
        %v298 = vld [vmem:[%s276 + $0x54] sm:$0xf]
        %v299 = vld [vmem:[%s276 + $0x58] sm:$0xf]
        %v300 = vld [vmem:[%s276 + $0x5c] sm:$0xf]
        %v301 = vld [vmem:[%s276 + $0x60] sm:$0xf]
        %v302 = vld [vmem:[%s276 + $0x64] sm:$0xf]
        %v303 = vld [vmem:[%s276 + $0x68] sm:$0xf]
        %v304 = vld [vmem:[%s276 + $0x6c] sm:$0xf]
        %v305 = vld [vmem:[%s276 + $0x70] sm:$0xf]
        %v306 = vld [vmem:[%s276 + $0x74] sm:$0xf]
        %v307 = vld [vmem:[%s276 + $0x78] sm:$0xf]
        %v308 = vld [vmem:[%s276 + $0x7c] sm:$0xf]
        %v309 = vld [vmem:[%s276 + $0x80] sm:$0xf]
        %v310 = vld [vmem:[%s276 + $0x84] sm:$0xf]
        %v311 = vld [vmem:[%s276 + $0x88] sm:$0xf]
        %v312 = vld [vmem:[%s276 + $0x8c] sm:$0xf]
        %v313 = vld [vmem:[%s276 + $0x90] sm:$0xf]
        %v314 = vld [vmem:[%s276 + $0x94] sm:$0xf]
        %v315 = vld [vmem:[%s276 + $0x98] sm:$0xf]
        %v316 = vld [vmem:[%s276 + $0x9c] sm:$0xf]
        %v317 = vld [vmem:[%s276 + $0xa0] sm:$0xf]
        %v318 = vld [vmem:[%s276 + $0xa4] sm:$0xf]
        %v319 = vld [vmem:[%s276 + $0xa8] sm:$0xf]
        %v320 = vld [vmem:[%s276 + $0xac] sm:$0xf]
        %v321 = vld [vmem:[%s276 + $0xb0] sm:$0xf]
        %v322 = vld [vmem:[%s276 + $0xb4] sm:$0xf]
        %v323 = vld [vmem:[%s276 + $0xb8] sm:$0xf]
        %v324 = vld [vmem:[%s276 + $0xbc] sm:$0xf]
        %v325 = vld [vmem:[#allocation2] sm:$0xff]
        %v326 = vld [vmem:[#allocation2 + $0x8] sm:$0xff]
        %v327 = vld [vmem:[#allocation2 + $0x10] sm:$0xff]
        %v328 = vld [vmem:[#allocation2 + $0x18] sm:$0xff]
        %v329 = vld [vmem:[#allocation2 + $0x20] sm:$0xff]
        %v330 = vld [vmem:[#allocation2 + $0x28] sm:$0xff]
        %v331 = vld [vmem:[#allocation2 + $0x30] sm:$0xff]
        %v332 = vld [vmem:[#allocation2 + $0x38] sm:$0xff]
        %v333 = vld [vmem:[#allocation2 + $0x40] sm:$0xff]
        %v334 = vld [vmem:[#allocation2 + $0x48] sm:$0xff]
        %v335 = vld [vmem:[#allocation2 + $0x50] sm:$0xff]
        %v336 = vld [vmem:[#allocation2 + $0x58] sm:$0xff]
        %v337 = vld [vmem:[#allocation2 + $0x60] sm:$0xff]
        %v338 = vld [vmem:[#allocation2 + $0x68] sm:$0xff]
        %v339 = vld [vmem:[#allocation2 + $0x70] sm:$0xff]
        %v340 = vld [vmem:[#allocation2 + $0x78] sm:$0xff]
        %v341 = vld [vmem:[#allocation2 + $0x80] sm:$0xff]
        %v342 = vld [vmem:[#allocation2 + $0x88] sm:$0xff]
        %v343 = vld [vmem:[#allocation2 + $0x90] sm:$0xff]
        %v344 = vld [vmem:[#allocation2 + $0x98] sm:$0xff]
        %v345 = vld [vmem:[#allocation2 + $0xa0] sm:$0xff]
        %v346 = vld [vmem:[#allocation2 + $0xa8] sm:$0xff]
        %v347 = vld [vmem:[#allocation2 + $0xb0] sm:$0xff]
        %v348 = vld [vmem:[#allocation2 + $0xb8] sm:$0xff]
        %v349 = vld [vmem:[%s232] sm:$0xff]
        %v350 = vld [vmem:[%s232 + $0x8] sm:$0xf]
        %v351 = vld [vmem:[%s232 + $0xc] sm:$0xff]
        %v352 = vld [vmem:[%s232 + $0x14] sm:$0xf]
        %v353 = vld [vmem:[%s232 + $0x18] sm:$0xff]
        %v354 = vld [vmem:[%s232 + $0x20] sm:$0xf]
        %v355 = vld [vmem:[%s232 + $0x24] sm:$0xff]
        %v356 = vld [vmem:[%s232 + $0x2c] sm:$0xf]
        %v357 = vld [vmem:[%s232 + $0x30] sm:$0xff]
        %v358 = vld [vmem:[%s232 + $0x38] sm:$0xf]
        %v359 = vld [vmem:[%s232 + $0x3c] sm:$0xff]
        %v360 = vld [vmem:[%s232 + $0x44] sm:$0xf]
        %v361 = vld [vmem:[%s232 + $0x48] sm:$0xff]
        %v362 = vld [vmem:[%s232 + $0x50] sm:$0xf]
        %v363 = vld [vmem:[%s232 + $0x54] sm:$0xff]
        %v364 = vld [vmem:[%s232 + $0x5c] sm:$0xf]
        %v365 = vld [vmem:[%s232 + $0x60] sm:$0xff]
        %v366 = vld [vmem:[%s232 + $0x68] sm:$0xf]
        %v367 = vld [vmem:[%s232 + $0x6c] sm:$0xff]
        %v368 = vld [vmem:[%s232 + $0x74] sm:$0xf]
        %v369 = vld [vmem:[%s232 + $0x78] sm:$0xff]
        %v370 = vld [vmem:[%s232 + $0x80] sm:$0xf]
        %v371 = vld [vmem:[%s232 + $0x84] sm:$0xff]
        %v372 = vld [vmem:[%s232 + $0x8c] sm:$0xf]
        %v373 = vld [vmem:[%s232 + $0x90] sm:$0xff]
        %v374 = vld [vmem:[%s232 + $0x98] sm:$0xf]
        %v375 = vld [vmem:[%s232 + $0x9c] sm:$0xff]
        %v376 = vld [vmem:[%s232 + $0xa4] sm:$0xf]
        %v377 = vld [vmem:[%s232 + $0xa8] sm:$0xff]
        %v378 = vld [vmem:[%s232 + $0xb0] sm:$0xf]
        %v379 = vld [vmem:[%s232 + $0xb4] sm:$0xff]
        %v380 = vld [vmem:[%s232 + $0xbc] sm:$0xf]
        %v381 = vld [vmem:[%s232 + $0xc0] sm:$0xff]
        %v382 = vld [vmem:[%s232 + $0xc8] sm:$0xf]
        %v383 = vld [vmem:[%s232 + $0xcc] sm:$0xff]
        %v384 = vld [vmem:[%s232 + $0xd4] sm:$0xf]
        %v385 = vld [vmem:[%s232 + $0xd8] sm:$0xff]
        %v386 = vld [vmem:[%s232 + $0xe0] sm:$0xf]
        %v387 = vld [vmem:[%s232 + $0xe4] sm:$0xff]
        %v388 = vld [vmem:[%s232 + $0xec] sm:$0xf]
        %v389 = vld [vmem:[%s232 + $0xf0] sm:$0xff]
        %v390 = vld [vmem:[%s232 + $0xf8] sm:$0xf]
        %v391 = vld [vmem:[%s232 + $0xfc] sm:$0xff]
        %v392 = vld [vmem:[%s232 + $0x104] sm:$0xf]
        %v393 = vld [vmem:[%s232 + $0x108] sm:$0xff]
        %v394 = vld [vmem:[%s232 + $0x110] sm:$0xf]
        %v395 = vld [vmem:[%s232 + $0x114] sm:$0xff]
        %v396 = vld [vmem:[%s232 + $0x11c] sm:$0xf]
        %v445 = vunpack.c.l.b16 %v349
        %v446 = vunpack.c.h.b16 %v349
        %v447 = vunpack.c.l.b16 %v350
        %v448 = vunpack.c.l.b16 %v351
        %v449 = vunpack.c.h.b16 %v351
        %v450 = vunpack.c.l.b16 %v352
        %v451 = vunpack.c.l.b16 %v353
        %v452 = vunpack.c.h.b16 %v353
        %v453 = vunpack.c.l.b16 %v354
        %v454 = vunpack.c.l.b16 %v355
        %v455 = vunpack.c.h.b16 %v355
        %v456 = vunpack.c.l.b16 %v356
        %v457 = vunpack.c.l.b16 %v357
        %v458 = vunpack.c.h.b16 %v357
        %v459 = vunpack.c.l.b16 %v358
        %v460 = vunpack.c.l.b16 %v359
        %v461 = vunpack.c.h.b16 %v359
        %v462 = vunpack.c.l.b16 %v360
        %v463 = vunpack.c.l.b16 %v361
        %v464 = vunpack.c.h.b16 %v361
        %v465 = vunpack.c.l.b16 %v362
        %v466 = vunpack.c.l.b16 %v363
        %v467 = vunpack.c.h.b16 %v363
        %v468 = vunpack.c.l.b16 %v364
        %v469 = vunpack.c.l.b16 %v365
        %v470 = vunpack.c.h.b16 %v365
        %v471 = vunpack.c.l.b16 %v366
        %v472 = vunpack.c.l.b16 %v367
        %v473 = vunpack.c.h.b16 %v367
        %v474 = vunpack.c.l.b16 %v368
        %v475 = vunpack.c.l.b16 %v369
        %v476 = vunpack.c.h.b16 %v369
        %v477 = vunpack.c.l.b16 %v370
        %v478 = vunpack.c.l.b16 %v371
        %v479 = vunpack.c.h.b16 %v371
        %v480 = vunpack.c.l.b16 %v372
        %v481 = vunpack.c.l.b16 %v373
        %v482 = vunpack.c.h.b16 %v373
        %v483 = vunpack.c.l.b16 %v374
        %v484 = vunpack.c.l.b16 %v375
        %v485 = vunpack.c.h.b16 %v375
        %v486 = vunpack.c.l.b16 %v376
        %v487 = vunpack.c.l.b16 %v377
        %v488 = vunpack.c.h.b16 %v377
        %v489 = vunpack.c.l.b16 %v378
        %v490 = vunpack.c.l.b16 %v379
        %v491 = vunpack.c.h.b16 %v379
        %v492 = vunpack.c.l.b16 %v380
        %v493 = vunpack.c.l.b16 %v381
        %v494 = vunpack.c.h.b16 %v381
        %v495 = vunpack.c.l.b16 %v382
        %v496 = vunpack.c.l.b16 %v383
        %v497 = vunpack.c.h.b16 %v383
        %v498 = vunpack.c.l.b16 %v384
        %v499 = vunpack.c.l.b16 %v385
        %v500 = vunpack.c.h.b16 %v385
        %v501 = vunpack.c.l.b16 %v386
        %v502 = vunpack.c.l.b16 %v387
        %v503 = vunpack.c.h.b16 %v387
        %v504 = vunpack.c.l.b16 %v388
        %v505 = vunpack.c.l.b16 %v389
        %v506 = vunpack.c.h.b16 %v389
        %v507 = vunpack.c.l.b16 %v390
        %v508 = vunpack.c.l.b16 %v391
        %v509 = vunpack.c.h.b16 %v391
        %v510 = vunpack.c.l.b16 %v392
        %v511 = vunpack.c.l.b16 %v393
        %v512 = vunpack.c.h.b16 %v393
        %v513 = vunpack.c.l.b16 %v394
        %v514 = vunpack.c.l.b16 %v395
        %v515 = vunpack.c.h.b16 %v395
        %v516 = vunpack.c.l.b16 %v396
        %v517 = vpack.c.b16 %v448, %v445
        %v518 = vpack.c.b16 %v449, %v446
        %v519 = vpack.c.b16 %v450, %v447
        %v520 = vpack.c.b16 %v454, %v451
        %v521 = vpack.c.b16 %v455, %v452
        %v522 = vpack.c.b16 %v456, %v453
        %v523 = vpack.c.b16 %v460, %v457
        %v524 = vpack.c.b16 %v461, %v458
        %v525 = vpack.c.b16 %v462, %v459
        %v526 = vpack.c.b16 %v466, %v463
        %v527 = vpack.c.b16 %v467, %v464
        %v528 = vpack.c.b16 %v468, %v465
        %v529 = vpack.c.b16 %v472, %v469
        %v530 = vpack.c.b16 %v473, %v470
        %v531 = vpack.c.b16 %v474, %v471
        %v532 = vpack.c.b16 %v478, %v475
        %v533 = vpack.c.b16 %v479, %v476
        %v534 = vpack.c.b16 %v480, %v477
        %v535 = vpack.c.b16 %v484, %v481
        %v536 = vpack.c.b16 %v485, %v482
        %v537 = vpack.c.b16 %v486, %v483
        %v538 = vpack.c.b16 %v490, %v487
        %v539 = vpack.c.b16 %v491, %v488
        %v540 = vpack.c.b16 %v492, %v489
        %v541 = vpack.c.b16 %v496, %v493
        %v542 = vpack.c.b16 %v497, %v494
        %v543 = vpack.c.b16 %v498, %v495
        %v544 = vpack.c.b16 %v502, %v499
        %v545 = vpack.c.b16 %v503, %v500
        %v546 = vpack.c.b16 %v504, %v501
        %v547 = vpack.c.b16 %v508, %v505
        %v548 = vpack.c.b16 %v509, %v506
        %v549 = vpack.c.b16 %v510, %v507
        %v550 = vpack.c.b16 %v514, %v511
        %v551 = vpack.c.b16 %v515, %v512
        %v552 = vpack.c.b16 %v516, %v513
        %v637 = vunpack.c.l.b16 %v277
        %v638 = vunpack.c.l.b16 %v278
        %v639 = vunpack.c.l.b16 %v279
        %v640 = vunpack.c.l.b16 %v280
        %v641 = vunpack.c.l.b16 %v281
        %v642 = vunpack.c.l.b16 %v282
        %v643 = vunpack.c.l.b16 %v283
        %v644 = vunpack.c.l.b16 %v284
        %v645 = vunpack.c.l.b16 %v285
        %v646 = vunpack.c.l.b16 %v286
        %v647 = vunpack.c.l.b16 %v287
        %v648 = vunpack.c.l.b16 %v288
        %v649 = vunpack.c.l.b16 %v289
        %v650 = vunpack.c.l.b16 %v290
        %v651 = vunpack.c.l.b16 %v291
        %v652 = vunpack.c.l.b16 %v292
        %v653 = vunpack.c.l.b16 %v293
        %v654 = vunpack.c.l.b16 %v294
        %v655 = vunpack.c.l.b16 %v295
        %v656 = vunpack.c.l.b16 %v296
        %v657 = vunpack.c.l.b16 %v297
        %v658 = vunpack.c.l.b16 %v298
        %v659 = vunpack.c.l.b16 %v299
        %v660 = vunpack.c.l.b16 %v300
        %v661 = vunpack.c.l.b16 %v301
        %v662 = vunpack.c.l.b16 %v302
        %v663 = vunpack.c.l.b16 %v303
        %v664 = vunpack.c.l.b16 %v304
        %v665 = vunpack.c.l.b16 %v305
        %v666 = vunpack.c.l.b16 %v306
        %v667 = vunpack.c.l.b16 %v307
        %v668 = vunpack.c.l.b16 %v308
        %v669 = vunpack.c.l.b16 %v309
        %v670 = vunpack.c.l.b16 %v310
        %v671 = vunpack.c.l.b16 %v311
        %v672 = vunpack.c.l.b16 %v312
        %v673 = vunpack.c.l.b16 %v313
        %v674 = vunpack.c.l.b16 %v314
        %v675 = vunpack.c.l.b16 %v315
        %v676 = vunpack.c.l.b16 %v316
        %v677 = vunpack.c.l.b16 %v317
        %v678 = vunpack.c.l.b16 %v318
        %v679 = vunpack.c.l.b16 %v319
        %v680 = vunpack.c.l.b16 %v320
        %v681 = vunpack.c.l.b16 %v321
        %v682 = vunpack.c.l.b16 %v322
        %v683 = vunpack.c.l.b16 %v323
        %v684 = vunpack.c.l.b16 %v324
        %v685 = vpack.c.b16 %v638, %v637
        %v686 = vpack.c.b16 %v640, %v639
        %v687 = vpack.c.b16 %v642, %v641
        %v688 = vpack.c.b16 %v644, %v643
        %v689 = vpack.c.b16 %v646, %v645
        %v690 = vpack.c.b16 %v648, %v647
        %v691 = vpack.c.b16 %v650, %v649
        %v692 = vpack.c.b16 %v652, %v651
        %v693 = vpack.c.b16 %v654, %v653
        %v694 = vpack.c.b16 %v656, %v655
        %v695 = vpack.c.b16 %v658, %v657
        %v696 = vpack.c.b16 %v660, %v659
        %v697 = vpack.c.b16 %v662, %v661
        %v698 = vpack.c.b16 %v664, %v663
        %v699 = vpack.c.b16 %v666, %v665
        %v700 = vpack.c.b16 %v668, %v667
        %v701 = vpack.c.b16 %v670, %v669
        %v702 = vpack.c.b16 %v672, %v671
        %v703 = vpack.c.b16 %v674, %v673
        %v704 = vpack.c.b16 %v676, %v675
        %v705 = vpack.c.b16 %v678, %v677
        %v706 = vpack.c.b16 %v680, %v679
        %v707 = vpack.c.b16 %v682, %v681
        %v708 = vpack.c.b16 %v684, %v683
        %733 = vmatprep.subr.bf16.mxu0 0
        %734 = vmatpush1.bf16.msra.mxu0 %v692
        %735 = vmatprep.subr.bf16.mxu0 0
        %736 = vmatpush1.bf16.msra.mxu0 %v691
        %737 = vmatprep.subr.bf16.mxu0 0
        %738 = vmatpush1.bf16.msra.mxu0 %v690
        %739 = vmatprep.subr.bf16.mxu0 0
        %740 = vmatpush1.bf16.msra.mxu0 %v689
        %741 = vmatprep.subr.bf16.mxu0 0
        %742 = vmatpush1.bf16.msra.mxu0 %v688
        %743 = vmatprep.subr.bf16.mxu0 0
        %744 = vmatpush1.bf16.msra.mxu0 %v687
        %745 = vmatprep.subr.bf16.mxu0 0
        %746 = vmatpush1.bf16.msra.mxu0 %v686
        %747 = vmatprep.subr.bf16.mxu0 0
        %748 = vmatpush1.bf16.msra.mxu0 %v685
        %749 = vmatprep.subr.bf16.mxu0 0
        %750 = vmatpush2.bf16.msra.mxu0 %v700
        %751 = vmatprep.subr.bf16.mxu0 0
        %752 = vmatpush2.bf16.msra.mxu0 %v699
        %753 = vmatprep.subr.bf16.mxu0 0
        %754 = vmatpush2.bf16.msra.mxu0 %v698
        %755 = vmatprep.subr.bf16.mxu0 0
        %756 = vmatpush2.bf16.msra.mxu0 %v697
        %757 = vmatprep.subr.bf16.mxu0 0
        %758 = vmatpush2.bf16.msra.mxu0 %v696
        %759 = vmatprep.subr.bf16.mxu0 0
        %760 = vmatpush2.bf16.msra.mxu0 %v695
        %761 = vmatprep.subr.bf16.mxu0 0
        %762 = vmatpush2.bf16.msra.mxu0 %v694
        %763 = vmatprep.subr.bf16.mxu0 0
        %764 = vmatpush2.bf16.msra.mxu0 %v693
        %765 = vmatprep.mubr.bf16.mxu0 %v518
        %766 = vmatmul.mubr.bf16.gmra.mxu0 %v517
        %v767 = vpop.f32.mrf.mxu0
        %v768 = vadd.f32 0.0, %v767
        %v769 = vpop.f32.mrf.mxu0
        %v770 = vpop.f32.mrf.mxu0
        %v771 = vadd.f32 0.0, %v770
        %v772 = vpop.f32.mrf.mxu0
        %773 = vmatprep.mubr.bf16.mxu0 %v521
        %774 = vmatmul.mubr.bf16.gmra.mxu0 %v520
        %v775 = vpop.f32.mrf.mxu0
        %v776 = vadd.f32 0.0, %v775
        %v777 = vpop.f32.mrf.mxu0
        %v778 = vpop.f32.mrf.mxu0
        %v779 = vadd.f32 0.0, %v778
        %v780 = vpop.f32.mrf.mxu0
        %781 = vmatprep.mubr.bf16.mxu0 %v524
        %782 = vmatmul.mubr.bf16.gmra.mxu0 %v523
        %v783 = vpop.f32.mrf.mxu0
        %v784 = vadd.f32 0.0, %v783
        %v785 = vpop.f32.mrf.mxu0
        %v786 = vpop.f32.mrf.mxu0
        %v787 = vadd.f32 0.0, %v786
        %v788 = vpop.f32.mrf.mxu0
        %789 = vmatprep.mubr.bf16.mxu0 %v527
        %790 = vmatmul.mubr.bf16.gmra.mxu0 %v526
        %v791 = vpop.f32.mrf.mxu0
        %v792 = vadd.f32 0.0, %v791
        %v793 = vpop.f32.mrf.mxu0
        %v794 = vpop.f32.mrf.mxu0
        %v795 = vadd.f32 0.0, %v794
        %v796 = vpop.f32.mrf.mxu0
        %797 = vmatprep.mubr.bf16.mxu0 %v530
        %798 = vmatmul.mubr.bf16.gmra.mxu0 %v529
        %v799 = vpop.f32.mrf.mxu0
        %v800 = vadd.f32 0.0, %v799
        %v801 = vpop.f32.mrf.mxu0
        %v802 = vpop.f32.mrf.mxu0
        %v803 = vadd.f32 0.0, %v802
        %v804 = vpop.f32.mrf.mxu0
        %805 = vmatprep.mubr.bf16.mxu0 %v533
        %806 = vmatmul.mubr.bf16.gmra.mxu0 %v532
        %v807 = vpop.f32.mrf.mxu0
        %v808 = vadd.f32 0.0, %v807
        %v809 = vpop.f32.mrf.mxu0
        %v810 = vpop.f32.mrf.mxu0
        %v811 = vadd.f32 0.0, %v810
        %v812 = vpop.f32.mrf.mxu0
        %813 = vmatprep.mubr.bf16.mxu0 %v536
        %814 = vmatmul.mubr.bf16.gmra.mxu0 %v535
        %v815 = vpop.f32.mrf.mxu0
        %v816 = vadd.f32 0.0, %v815
        %v817 = vpop.f32.mrf.mxu0
        %v818 = vpop.f32.mrf.mxu0
        %v819 = vadd.f32 0.0, %v818
        %v820 = vpop.f32.mrf.mxu0
        %821 = vmatprep.mubr.bf16.mxu0 %v539
        %822 = vmatmul.mubr.bf16.gmra.mxu0 %v538
        %v823 = vpop.f32.mrf.mxu0
        %v824 = vadd.f32 0.0, %v823
        %v825 = vpop.f32.mrf.mxu0
        %v826 = vpop.f32.mrf.mxu0
        %v827 = vadd.f32 0.0, %v826
        %v828 = vpop.f32.mrf.mxu0
        %829 = vmatprep.mubr.bf16.mxu0 %v542
        %830 = vmatmul.mubr.bf16.gmra.mxu0 %v541
        %v831 = vpop.f32.mrf.mxu0
        %v832 = vadd.f32 0.0, %v831
        %v833 = vpop.f32.mrf.mxu0
        %v834 = vpop.f32.mrf.mxu0
        %v835 = vadd.f32 0.0, %v834
        %v836 = vpop.f32.mrf.mxu0
        %837 = vmatprep.mubr.bf16.mxu0 %v545
        %838 = vmatmul.mubr.bf16.gmra.mxu0 %v544
        %v839 = vpop.f32.mrf.mxu0
        %v840 = vadd.f32 0.0, %v839
        %v841 = vpop.f32.mrf.mxu0
        %v842 = vpop.f32.mrf.mxu0
        %v843 = vadd.f32 0.0, %v842
        %v844 = vpop.f32.mrf.mxu0
        %845 = vmatprep.mubr.bf16.mxu0 %v548
        %846 = vmatmul.mubr.bf16.gmra.mxu0 %v547
        %v847 = vpop.f32.mrf.mxu0
        %v848 = vadd.f32 0.0, %v847
        %v849 = vpop.f32.mrf.mxu0
        %v850 = vpop.f32.mrf.mxu0
        %v851 = vadd.f32 0.0, %v850
        %v852 = vpop.f32.mrf.mxu0
        %853 = vmatprep.mubr.bf16.mxu0 %v551
        %854 = vmatmul.mubr.bf16.gmra.mxu0 %v550
        %v855 = vpop.f32.mrf.mxu0
        %v856 = vadd.f32 0.0, %v855
        %v857 = vpop.f32.mrf.mxu0
        %v858 = vpop.f32.mrf.mxu0
        %v859 = vadd.f32 0.0, %v858
        %v860 = vpop.f32.mrf.mxu0
        %861 = vdwg.mxu0
        %862 = vmatprep.subr.bf16.mxu0 0
        %863 = vmatpush1.bf16.msra.mxu0 %v708
        %864 = vmatprep.subr.bf16.mxu0 0
        %865 = vmatpush1.bf16.msra.mxu0 %v707
        %866 = vmatprep.subr.bf16.mxu0 0
        %867 = vmatpush1.bf16.msra.mxu0 %v706
        %868 = vmatprep.subr.bf16.mxu0 0
        %869 = vmatpush1.bf16.msra.mxu0 %v705
        %870 = vmatprep.subr.bf16.mxu0 0
        %871 = vmatpush1.bf16.msra.mxu0 %v704
        %872 = vmatprep.subr.bf16.mxu0 0
        %873 = vmatpush1.bf16.msra.mxu0 %v703
        %874 = vmatprep.subr.bf16.mxu0 0
        %875 = vmatpush1.bf16.msra.mxu0 %v702
        %876 = vmatprep.subr.bf16.mxu0 0
        %877 = vmatpush1.bf16.msra.mxu0 %v701
        %878 = vmatprep.subr.bf16.mxu0 0
        %879 = vmatpush2.bf16.msra.mxu0 0
        %880 = vmatprep.subr.bf16.mxu0 0
        %881 = vmatpush2.bf16.msra.mxu0 0
        %882 = vmatprep.subr.bf16.mxu0 0
        %883 = vmatpush2.bf16.msra.mxu0 0
        %884 = vmatprep.subr.bf16.mxu0 0
        %885 = vmatpush2.bf16.msra.mxu0 0
        %886 = vmatprep.subr.bf16.mxu0 0
        %887 = vmatpush2.bf16.msra.mxu0 0
        %888 = vmatprep.subr.bf16.mxu0 0
        %889 = vmatpush2.bf16.msra.mxu0 0
        %890 = vmatprep.subr.bf16.mxu0 0
        %891 = vmatpush2.bf16.msra.mxu0 0
        %892 = vmatprep.subr.bf16.mxu0 0
        %893 = vmatpush2.bf16.msra.mxu0 0
        %894 = vmatprep.mubr.bf16.mxu0 0
        %895 = vmatmul.mubr.bf16.gmra.mxu0 %v519
        %v896 = vpop.f32.mrf.mxu0
        %v897 = vadd.f32 %v768, %v896
        %v898 = vpop.f32.mrf.mxu0
        %v899 = vpop.f32.mrf.mxu0
        %v900 = vadd.f32 %v771, %v899
        %v901 = vpop.f32.mrf.mxu0
        %902 = vmatprep.mubr.bf16.mxu0 0
        %903 = vmatmul.mubr.bf16.gmra.mxu0 %v522
        %v904 = vpop.f32.mrf.mxu0
        %v905 = vadd.f32 %v776, %v904
        %v906 = vpop.f32.mrf.mxu0
        %v907 = vpop.f32.mrf.mxu0
        %v908 = vadd.f32 %v779, %v907
        %v909 = vpop.f32.mrf.mxu0
        %910 = vmatprep.mubr.bf16.mxu0 0
        %911 = vmatmul.mubr.bf16.gmra.mxu0 %v525
        %v912 = vpop.f32.mrf.mxu0
        %v913 = vadd.f32 %v784, %v912
        %v914 = vpop.f32.mrf.mxu0
        %v915 = vpop.f32.mrf.mxu0
        %v916 = vadd.f32 %v787, %v915
        %v917 = vpop.f32.mrf.mxu0
        %918 = vmatprep.mubr.bf16.mxu0 0
        %919 = vmatmul.mubr.bf16.gmra.mxu0 %v528
        %v920 = vpop.f32.mrf.mxu0
        %v921 = vadd.f32 %v792, %v920
        %v922 = vpop.f32.mrf.mxu0
        %v923 = vpop.f32.mrf.mxu0
        %v924 = vadd.f32 %v795, %v923
        %v925 = vpop.f32.mrf.mxu0
        %926 = vmatprep.mubr.bf16.mxu0 0
        %927 = vmatmul.mubr.bf16.gmra.mxu0 %v531
        %v928 = vpop.f32.mrf.mxu0
        %v929 = vadd.f32 %v800, %v928
        %v930 = vpop.f32.mrf.mxu0
        %v931 = vpop.f32.mrf.mxu0
        %v932 = vadd.f32 %v803, %v931
        %v933 = vpop.f32.mrf.mxu0
        %934 = vmatprep.mubr.bf16.mxu0 0
        %935 = vmatmul.mubr.bf16.gmra.mxu0 %v534
        %v936 = vpop.f32.mrf.mxu0
        %v937 = vadd.f32 %v808, %v936
        %v938 = vpop.f32.mrf.mxu0
        %v939 = vpop.f32.mrf.mxu0
        %v940 = vadd.f32 %v811, %v939
        %v941 = vpop.f32.mrf.mxu0
        %942 = vmatprep.mubr.bf16.mxu0 0
        %943 = vmatmul.mubr.bf16.gmra.mxu0 %v537
        %v944 = vpop.f32.mrf.mxu0
        %v945 = vadd.f32 %v816, %v944
        %v946 = vpop.f32.mrf.mxu0
        %v947 = vpop.f32.mrf.mxu0
        %v948 = vadd.f32 %v819, %v947
        %v949 = vpop.f32.mrf.mxu0
        %950 = vmatprep.mubr.bf16.mxu0 0
        %951 = vmatmul.mubr.bf16.gmra.mxu0 %v540
        %v952 = vpop.f32.mrf.mxu0
        %v953 = vadd.f32 %v824, %v952
        %v954 = vpop.f32.mrf.mxu0
        %v955 = vpop.f32.mrf.mxu0
        %v956 = vadd.f32 %v827, %v955
        %v957 = vpop.f32.mrf.mxu0
        %958 = vmatprep.mubr.bf16.mxu0 0
        %959 = vmatmul.mubr.bf16.gmra.mxu0 %v543
        %v960 = vpop.f32.mrf.mxu0
        %v961 = vadd.f32 %v832, %v960
        %v962 = vpop.f32.mrf.mxu0
        %v963 = vpop.f32.mrf.mxu0
        %v964 = vadd.f32 %v835, %v963
        %v965 = vpop.f32.mrf.mxu0
        %966 = vmatprep.mubr.bf16.mxu0 0
        %967 = vmatmul.mubr.bf16.gmra.mxu0 %v546
        %v968 = vpop.f32.mrf.mxu0
        %v969 = vadd.f32 %v840, %v968
        %v970 = vpop.f32.mrf.mxu0
        %v971 = vpop.f32.mrf.mxu0
        %v972 = vadd.f32 %v843, %v971
        %v973 = vpop.f32.mrf.mxu0
        %974 = vmatprep.mubr.bf16.mxu0 0
        %975 = vmatmul.mubr.bf16.gmra.mxu0 %v549
        %v976 = vpop.f32.mrf.mxu0
        %v977 = vadd.f32 %v848, %v976
        %v978 = vpop.f32.mrf.mxu0
        %v979 = vpop.f32.mrf.mxu0
        %v980 = vadd.f32 %v851, %v979
        %v981 = vpop.f32.mrf.mxu0
        %982 = vmatprep.mubr.bf16.mxu0 0
        %983 = vmatmul.mubr.bf16.gmra.mxu0 %v552
        %v984 = vpop.f32.mrf.mxu0
        %v985 = vadd.f32 %v856, %v984
        %v986 = vpop.f32.mrf.mxu0
        %v987 = vpop.f32.mrf.mxu0
        %v988 = vadd.f32 %v859, %v987
        %v989 = vpop.f32.mrf.mxu0
        %990 = vdwg.mxu0
        %v991 = vadd.f32 %v325, %v897
        %v992 = vadd.f32 %v326, %v900
        %v993 = vadd.f32 %v327, %v905
        %v994 = vadd.f32 %v328, %v908
        %v995 = vadd.f32 %v329, %v913
        %v996 = vadd.f32 %v330, %v916
        %v997 = vadd.f32 %v331, %v921
        %v998 = vadd.f32 %v332, %v924
        %v999 = vadd.f32 %v333, %v929
        %v1000 = vadd.f32 %v334, %v932
        %v1001 = vadd.f32 %v335, %v937
        %v1002 = vadd.f32 %v336, %v940
        %v1003 = vadd.f32 %v337, %v945
        %v1004 = vadd.f32 %v338, %v948
        %v1005 = vadd.f32 %v339, %v953
        %v1006 = vadd.f32 %v340, %v956
        %v1007 = vadd.f32 %v341, %v961
        %v1008 = vadd.f32 %v342, %v964
        %v1009 = vadd.f32 %v343, %v969
        %v1010 = vadd.f32 %v344, %v972
        %v1011 = vadd.f32 %v345, %v977
        %v1012 = vadd.f32 %v346, %v980
        %v1013 = vadd.f32 %v347, %v985
        %v1014 = vadd.f32 %v348, %v988
        %1015 = vst [vmem:[#allocation2] sm:$0xff] %v991
        %1016 = vst [vmem:[#allocation2 + $0x8] sm:$0xff] %v992
        %1017 = vst [vmem:[#allocation2 + $0x10] sm:$0xff] %v993
        %1018 = vst [vmem:[#allocation2 + $0x18] sm:$0xff] %v994
        %1019 = vst [vmem:[#allocation2 + $0x20] sm:$0xff] %v995
        %1020 = vst [vmem:[#allocation2 + $0x28] sm:$0xff] %v996
        %1021 = vst [vmem:[#allocation2 + $0x30] sm:$0xff] %v997
        %1022 = vst [vmem:[#allocation2 + $0x38] sm:$0xff] %v998
        %1023 = vst [vmem:[#allocation2 + $0x40] sm:$0xff] %v999
        %1024 = vst [vmem:[#allocation2 + $0x48] sm:$0xff] %v1000
        %1025 = vst [vmem:[#allocation2 + $0x50] sm:$0xff] %v1001
        %1026 = vst [vmem:[#allocation2 + $0x58] sm:$0xff] %v1002
        %1027 = vst [vmem:[#allocation2 + $0x60] sm:$0xff] %v1003
        %1028 = vst [vmem:[#allocation2 + $0x68] sm:$0xff] %v1004
        %1029 = vst [vmem:[#allocation2 + $0x70] sm:$0xff] %v1005
        %1030 = vst [vmem:[#allocation2 + $0x78] sm:$0xff] %v1006
        %1031 = vst [vmem:[#allocation2 + $0x80] sm:$0xff] %v1007
        %1032 = vst [vmem:[#allocation2 + $0x88] sm:$0xff] %v1008
        %1033 = vst [vmem:[#allocation2 + $0x90] sm:$0xff] %v1009
        %1034 = vst [vmem:[#allocation2 + $0x98] sm:$0xff] %v1010
        %1035 = vst [vmem:[#allocation2 + $0xa0] sm:$0xff] %v1011
        %1036 = vst [vmem:[#allocation2 + $0xa8] sm:$0xff] %v1012
        %1037 = vst [vmem:[#allocation2 + $0xb0] sm:$0xff] %v1013
        %1038 = vst [vmem:[#allocation2 + $0xb8] sm:$0xff] %v1014
        // Predicated region
        $region37: #{graph_sequential_forward.11} parent=31 // pred_check
          %p1039 = pneg %p244
        $region38: #{graph_sequential_forward.11} parent=31 // pred_check_branch
          %1041 = sbr.rel (%p1039) target = $region40
        $region39: #{graph_sequential_forward.11} parent=31 // pred_region
          %v1042 = vld [vmem:[#allocation2] sm:$0xff]
          %v1043 = vld [vmem:[#allocation2 + $0x8] sm:$0xff]
          %v1044 = vld [vmem:[#allocation2 + $0x10] sm:$0xff]
          %v1045 = vld [vmem:[#allocation2 + $0x18] sm:$0xff]
          %v1046 = vld [vmem:[#allocation2 + $0x20] sm:$0xff]
          %v1047 = vld [vmem:[#allocation2 + $0x28] sm:$0xff]
          %v1048 = vld [vmem:[#allocation2 + $0x30] sm:$0xff]
          %v1049 = vld [vmem:[#allocation2 + $0x38] sm:$0xff]
          %v1050 = vld [vmem:[#allocation2 + $0x40] sm:$0xff]
          %v1051 = vld [vmem:[#allocation2 + $0x48] sm:$0xff]
          %v1052 = vld [vmem:[#allocation2 + $0x50] sm:$0xff]
          %v1053 = vld [vmem:[#allocation2 + $0x58] sm:$0xff]
          %v1054 = vld [vmem:[#allocation2 + $0x60] sm:$0xff]
          %v1055 = vld [vmem:[#allocation2 + $0x68] sm:$0xff]
          %v1056 = vld [vmem:[#allocation2 + $0x70] sm:$0xff]
          %v1057 = vld [vmem:[#allocation2 + $0x78] sm:$0xff]
          %v1058 = vld [vmem:[#allocation2 + $0x80] sm:$0xff]
          %v1059 = vld [vmem:[#allocation2 + $0x88] sm:$0xff]
          %v1060 = vld [vmem:[#allocation2 + $0x90] sm:$0xff]
          %v1061 = vld [vmem:[#allocation2 + $0x98] sm:$0xff]
          %v1062 = vld [vmem:[#allocation2 + $0xa0] sm:$0xff]
          %v1063 = vld [vmem:[#allocation2 + $0xa8] sm:$0xff]
          %v1064 = vld [vmem:[#allocation2 + $0xb0] sm:$0xff]
          %v1065 = vld [vmem:[#allocation2 + $0xb8] sm:$0xff]
          %v1066 = vld [vmem:[%s241] sm:$0x1]
          %v1068 = vlaneseq
          %v1069 = vshrl.u32 %v1068, 7
          %v1070 = vsub.s32 0, %v1069
          %v1071 = vrot.slane %v1066, %v1070
          %v1073 = vadd.f32 %v1042, %v1071
          %v1074 = vadd.f32 %v1043, %v1071
          %v1075 = vadd.f32 %v1044, %v1071
          %v1076 = vadd.f32 %v1045, %v1071
          %v1077 = vadd.f32 %v1046, %v1071
          %v1078 = vadd.f32 %v1047, %v1071
          %v1079 = vadd.f32 %v1048, %v1071
          %v1080 = vadd.f32 %v1049, %v1071
          %v1081 = vadd.f32 %v1050, %v1071
          %v1082 = vadd.f32 %v1051, %v1071
          %v1083 = vadd.f32 %v1052, %v1071
          %v1084 = vadd.f32 %v1053, %v1071
          %v1085 = vadd.f32 %v1054, %v1071
          %v1086 = vadd.f32 %v1055, %v1071
          %v1087 = vadd.f32 %v1056, %v1071
          %v1088 = vadd.f32 %v1057, %v1071
          %v1089 = vadd.f32 %v1058, %v1071
          %v1090 = vadd.f32 %v1059, %v1071
          %v1091 = vadd.f32 %v1060, %v1071
          %v1092 = vadd.f32 %v1061, %v1071
          %v1093 = vadd.f32 %v1062, %v1071
          %v1094 = vadd.f32 %v1063, %v1071
          %v1095 = vadd.f32 %v1064, %v1071
          %v1096 = vadd.f32 %v1065, %v1071
          %v1097 = vpack.c.bf16 %v1074, %v1073
          %v1098 = vpack.c.bf16 %v1076, %v1075
          %v1099 = vpack.c.bf16 %v1078, %v1077
          %v1100 = vpack.c.bf16 %v1080, %v1079
          %v1101 = vpack.c.bf16 %v1082, %v1081
          %v1102 = vpack.c.bf16 %v1084, %v1083
          %v1103 = vpack.c.bf16 %v1086, %v1085
          %v1104 = vpack.c.bf16 %v1088, %v1087
          %v1105 = vpack.c.bf16 %v1090, %v1089
          %v1106 = vpack.c.bf16 %v1092, %v1091
          %v1107 = vpack.c.bf16 %v1094, %v1093
          %v1108 = vpack.c.bf16 %v1096, %v1095
          %v1121 = vunpack.c.l.b16 %v1097
          %v1122 = vunpack.c.h.b16 %v1097
          %v1123 = vunpack.c.l.b16 %v1098
          %v1124 = vunpack.c.h.b16 %v1098
          %v1125 = vunpack.c.l.b16 %v1099
          %v1126 = vunpack.c.h.b16 %v1099
          %v1127 = vunpack.c.l.b16 %v1100
          %v1128 = vunpack.c.h.b16 %v1100
          %v1129 = vunpack.c.l.b16 %v1101
          %v1130 = vunpack.c.h.b16 %v1101
          %v1131 = vunpack.c.l.b16 %v1102
          %v1132 = vunpack.c.h.b16 %v1102
          %v1133 = vunpack.c.l.b16 %v1103
          %v1134 = vunpack.c.h.b16 %v1103
          %v1135 = vunpack.c.l.b16 %v1104
          %v1136 = vunpack.c.h.b16 %v1104
          %v1137 = vunpack.c.l.b16 %v1105
          %v1138 = vunpack.c.h.b16 %v1105
          %v1139 = vunpack.c.l.b16 %v1106
          %v1140 = vunpack.c.h.b16 %v1106
          %v1141 = vunpack.c.l.b16 %v1107
          %v1142 = vunpack.c.h.b16 %v1107
          %v1143 = vunpack.c.l.b16 %v1108
          %v1144 = vunpack.c.h.b16 %v1108
          %v1145 = vpack.c.b16 %v1121, %v1121
          %v1146 = vpack.c.b16 %v1122, %v1122
          %v1147 = vpack.c.b16 %v1123, %v1123
          %v1148 = vpack.c.b16 %v1124, %v1124
          %v1149 = vpack.c.b16 %v1125, %v1125
          %v1150 = vpack.c.b16 %v1126, %v1126
          %v1151 = vpack.c.b16 %v1127, %v1127
          %v1152 = vpack.c.b16 %v1128, %v1128
          %v1153 = vpack.c.b16 %v1129, %v1129
          %v1154 = vpack.c.b16 %v1130, %v1130
          %v1155 = vpack.c.b16 %v1131, %v1131
          %v1156 = vpack.c.b16 %v1132, %v1132
          %v1157 = vpack.c.b16 %v1133, %v1133
          %v1158 = vpack.c.b16 %v1134, %v1134
          %v1159 = vpack.c.b16 %v1135, %v1135
          %v1160 = vpack.c.b16 %v1136, %v1136
          %v1161 = vpack.c.b16 %v1137, %v1137
          %v1162 = vpack.c.b16 %v1138, %v1138
          %v1163 = vpack.c.b16 %v1139, %v1139
          %v1164 = vpack.c.b16 %v1140, %v1140
          %v1165 = vpack.c.b16 %v1141, %v1141
          %v1166 = vpack.c.b16 %v1142, %v1142
          %v1167 = vpack.c.b16 %v1143, %v1143
          %v1168 = vpack.c.b16 %v1144, %v1144
          %1193 = vst [vmem:[%s222] sm:$0xf] %v1145
          %1194 = vst [vmem:[%s222 + $0x4] sm:$0xf] %v1146
          %1195 = vst [vmem:[%s222 + $0x8] sm:$0xf] %v1147
          %1196 = vst [vmem:[%s222 + $0xc] sm:$0xf] %v1148
          %1197 = vst [vmem:[%s222 + $0x10] sm:$0xf] %v1149
          %1198 = vst [vmem:[%s222 + $0x14] sm:$0xf] %v1150
          %1199 = vst [vmem:[%s222 + $0x18] sm:$0xf] %v1151
          %1200 = vst [vmem:[%s222 + $0x1c] sm:$0xf] %v1152
          %1201 = vst [vmem:[%s222 + $0x20] sm:$0xf] %v1153
          %1202 = vst [vmem:[%s222 + $0x24] sm:$0xf] %v1154
          %1203 = vst [vmem:[%s222 + $0x28] sm:$0xf] %v1155
          %1204 = vst [vmem:[%s222 + $0x2c] sm:$0xf] %v1156
          %1205 = vst [vmem:[%s222 + $0x30] sm:$0xf] %v1157
          %1206 = vst [vmem:[%s222 + $0x34] sm:$0xf] %v1158
          %1207 = vst [vmem:[%s222 + $0x38] sm:$0xf] %v1159
          %1208 = vst [vmem:[%s222 + $0x3c] sm:$0xf] %v1160
          %1209 = vst [vmem:[%s222 + $0x40] sm:$0xf] %v1161
          %1210 = vst [vmem:[%s222 + $0x44] sm:$0xf] %v1162
          %1211 = vst [vmem:[%s222 + $0x48] sm:$0xf] %v1163
          %1212 = vst [vmem:[%s222 + $0x4c] sm:$0xf] %v1164
          %1213 = vst [vmem:[%s222 + $0x50] sm:$0xf] %v1165
          %1214 = vst [vmem:[%s222 + $0x54] sm:$0xf] %v1166
          %1215 = vst [vmem:[%s222 + $0x58] sm:$0xf] %v1167
          %1216 = vst [vmem:[%s222 + $0x5c] sm:$0xf] %v1168
        $region40: #{graph_sequential_forward.11} parent=31 // pred_fallthru
          _
        %s1217 = sand.u32 %s126, 1
        %s1218 = scalar_lea.sflag [#allocation4], %s1217
        %s1219 = sand.u32 %s126, 1
        %s1220 = smul.addr %s1219, 96
        %s1221 = scalar_lea.vmem [#allocation3], %s1220
        // Predicated region
        $region41: #{graph_sequential_forward.11} parent=31 // pred_check
          %p1222 = pneg %p136
        $region42: #{graph_sequential_forward.11} parent=31 // pred_check_branch
          %1224 = sbr.rel (%p1222) target = $region44
        $region43: #{graph_sequential_forward.11} parent=31 // pred_region
          %s1225 = smul.u32 24, %s22
          %s1227 = ssub.s32 1536, 1536
          %1228 = vsyncadd %s1218, %s1227
          %s1229 = sadd.s32 %s23, %s1225
          %s1230 = smul.addr %s1229, 64
          %s1231 = scalar_lea.hbm %s3, %s1230
          %s1232 = sshll.u32 %s1221, 4
          %s1233 = int_to_ptr.vmem [resolvable:$true] %s1232
          %1238 = dma.vmem_to_hbm [thread:$0]  %s1233, 1536, %s1231, %s1218, 64, 64, 4
        $region44: #{graph_sequential_forward.11} parent=31 // pred_fallthru
          _
      $region32: #{graph_sequential_forward.11} parent=5 // pred_fallthru
        _
      %p1239 = scmp.le.s32.totalorder 2, %s12
      // Predicated region
      $region45: #{graph_sequential_forward.11} parent=5 // pred_check
        %p1240 = pneg %p1239
      $region46: #{graph_sequential_forward.11} parent=5 // pred_check_branch
        %1242 = sbr.rel (%p1240) target = $region48
      $region47: #{graph_sequential_forward.11} parent=5 // pred_region
        %s1243 = ssub.s32 %s12, 2
        // Predicated region
        $region49: #{graph_sequential_forward.11} parent=47 // pred_check
          %p1244 = pneg %p142
        $region50: #{graph_sequential_forward.11} parent=47 // pred_check_branch
          %1246 = sbr.rel (%p1244) target = $region52
        $region51: #{graph_sequential_forward.11} parent=47 // pred_region
          %s1247 = sand.u32 %s127, 1
          %s1248 = scalar_lea.sflag [#allocation4], %s1247
          %s1249 = sand.u32 %s127, 1
          %s1250 = smul.addr %s1249, 96
          %s1251 = scalar_lea.vmem [#allocation3], %s1250
          %1252 = dma.done %s1248, 1536
        $region52: #{graph_sequential_forward.11} parent=47 // pred_fallthru
          _
      $region48: #{graph_sequential_forward.11} parent=5 // pred_fallthru
        _
    $region6: #{graph_sequential_forward.11} parent=1 // loop_footer
      %s16 = sadd.s32 1, %s12
    $region7: #{graph_sequential_forward.11} parent=1 // loop_footer_branch
      %11 = sbr.rel target = $region3
    $region8: #{graph_sequential_forward.11} parent=1 // loop_exit
      _
    %1253 = vsyncpa [#allocation4], 1
    %s1254 = scalar_lea.sflag [#allocation4], 1
    %1255 = vsyncpa %s1254, 1

</llo_original>
